<compile_context>
chip_gen: v6e
topology: v6e:2x2x1
jax: 0.10.0
libtpu: 0.0.40
codegen_flags: <defaults>
</compile_context>

<pallas_src>
import jax
import jax.numpy as jnp
from jax.experimental import pallas as pl
from jax.experimental.pallas import tpu as pltpu


def _round_up(n, m):
    return ((n + m - 1) // m) * m


def cvae_kernel(
    x_ref, c_ref, eps_ref,
    w1x_ref, w1c_ref, b1_ref,
    w2_ref, b2_ref,
    w3_ref, b3_ref,
    w4z_ref, w4c_ref, b4_ref,
    w5_ref, b5_ref,
    w6_ref, b6_ref,
    recon_ref, mlv_ref,
):
    f32 = jnp.float32
    bf16 = jnp.bfloat16
    z_dim = eps_ref.shape[-1]

    x = x_ref[...]           # bf16 [TILE_B, x_dim]
    c = c_ref[...]           # bf16 [TILE_B, class_size] (one-hot)

    # ----- encoder -----
    # fc1 on cat([x, c]) == x @ W1x + c @ W1c + b1 (both matmuls on the MXU)
    h1 = jnp.dot(x, w1x_ref[...], preferred_element_type=f32)
    h1 = h1 + jnp.dot(c, w1c_ref[...], preferred_element_type=f32)
    h1 = jnp.maximum(h1 + b1_ref[...], 0.0)
    # fc2 -> relu
    h2 = jnp.dot(h1.astype(bf16), w2_ref[...], preferred_element_type=f32)
    h2 = jnp.maximum(h2 + b2_ref[...], 0.0)
    # fused fc31|fc32 (lane-padded to 128): one matmul, one lane-dense output
    mlv = jnp.dot(h2.astype(bf16), w3_ref[...], preferred_element_type=f32)
    mlv = mlv + b3_ref[...]
    mlv_ref[...] = mlv.astype(mlv_ref.dtype)

    # ----- sampling (reparameterization), f32 elementwise -----
    mu = mlv[:, :z_dim]
    log_var = mlv[:, z_dim:2 * z_dim]
    std = jnp.exp(0.5 * log_var)
    z = eps_ref[...].astype(f32) * std + mu

    # ----- decoder -----
    # fc4 on cat([z, c]) == z @ W4z + c @ W4c + b4
    h4 = jnp.dot(z.astype(bf16), w4z_ref[...], preferred_element_type=f32)
    h4 = h4 + jnp.dot(c, w4c_ref[...], preferred_element_type=f32)
    h4 = jnp.maximum(h4 + b4_ref[...], 0.0)
    # fc5 -> relu
    h5 = jnp.dot(h4.astype(bf16), w5_ref[...], preferred_element_type=f32)
    h5 = jnp.maximum(h5 + b5_ref[...], 0.0)
    # fc6 -> sigmoid (recon emitted in bf16: halves the largest HBM stream)
    logits = jnp.dot(h5.astype(bf16), w6_ref[...], preferred_element_type=f32)
    logits = logits + b6_ref[...]
    recon_ref[...] = jax.nn.sigmoid(logits).astype(recon_ref.dtype)


def init_params(key, x_dim, h1, h2, z_dim, class_size):
    """Deterministic synthetic parameters (stored [in, out]; fc1/fc4 split
    into their x/z part and one-hot-c part)."""
    ks = jax.random.split(key, 16)
    s = 0.05

    def w(k, shape):
        return (s * jax.random.normal(k, shape)).astype(jnp.float32)

    return {
        "w1x": w(ks[0], (x_dim, h1)),
        "w1c": w(ks[1], (class_size, h1)),
        "b1": w(ks[2], (1, h1)),
        "w2": w(ks[3], (h1, h2)),
        "b2": w(ks[4], (1, h2)),
        "w31": w(ks[5], (h2, z_dim)),
        "b31": w(ks[6], (1, z_dim)),
        "w32": w(ks[7], (h2, z_dim)),
        "b32": w(ks[8], (1, z_dim)),
        "w4z": w(ks[9], (z_dim, h2)),
        "w4c": w(ks[10], (class_size, h2)),
        "b4": w(ks[11], (1, h2)),
        "w5": w(ks[12], (h2, h1)),
        "b5": w(ks[13], (1, h1)),
        "w6": w(ks[14], (h1, x_dim)),
        "b6": w(ks[15], (1, x_dim)),
    }


def prepare_params(p):
    """One-time weight prep hoisted out of the forward path: bf16 casts of all
    MXU operands and fusion of fc31/fc32 into a single lane-dense 128-wide
    weight (mu in lanes [0:z], log_var in lanes [z:2z], rest zero)."""
    bf16 = jnp.bfloat16
    h2d = p["w2"].shape[1]
    z_dim = p["w31"].shape[1]
    mlv_width = max(128, _round_up(2 * z_dim, 128))

    w3 = jnp.zeros((h2d, mlv_width), jnp.float32)
    w3 = w3.at[:, :z_dim].set(p["w31"]).at[:, z_dim:2 * z_dim].set(p["w32"])
    b3 = jnp.zeros((1, mlv_width), jnp.float32)
    b3 = b3.at[:, :z_dim].set(p["b31"]).at[:, z_dim:2 * z_dim].set(p["b32"])

    prep = {
        "w1x": p["w1x"].astype(bf16),
        "w1c": p["w1c"].astype(bf16),
        "b1": p["b1"],
        "w2": p["w2"].astype(bf16),
        "b2": p["b2"],
        "w3": w3.astype(bf16),
        "b3": b3,
        "w4z": p["w4z"].astype(bf16),
        "w4c": p["w4c"].astype(bf16),
        "b4": p["b4"],
        "w5": p["w5"].astype(bf16),
        "b5": p["b5"],
        "w6": p["w6"].astype(bf16),
        "b6": p["b6"],
        "z_dim": z_dim,
        "mlv_width": mlv_width,
    }
    return prep


def _tile_and_vmem_defaults():
    # Safe everywhere (v7x has only 64 MiB VMEM per TensorCore).
    tile_b, vmem = 1024, 48 << 20
    try:
        if pltpu.get_tpu_info().vmem_capacity_bytes >= (96 << 20):
            tile_b, vmem = 2048, 96 << 20   # v5e / v6e class: 128 MiB VMEM
    except Exception:
        pass
    return tile_b, vmem


def onehot_cvae_forward(x, c, eps, prep, tile_b=None, vmem_limit_bytes=None):
    """x: [B, x_dim] f32, c: [B, class_size] one-hot f32, eps: [B, z_dim] f32.

    Returns (recon bf16 [B, x_dim], mu f32 [B, z_dim], log_var f32 [B, z_dim]).
    """
    bf16 = jnp.bfloat16
    B, x_dim = x.shape
    class_size = c.shape[1]
    z_dim = prep["z_dim"]
    mlv_width = prep["mlv_width"]
    h1d = prep["w1x"].shape[1]
    h2d = prep["w2"].shape[1]

    d_tile, d_vmem = _tile_and_vmem_defaults()
    tile_b = d_tile if tile_b is None else tile_b
    vmem_limit_bytes = d_vmem if vmem_limit_bytes is None else vmem_limit_bytes

    # ---- batch tiling / padding (padded rows are discarded afterwards) ----
    b_pad = _round_up(B, 8)
    tile_b = _round_up(min(tile_b, b_pad), 8)
    # Give the "parallel" batch axis >= 2 grid steps when the batch is large
    # enough to split: v7x shards them across its 2 TensorCores (harmless on
    # single-core chips).
    if tile_b >= b_pad and b_pad >= 256:
        tile_b = _round_up(b_pad // 2, 8)
    b_pad = _round_up(B, tile_b)
    num_tiles = b_pad // tile_b
    pad = b_pad - B

    x = x.astype(bf16)
    c = c.astype(bf16)
    eps = eps.astype(bf16)
    if pad:
        x = jnp.pad(x, ((0, pad), (0, 0)))
        c = jnp.pad(c, ((0, pad), (0, 0)))
        eps = jnp.pad(eps, ((0, pad), (0, 0)))

    weights = (
        prep["w1x"], prep["w1c"], prep["b1"],
        prep["w2"], prep["b2"],
        prep["w3"], prep["b3"],
        prep["w4z"], prep["w4c"], prep["b4"],
        prep["w5"], prep["b5"],
        prep["w6"], prep["b6"],
    )

    def row_spec(d):
        return pl.BlockSpec((tile_b, d), lambda i: (i, 0))

    out_specs = (row_spec(x_dim), row_spec(mlv_width))
    out_shape = (
        jax.ShapeDtypeStruct((b_pad, x_dim), bf16),
        jax.ShapeDtypeStruct((b_pad, mlv_width), jnp.float32),
    )

    # Advisory cost estimate for XLA scheduling around the custom call.
    mm_flops = (x_dim * h1d + class_size * h1d + h1d * h2d + h2d * mlv_width
                + z_dim * h2d + class_size * h2d + h2d * h1d + h1d * x_dim)
    row_bytes = 2 * (x_dim + class_size + z_dim) + 2 * x_dim + 4 * mlv_width
    weight_bytes = int(sum(a.size * a.dtype.itemsize for a in weights))
    cost = pl.CostEstimate(
        flops=2 * b_pad * mm_flops,
        transcendentals=b_pad * (z_dim + x_dim),
        bytes_accessed=b_pad * row_bytes + weight_bytes,
    )

    def build(weight_pipeline_mode):
        if weight_pipeline_mode is None:
            def resident_spec(a):
                return pl.BlockSpec(a.shape, lambda i: (0, 0))
        else:
            def resident_spec(a):
                return pl.BlockSpec(a.shape, lambda i: (0, 0),
                                    pipeline_mode=weight_pipeline_mode)
        in_specs = ([row_spec(x_dim), row_spec(class_size), row_spec(z_dim)]
                    + [resident_spec(a) for a in weights])
        return pl.pallas_call(
            cvae_kernel,
            grid=(num_tiles,),
            in_specs=in_specs,
            out_specs=out_specs,
            out_shape=out_shape,
            compiler_params=pltpu.CompilerParams(
                dimension_semantics=("parallel",),
                vmem_limit_bytes=vmem_limit_bytes,
            ),
            cost_estimate=cost,
        )

    try:
        # Resident weights/biases (constant index_map) don't need double
        # buffers: single-buffering halves their VMEM footprint.
        recon, mlv = build(pl.Buffered(1))(x, c, eps, *weights)
    except Exception:
        recon, mlv = build(None)(x, c, eps, *weights)

    recon = recon[:B]
    mu = mlv[:B, :z_dim]
    log_var = mlv[:B, z_dim:2 * z_dim]
    return recon, mu, log_var


def reference_forward(x, c, eps, p):
    """Pure-JAX reference using the same bf16-operand / f32-accumulate recipe
    (a documented deviation from a pure-f32 PyTorch forward)."""
    bf16 = jnp.bfloat16

    def mm(a, w):
        return jnp.dot(a.astype(bf16), w.astype(bf16),
                       preferred_element_type=jnp.float32)

    h = jax.nn.relu(mm(x, p["w1x"]) + mm(c, p["w1c"]) + p["b1"])
    h = jax.nn.relu(mm(h, p["w2"]) + p["b2"])
    mu = mm(h, p["w31"]) + p["b31"]
    log_var = mm(h, p["w32"]) + p["b32"]
    z = eps * jnp.exp(0.5 * log_var) + mu
    h = jax.nn.relu(mm(z, p["w4z"]) + mm(c, p["w4c"]) + p["b4"])
    h = jax.nn.relu(mm(h, p["w5"]) + p["b5"])
    recon = jax.nn.sigmoid(mm(h, p["w6"]) + p["b6"])
    return recon, mu, log_var


if __name__ == "__main__":
    # Model dims: forward() implies x_dim = 784 (x.view(-1, 784)).
    x_dim, h_dim1, h_dim2, z_dim, class_size = 784, 256, 128, 32, 10
    batch = 2

    key = jax.random.PRNGKey(0)
    k_x, k_c, k_eps, k_p = jax.random.split(key, 4)

    # x plays the role of an MNIST-style image batch, flattened to 784.
    x_img = jax.random.uniform(k_x, (batch, 1, 28, 28), dtype=jnp.float32)
    x = x_img.reshape(-1, x_dim)                         # == x.view(-1, 784)
    labels = jax.random.randint(k_c, (batch,), 0, class_size)
    c = jax.nn.one_hot(labels, class_size, dtype=jnp.float32)
    # eps ~ N(0,1), drawn outside the kernel (torch.randn_like equivalent).
    # Rounded to bf16 once so the kernel's bf16 eps stream and the reference
    # see identical noise.
    eps = jax.random.normal(k_eps, (batch, z_dim), dtype=jnp.float32)
    eps = eps.astype(jnp.bfloat16).astype(jnp.float32)

    params = init_params(k_p, x_dim, h_dim1, h_dim2, z_dim, class_size)
    prep = prepare_params(params)   # one-time weight prep, outside the hot path

    recon, mu, log_var = onehot_cvae_forward(x, c, eps, prep)
    jax.block_until_ready((recon, mu, log_var))

    r_ref, mu_ref, lv_ref = reference_forward(x, c, eps, params)
    assert recon.shape == (batch, x_dim) and recon.dtype == jnp.bfloat16
    assert mu.shape == (batch, z_dim) and log_var.shape == (batch, z_dim)
    assert jnp.allclose(mu, mu_ref, atol=1e-3, rtol=1e-3), \
        float(jnp.max(jnp.abs(mu - mu_ref)))
    assert jnp.allclose(log_var, lv_ref, atol=1e-3, rtol=1e-3), \
        float(jnp.max(jnp.abs(log_var - lv_ref)))
    # recon is emitted in bf16 (the largest HBM stream) -> bf16-level tolerance.
    assert jnp.allclose(recon.astype(jnp.float32), r_ref, atol=1e-2, rtol=1e-2), \
        float(jnp.max(jnp.abs(recon.astype(jnp.float32) - r_ref)))

    print("KERNEL_OK")
</pallas_src>

<mosaic_0001>
module attributes {stable_mosaic.version = 11 : i64} {
  func.func @cvae_kernel(%arg0: i32, %arg1: memref<8x784xbf16, #tpu.memory_space<vmem>>, %arg2: memref<8x10xbf16, #tpu.memory_space<vmem>>, %arg3: memref<8x32xbf16, #tpu.memory_space<vmem>>, %arg4: memref<784x256xbf16, #tpu.memory_space<vmem>>, %arg5: memref<10x256xbf16, #tpu.memory_space<vmem>>, %arg6: memref<1x256xf32, #tpu.memory_space<vmem>>, %arg7: memref<256x128xbf16, #tpu.memory_space<vmem>>, %arg8: memref<1x128xf32, #tpu.memory_space<vmem>>, %arg9: memref<128x128xbf16, #tpu.memory_space<vmem>>, %arg10: memref<1x128xf32, #tpu.memory_space<vmem>>, %arg11: memref<32x128xbf16, #tpu.memory_space<vmem>>, %arg12: memref<10x128xbf16, #tpu.memory_space<vmem>>, %arg13: memref<1x128xf32, #tpu.memory_space<vmem>>, %arg14: memref<128x256xbf16, #tpu.memory_space<vmem>>, %arg15: memref<1x256xf32, #tpu.memory_space<vmem>>, %arg16: memref<256x784xbf16, #tpu.memory_space<vmem>>, %arg17: memref<1x784xf32, #tpu.memory_space<vmem>>, %arg18: memref<8x784xbf16, #tpu.memory_space<vmem>>, %arg19: memref<8x128xf32, #tpu.memory_space<vmem>>) attributes {dimension_semantics = [#tpu.dimension_semantics<parallel>], iteration_bounds = array<i64: 1>, scalar_prefetch = 0 : i64, scratch_operands = 0 : i64, tpu.core_type = #tpu.core_type<tc>, window_params = [{transform_indices = @transform_0, window_bounds = array<i64: 8, 784>}, {transform_indices = @transform_1, window_bounds = array<i64: 8, 10>}, {transform_indices = @transform_2, window_bounds = array<i64: 8, 32>}, {pipeline_mode = #tpu.pipeline_mode<synchronous>, transform_indices = @transform_3, window_bounds = array<i64: 784, 256>}, {pipeline_mode = #tpu.pipeline_mode<synchronous>, transform_indices = @transform_4, window_bounds = array<i64: 10, 256>}, {pipeline_mode = #tpu.pipeline_mode<synchronous>, transform_indices = @transform_5, window_bounds = array<i64: 1, 256>}, {pipeline_mode = #tpu.pipeline_mode<synchronous>, transform_indices = @transform_6, window_bounds = array<i64: 256, 128>}, {pipeline_mode = #tpu.pipeline_mode<synchronous>, transform_indices = @transform_7, window_bounds = array<i64: 1, 128>}, {pipeline_mode = #tpu.pipeline_mode<synchronous>, transform_indices = @transform_8, window_bounds = array<i64: 128, 128>}, {pipeline_mode = #tpu.pipeline_mode<synchronous>, transform_indices = @transform_9, window_bounds = array<i64: 1, 128>}, {pipeline_mode = #tpu.pipeline_mode<synchronous>, transform_indices = @transform_10, window_bounds = array<i64: 32, 128>}, {pipeline_mode = #tpu.pipeline_mode<synchronous>, transform_indices = @transform_11, window_bounds = array<i64: 10, 128>}, {pipeline_mode = #tpu.pipeline_mode<synchronous>, transform_indices = @transform_12, window_bounds = array<i64: 1, 128>}, {pipeline_mode = #tpu.pipeline_mode<synchronous>, transform_indices = @transform_13, window_bounds = array<i64: 128, 256>}, {pipeline_mode = #tpu.pipeline_mode<synchronous>, transform_indices = @transform_14, window_bounds = array<i64: 1, 256>}, {pipeline_mode = #tpu.pipeline_mode<synchronous>, transform_indices = @transform_15, window_bounds = array<i64: 256, 784>}, {pipeline_mode = #tpu.pipeline_mode<synchronous>, transform_indices = @transform_16, window_bounds = array<i64: 1, 784>}, {transform_indices = @transform_17, window_bounds = array<i64: 8, 784>}, {transform_indices = @transform_18, window_bounds = array<i64: 8, 128>}]} {
    %c0 = arith.constant 0 : index
    %c0_0 = arith.constant 0 : index
    %0 = vector.load %arg1[%c0, %c0_0] : memref<8x784xbf16, #tpu.memory_space<vmem>>, vector<8x784xbf16>
    %c0_1 = arith.constant 0 : index
    %c0_2 = arith.constant 0 : index
    %1 = vector.load %arg2[%c0_1, %c0_2] : memref<8x10xbf16, #tpu.memory_space<vmem>>, vector<8x10xbf16>
    %c0_3 = arith.constant 0 : index
    %c0_4 = arith.constant 0 : index
    %2 = vector.load %arg4[%c0_3, %c0_4] : memref<784x256xbf16, #tpu.memory_space<vmem>>, vector<784x256xbf16>
    %cst = arith.constant dense<0.000000e+00> : vector<8x256xf32>
    %3 = tpu.matmul %0, %2, %cst {dimension_numbers = #tpu.dot_dimension_numbers<[1], [0], [0], [1], [0, 0, 1, 1], [], []>} : vector<8x784xbf16>, vector<784x256xbf16>, vector<8x256xf32> -> vector<8x256xf32>
    %c0_5 = arith.constant 0 : index
    %c0_6 = arith.constant 0 : index
    %4 = vector.load %arg5[%c0_5, %c0_6] : memref<10x256xbf16, #tpu.memory_space<vmem>>, vector<10x256xbf16>
    %cst_7 = arith.constant dense<0.000000e+00> : vector<8x256xf32>
    %5 = tpu.matmul %1, %4, %cst_7 {dimension_numbers = #tpu.dot_dimension_numbers<[1], [0], [0], [1], [0, 0, 1, 1], [], []>} : vector<8x10xbf16>, vector<10x256xbf16>, vector<8x256xf32> -> vector<8x256xf32>
    %6 = arith.addf %3, %5 : vector<8x256xf32>
    %c0_8 = arith.constant 0 : index
    %c0_9 = arith.constant 0 : index
    %7 = vector.load %arg6[%c0_8, %c0_9] : memref<1x256xf32, #tpu.memory_space<vmem>>, vector<1x256xf32>
    %8 = vector.broadcast %7 : vector<1x256xf32> to vector<8x256xf32>
    %9 = arith.addf %6, %8 : vector<8x256xf32>
    %cst_10 = arith.constant 0.000000e+00 : f32
    %10 = vector.broadcast %cst_10 : f32 to vector<8x256xf32>
    %11 = arith.maximumf %9, %10 : vector<8x256xf32>
    %12 = arith.truncf %11 : vector<8x256xf32> to vector<8x256xbf16>
    %c0_11 = arith.constant 0 : index
    %c0_12 = arith.constant 0 : index
    %13 = vector.load %arg7[%c0_11, %c0_12] : memref<256x128xbf16, #tpu.memory_space<vmem>>, vector<256x128xbf16>
    %cst_13 = arith.constant dense<0.000000e+00> : vector<8x128xf32>
    %14 = tpu.matmul %12, %13, %cst_13 {dimension_numbers = #tpu.dot_dimension_numbers<[1], [0], [0], [1], [0, 0, 1, 1], [], []>} : vector<8x256xbf16>, vector<256x128xbf16>, vector<8x128xf32> -> vector<8x128xf32>
    %c0_14 = arith.constant 0 : index
    %c0_15 = arith.constant 0 : index
    %15 = vector.load %arg8[%c0_14, %c0_15] : memref<1x128xf32, #tpu.memory_space<vmem>>, vector<1x128xf32>
    %16 = vector.broadcast %15 : vector<1x128xf32> to vector<8x128xf32>
    %17 = arith.addf %14, %16 : vector<8x128xf32>
    %cst_16 = arith.constant 0.000000e+00 : f32
    %18 = vector.broadcast %cst_16 : f32 to vector<8x128xf32>
    %19 = arith.maximumf %17, %18 : vector<8x128xf32>
    %20 = arith.truncf %19 : vector<8x128xf32> to vector<8x128xbf16>
    %c0_17 = arith.constant 0 : index
    %c0_18 = arith.constant 0 : index
    %21 = vector.load %arg9[%c0_17, %c0_18] : memref<128x128xbf16, #tpu.memory_space<vmem>>, vector<128x128xbf16>
    %cst_19 = arith.constant dense<0.000000e+00> : vector<8x128xf32>
    %22 = tpu.matmul %20, %21, %cst_19 {dimension_numbers = #tpu.dot_dimension_numbers<[1], [0], [0], [1], [0, 0, 1, 1], [], []>} : vector<8x128xbf16>, vector<128x128xbf16>, vector<8x128xf32> -> vector<8x128xf32>
    %c0_20 = arith.constant 0 : index
    %c0_21 = arith.constant 0 : index
    %23 = vector.load %arg10[%c0_20, %c0_21] : memref<1x128xf32, #tpu.memory_space<vmem>>, vector<1x128xf32>
    %24 = vector.broadcast %23 : vector<1x128xf32> to vector<8x128xf32>
    %25 = arith.addf %22, %24 : vector<8x128xf32>
    %c0_22 = arith.constant 0 : index
    %c0_23 = arith.constant 0 : index
    %26 = vector.load %arg19[%c0_22, %c0_23] : memref<8x128xf32, #tpu.memory_space<vmem>>, vector<8x128xf32>
    tpu.vector_store %arg19[%c0_22, %c0_23], %25 {strides = array<i32>} : memref<8x128xf32, #tpu.memory_space<vmem>>, vector<8x128xf32>,
    %27 = vector.extract_strided_slice %25 {offsets = [0, 0], sizes = [8, 32], strides = [1, 1]} : vector<8x128xf32> to vector<8x32xf32>
    %28 = vector.extract_strided_slice %25 {offsets = [0, 32], sizes = [8, 32], strides = [1, 1]} : vector<8x128xf32> to vector<8x32xf32>
    %cst_24 = arith.constant 5.000000e-01 : f32
    %29 = vector.broadcast %cst_24 : f32 to vector<8x32xf32>
    %30 = arith.mulf %29, %28 : vector<8x32xf32>
    %31 = math.exp %30 : vector<8x32xf32>
    %c0_25 = arith.constant 0 : index
    %c0_26 = arith.constant 0 : index
    %32 = vector.load %arg3[%c0_25, %c0_26] : memref<8x32xbf16, #tpu.memory_space<vmem>>, vector<8x32xbf16>
    %33 = arith.extf %32 : vector<8x32xbf16> to vector<8x32xf32>
    %34 = arith.mulf %33, %31 : vector<8x32xf32>
    %35 = arith.addf %34, %27 : vector<8x32xf32>
    %36 = arith.truncf %35 : vector<8x32xf32> to vector<8x32xbf16>
    %c0_27 = arith.constant 0 : index
    %c0_28 = arith.constant 0 : index
    %37 = vector.load %arg11[%c0_27, %c0_28] : memref<32x128xbf16, #tpu.memory_space<vmem>>, vector<32x128xbf16>
    %cst_29 = arith.constant dense<0.000000e+00> : vector<8x128xf32>
    %38 = tpu.matmul %36, %37, %cst_29 {dimension_numbers = #tpu.dot_dimension_numbers<[1], [0], [0], [1], [0, 0, 1, 1], [], []>} : vector<8x32xbf16>, vector<32x128xbf16>, vector<8x128xf32> -> vector<8x128xf32>
    %c0_30 = arith.constant 0 : index
    %c0_31 = arith.constant 0 : index
    %39 = vector.load %arg12[%c0_30, %c0_31] : memref<10x128xbf16, #tpu.memory_space<vmem>>, vector<10x128xbf16>
    %cst_32 = arith.constant dense<0.000000e+00> : vector<8x128xf32>
    %40 = tpu.matmul %1, %39, %cst_32 {dimension_numbers = #tpu.dot_dimension_numbers<[1], [0], [0], [1], [0, 0, 1, 1], [], []>} : vector<8x10xbf16>, vector<10x128xbf16>, vector<8x128xf32> -> vector<8x128xf32>
    %41 = arith.addf %38, %40 : vector<8x128xf32>
    %c0_33 = arith.constant 0 : index
    %c0_34 = arith.constant 0 : index
    %42 = vector.load %arg13[%c0_33, %c0_34] : memref<1x128xf32, #tpu.memory_space<vmem>>, vector<1x128xf32>
    %43 = vector.broadcast %42 : vector<1x128xf32> to vector<8x128xf32>
    %44 = arith.addf %41, %43 : vector<8x128xf32>
    %cst_35 = arith.constant 0.000000e+00 : f32
    %45 = vector.broadcast %cst_35 : f32 to vector<8x128xf32>
    %46 = arith.maximumf %44, %45 : vector<8x128xf32>
    %47 = arith.truncf %46 : vector<8x128xf32> to vector<8x128xbf16>
    %c0_36 = arith.constant 0 : index
    %c0_37 = arith.constant 0 : index
    %48 = vector.load %arg14[%c0_36, %c0_37] : memref<128x256xbf16, #tpu.memory_space<vmem>>, vector<128x256xbf16>
    %cst_38 = arith.constant dense<0.000000e+00> : vector<8x256xf32>
    %49 = tpu.matmul %47, %48, %cst_38 {dimension_numbers = #tpu.dot_dimension_numbers<[1], [0], [0], [1], [0, 0, 1, 1], [], []>} : vector<8x128xbf16>, vector<128x256xbf16>, vector<8x256xf32> -> vector<8x256xf32>
    %c0_39 = arith.constant 0 : index
    %c0_40 = arith.constant 0 : index
    %50 = vector.load %arg15[%c0_39, %c0_40] : memref<1x256xf32, #tpu.memory_space<vmem>>, vector<1x256xf32>
    %51 = vector.broadcast %50 : vector<1x256xf32> to vector<8x256xf32>
    %52 = arith.addf %49, %51 : vector<8x256xf32>
    %cst_41 = arith.constant 0.000000e+00 : f32
    %53 = vector.broadcast %cst_41 : f32 to vector<8x256xf32>
    %54 = arith.maximumf %52, %53 : vector<8x256xf32>
    %55 = arith.truncf %54 : vector<8x256xf32> to vector<8x256xbf16>
    %c0_42 = arith.constant 0 : index
    %c0_43 = arith.constant 0 : index
    %56 = vector.load %arg16[%c0_42, %c0_43] : memref<256x784xbf16, #tpu.memory_space<vmem>>, vector<256x784xbf16>
    %cst_44 = arith.constant dense<0.000000e+00> : vector<8x784xf32>
    %57 = tpu.matmul %55, %56, %cst_44 {dimension_numbers = #tpu.dot_dimension_numbers<[1], [0], [0], [1], [0, 0, 1, 1], [], []>} : vector<8x256xbf16>, vector<256x784xbf16>, vector<8x784xf32> -> vector<8x784xf32>
    %c0_45 = arith.constant 0 : index
    %c0_46 = arith.constant 0 : index
    %58 = vector.load %arg17[%c0_45, %c0_46] : memref<1x784xf32, #tpu.memory_space<vmem>>, vector<1x784xf32>
    %59 = vector.broadcast %58 : vector<1x784xf32> to vector<8x784xf32>
    %60 = arith.addf %57, %59 : vector<8x784xf32>
    %61 = arith.negf %60 : vector<8x784xf32>
    %62 = math.exp %61 : vector<8x784xf32>
    %cst_47 = arith.constant 1.000000e+00 : f32
    %63 = vector.broadcast %cst_47 : f32 to vector<8x784xf32>
    %64 = arith.addf %63, %62 : vector<8x784xf32>
    %65 = arith.divf %63, %64 : vector<8x784xf32>
    %66 = arith.truncf %65 : vector<8x784xf32> to vector<8x784xbf16>
    %c0_48 = arith.constant 0 : index
    %c0_49 = arith.constant 0 : index
    %67 = vector.load %arg18[%c0_48, %c0_49] : memref<8x784xbf16, #tpu.memory_space<vmem>>, vector<8x784xbf16>
    tpu.vector_store %arg18[%c0_48, %c0_49], %66 {strides = array<i32>} : memref<8x784xbf16, #tpu.memory_space<vmem>>, vector<8x784xbf16>,
    return
  }
  func.func @transform_0(%arg0: i32) -> (i32, i32) {
    %c0_i32 = arith.constant 0 : i32
    %c0_i32_0 = arith.constant 0 : i32
    return %arg0, %c0_i32 : i32, i32
  }
  func.func @transform_1(%arg0: i32) -> (i32, i32) {
    %c0_i32 = arith.constant 0 : i32
    %c0_i32_0 = arith.constant 0 : i32
    return %arg0, %c0_i32 : i32, i32
  }
  func.func @transform_2(%arg0: i32) -> (i32, i32) {
    %c0_i32 = arith.constant 0 : i32
    %c0_i32_0 = arith.constant 0 : i32
    return %arg0, %c0_i32 : i32, i32
  }
  func.func @transform_3(%arg0: i32) -> (i32, i32) {
    %c0_i32 = arith.constant 0 : i32
    %c0_i32_0 = arith.constant 0 : i32
    %c0_i32_1 = arith.constant 0 : i32
    return %c0_i32, %c0_i32_0 : i32, i32
  }
  func.func @transform_4(%arg0: i32) -> (i32, i32) {
    %c0_i32 = arith.constant 0 : i32
    %c0_i32_0 = arith.constant 0 : i32
    %c0_i32_1 = arith.constant 0 : i32
    return %c0_i32, %c0_i32_0 : i32, i32
  }
  func.func @transform_5(%arg0: i32) -> (i32, i32) {
    %c0_i32 = arith.constant 0 : i32
    %c0_i32_0 = arith.constant 0 : i32
    %c0_i32_1 = arith.constant 0 : i32
    return %c0_i32, %c0_i32_0 : i32, i32
  }
  func.func @transform_6(%arg0: i32) -> (i32, i32) {
    %c0_i32 = arith.constant 0 : i32
    %c0_i32_0 = arith.constant 0 : i32
    %c0_i32_1 = arith.constant 0 : i32
    return %c0_i32, %c0_i32_0 : i32, i32
  }
  func.func @transform_7(%arg0: i32) -> (i32, i32) {
    %c0_i32 = arith.constant 0 : i32
    %c0_i32_0 = arith.constant 0 : i32
    %c0_i32_1 = arith.constant 0 : i32
    return %c0_i32, %c0_i32_0 : i32, i32
  }
  func.func @transform_8(%arg0: i32) -> (i32, i32) {
    %c0_i32 = arith.constant 0 : i32
    %c0_i32_0 = arith.constant 0 : i32
    %c0_i32_1 = arith.constant 0 : i32
    return %c0_i32, %c0_i32_0 : i32, i32
  }
  func.func @transform_9(%arg0: i32) -> (i32, i32) {
    %c0_i32 = arith.constant 0 : i32
    %c0_i32_0 = arith.constant 0 : i32
    %c0_i32_1 = arith.constant 0 : i32
    return %c0_i32, %c0_i32_0 : i32, i32
  }
  func.func @transform_10(%arg0: i32) -> (i32, i32) {
    %c0_i32 = arith.constant 0 : i32
    %c0_i32_0 = arith.constant 0 : i32
    %c0_i32_1 = arith.constant 0 : i32
    return %c0_i32, %c0_i32_0 : i32, i32
  }
  func.func @transform_11(%arg0: i32) -> (i32, i32) {
    %c0_i32 = arith.constant 0 : i32
    %c0_i32_0 = arith.constant 0 : i32
    %c0_i32_1 = arith.constant 0 : i32
    return %c0_i32, %c0_i32_0 : i32, i32
  }
  func.func @transform_12(%arg0: i32) -> (i32, i32) {
    %c0_i32 = arith.constant 0 : i32
    %c0_i32_0 = arith.constant 0 : i32
    %c0_i32_1 = arith.constant 0 : i32
    return %c0_i32, %c0_i32_0 : i32, i32
  }
  func.func @transform_13(%arg0: i32) -> (i32, i32) {
    %c0_i32 = arith.constant 0 : i32
    %c0_i32_0 = arith.constant 0 : i32
    %c0_i32_1 = arith.constant 0 : i32
    return %c0_i32, %c0_i32_0 : i32, i32
  }
  func.func @transform_14(%arg0: i32) -> (i32, i32) {
    %c0_i32 = arith.constant 0 : i32
    %c0_i32_0 = arith.constant 0 : i32
    %c0_i32_1 = arith.constant 0 : i32
    return %c0_i32, %c0_i32_0 : i32, i32
  }
  func.func @transform_15(%arg0: i32) -> (i32, i32) {
    %c0_i32 = arith.constant 0 : i32
    %c0_i32_0 = arith.constant 0 : i32
    %c0_i32_1 = arith.constant 0 : i32
    return %c0_i32, %c0_i32_0 : i32, i32
  }
  func.func @transform_16(%arg0: i32) -> (i32, i32) {
    %c0_i32 = arith.constant 0 : i32
    %c0_i32_0 = arith.constant 0 : i32
    %c0_i32_1 = arith.constant 0 : i32
    return %c0_i32, %c0_i32_0 : i32, i32
  }
  func.func @transform_17(%arg0: i32) -> (i32, i32) {
    %c0_i32 = arith.constant 0 : i32
    %c0_i32_0 = arith.constant 0 : i32
    return %arg0, %c0_i32 : i32, i32
  }
  func.func @transform_18(%arg0: i32) -> (i32, i32) {
    %c0_i32 = arith.constant 0 : i32
    %c0_i32_0 = arith.constant 0 : i32
    return %arg0, %c0_i32 : i32, i32
  }
}

module attributes {stable_mosaic.version = 11 : i64} {
  func.func @cvae_kernel(%arg0: i32, %arg1: memref<8x784xbf16, #tpu.memory_space<vmem>>, %arg2: memref<8x10xbf16, #tpu.memory_space<vmem>>, %arg3: memref<8x32xbf16, #tpu.memory_space<vmem>>, %arg4: memref<784x256xbf16, #tpu.memory_space<vmem>>, %arg5: memref<10x256xbf16, #tpu.memory_space<vmem>>, %arg6: memref<1x256xf32, #tpu.memory_space<vmem>>, %arg7: memref<256x128xbf16, #tpu.memory_space<vmem>>, %arg8: memref<1x128xf32, #tpu.memory_space<vmem>>, %arg9: memref<128x128xbf16, #tpu.memory_space<vmem>>, %arg10: memref<1x128xf32, #tpu.memory_space<vmem>>, %arg11: memref<32x128xbf16, #tpu.memory_space<vmem>>, %arg12: memref<10x128xbf16, #tpu.memory_space<vmem>>, %arg13: memref<1x128xf32, #tpu.memory_space<vmem>>, %arg14: memref<128x256xbf16, #tpu.memory_space<vmem>>, %arg15: memref<1x256xf32, #tpu.memory_space<vmem>>, %arg16: memref<256x784xbf16, #tpu.memory_space<vmem>>, %arg17: memref<1x784xf32, #tpu.memory_space<vmem>>, %arg18: memref<8x784xbf16, #tpu.memory_space<vmem>>, %arg19: memref<8x128xf32, #tpu.memory_space<vmem>>) attributes {dimension_semantics = [#tpu.dimension_semantics<parallel>], iteration_bounds = array<i64: 1>, scalar_prefetch = 0 : i64, scratch_operands = 0 : i64, tpu.core_type = #tpu.core_type<tc>, window_params = [{transform_indices = @transform_0, window_bounds = array<i64: 8, 784>}, {transform_indices = @transform_1, window_bounds = array<i64: 8, 10>}, {transform_indices = @transform_2, window_bounds = array<i64: 8, 32>}, {pipeline_mode = #tpu.pipeline_mode<synchronous>, transform_indices = @transform_3, window_bounds = array<i64: 784, 256>}, {pipeline_mode = #tpu.pipeline_mode<synchronous>, transform_indices = @transform_4, window_bounds = array<i64: 10, 256>}, {pipeline_mode = #tpu.pipeline_mode<synchronous>, transform_indices = @transform_5, window_bounds = array<i64: 1, 256>}, {pipeline_mode = #tpu.pipeline_mode<synchronous>, transform_indices = @transform_6, window_bounds = array<i64: 256, 128>}, {pipeline_mode = #tpu.pipeline_mode<synchronous>, transform_indices = @transform_7, window_bounds = array<i64: 1, 128>}, {pipeline_mode = #tpu.pipeline_mode<synchronous>, transform_indices = @transform_8, window_bounds = array<i64: 128, 128>}, {pipeline_mode = #tpu.pipeline_mode<synchronous>, transform_indices = @transform_9, window_bounds = array<i64: 1, 128>}, {pipeline_mode = #tpu.pipeline_mode<synchronous>, transform_indices = @transform_10, window_bounds = array<i64: 32, 128>}, {pipeline_mode = #tpu.pipeline_mode<synchronous>, transform_indices = @transform_11, window_bounds = array<i64: 10, 128>}, {pipeline_mode = #tpu.pipeline_mode<synchronous>, transform_indices = @transform_12, window_bounds = array<i64: 1, 128>}, {pipeline_mode = #tpu.pipeline_mode<synchronous>, transform_indices = @transform_13, window_bounds = array<i64: 128, 256>}, {pipeline_mode = #tpu.pipeline_mode<synchronous>, transform_indices = @transform_14, window_bounds = array<i64: 1, 256>}, {pipeline_mode = #tpu.pipeline_mode<synchronous>, transform_indices = @transform_15, window_bounds = array<i64: 256, 784>}, {pipeline_mode = #tpu.pipeline_mode<synchronous>, transform_indices = @transform_16, window_bounds = array<i64: 1, 784>}, {transform_indices = @transform_17, window_bounds = array<i64: 8, 784>}, {transform_indices = @transform_18, window_bounds = array<i64: 8, 128>}]} {
    %c0 = arith.constant 0 : index
    %c0_0 = arith.constant 0 : index
    %0 = vector.load %arg1[%c0, %c0_0] : memref<8x784xbf16, #tpu.memory_space<vmem>>, vector<8x784xbf16>
    %c0_1 = arith.constant 0 : index
    %c0_2 = arith.constant 0 : index
    %1 = vector.load %arg2[%c0_1, %c0_2] : memref<8x10xbf16, #tpu.memory_space<vmem>>, vector<8x10xbf16>
    %c0_3 = arith.constant 0 : index
    %c0_4 = arith.constant 0 : index
    %2 = vector.load %arg4[%c0_3, %c0_4] : memref<784x256xbf16, #tpu.memory_space<vmem>>, vector<784x256xbf16>
    %cst = arith.constant dense<0.000000e+00> : vector<8x256xf32>
    %3 = tpu.matmul %0, %2, %cst {dimension_numbers = #tpu.dot_dimension_numbers<[1], [0], [0], [1], [0, 0, 1, 1], [], []>} : vector<8x784xbf16>, vector<784x256xbf16>, vector<8x256xf32> -> vector<8x256xf32>
    %c0_5 = arith.constant 0 : index
    %c0_6 = arith.constant 0 : index
    %4 = vector.load %arg5[%c0_5, %c0_6] : memref<10x256xbf16, #tpu.memory_space<vmem>>, vector<10x256xbf16>
    %cst_7 = arith.constant dense<0.000000e+00> : vector<8x256xf32>
    %5 = tpu.matmul %1, %4, %cst_7 {dimension_numbers = #tpu.dot_dimension_numbers<[1], [0], [0], [1], [0, 0, 1, 1], [], []>} : vector<8x10xbf16>, vector<10x256xbf16>, vector<8x256xf32> -> vector<8x256xf32>
    %6 = arith.addf %3, %5 : vector<8x256xf32>
    %c0_8 = arith.constant 0 : index
    %c0_9 = arith.constant 0 : index
    %7 = vector.load %arg6[%c0_8, %c0_9] : memref<1x256xf32, #tpu.memory_space<vmem>>, vector<1x256xf32>
    %8 = vector.broadcast %7 : vector<1x256xf32> to vector<8x256xf32>
    %9 = arith.addf %6, %8 : vector<8x256xf32>
    %cst_10 = arith.constant 0.000000e+00 : f32
    %10 = vector.broadcast %cst_10 : f32 to vector<8x256xf32>
    %11 = arith.maximumf %9, %10 : vector<8x256xf32>
    %12 = arith.truncf %11 : vector<8x256xf32> to vector<8x256xbf16>
    %c0_11 = arith.constant 0 : index
    %c0_12 = arith.constant 0 : index
    %13 = vector.load %arg7[%c0_11, %c0_12] : memref<256x128xbf16, #tpu.memory_space<vmem>>, vector<256x128xbf16>
    %cst_13 = arith.constant dense<0.000000e+00> : vector<8x128xf32>
    %14 = tpu.matmul %12, %13, %cst_13 {dimension_numbers = #tpu.dot_dimension_numbers<[1], [0], [0], [1], [0, 0, 1, 1], [], []>} : vector<8x256xbf16>, vector<256x128xbf16>, vector<8x128xf32> -> vector<8x128xf32>
    %c0_14 = arith.constant 0 : index
    %c0_15 = arith.constant 0 : index
    %15 = vector.load %arg8[%c0_14, %c0_15] : memref<1x128xf32, #tpu.memory_space<vmem>>, vector<1x128xf32>
    %16 = vector.broadcast %15 : vector<1x128xf32> to vector<8x128xf32>
    %17 = arith.addf %14, %16 : vector<8x128xf32>
    %cst_16 = arith.constant 0.000000e+00 : f32
    %18 = vector.broadcast %cst_16 : f32 to vector<8x128xf32>
    %19 = arith.maximumf %17, %18 : vector<8x128xf32>
    %20 = arith.truncf %19 : vector<8x128xf32> to vector<8x128xbf16>
    %c0_17 = arith.constant 0 : index
    %c0_18 = arith.constant 0 : index
    %21 = vector.load %arg9[%c0_17, %c0_18] : memref<128x128xbf16, #tpu.memory_space<vmem>>, vector<128x128xbf16>
    %cst_19 = arith.constant dense<0.000000e+00> : vector<8x128xf32>
    %22 = tpu.matmul %20, %21, %cst_19 {dimension_numbers = #tpu.dot_dimension_numbers<[1], [0], [0], [1], [0, 0, 1, 1], [], []>} : vector<8x128xbf16>, vector<128x128xbf16>, vector<8x128xf32> -> vector<8x128xf32>
    %c0_20 = arith.constant 0 : index
    %c0_21 = arith.constant 0 : index
    %23 = vector.load %arg10[%c0_20, %c0_21] : memref<1x128xf32, #tpu.memory_space<vmem>>, vector<1x128xf32>
    %24 = vector.broadcast %23 : vector<1x128xf32> to vector<8x128xf32>
    %25 = arith.addf %22, %24 : vector<8x128xf32>
    %c0_22 = arith.constant 0 : index
    %c0_23 = arith.constant 0 : index
    %26 = vector.load %arg19[%c0_22, %c0_23] : memref<8x128xf32, #tpu.memory_space<vmem>>, vector<8x128xf32>
    tpu.vector_store %arg19[%c0_22, %c0_23], %25 {strides = array<i32>} : memref<8x128xf32, #tpu.memory_space<vmem>>, vector<8x128xf32>,
    %27 = vector.extract_strided_slice %25 {offsets = [0, 0], sizes = [8, 32], strides = [1, 1]} : vector<8x128xf32> to vector<8x32xf32>
    %28 = vector.extract_strided_slice %25 {offsets = [0, 32], sizes = [8, 32], strides = [1, 1]} : vector<8x128xf32> to vector<8x32xf32>
    %cst_24 = arith.constant 5.000000e-01 : f32
    %29 = vector.broadcast %cst_24 : f32 to vector<8x32xf32>
    %30 = arith.mulf %29, %28 : vector<8x32xf32>
    %31 = math.exp %30 : vector<8x32xf32>
    %c0_25 = arith.constant 0 : index
    %c0_26 = arith.constant 0 : index
    %32 = vector.load %arg3[%c0_25, %c0_26] : memref<8x32xbf16, #tpu.memory_space<vmem>>, vector<8x32xbf16>
    %33 = arith.extf %32 : vector<8x32xbf16> to vector<8x32xf32>
    %34 = arith.mulf %33, %31 : vector<8x32xf32>
    %35 = arith.addf %34, %27 : vector<8x32xf32>
    %36 = arith.truncf %35 : vector<8x32xf32> to vector<8x32xbf16>
    %c0_27 = arith.constant 0 : index
    %c0_28 = arith.constant 0 : index
    %37 = vector.load %arg11[%c0_27, %c0_28] : memref<32x128xbf16, #tpu.memory_space<vmem>>, vector<32x128xbf16>
    %cst_29 = arith.constant dense<0.000000e+00> : vector<8x128xf32>
    %38 = tpu.matmul %36, %37, %cst_29 {dimension_numbers = #tpu.dot_dimension_numbers<[1], [0], [0], [1], [0, 0, 1, 1], [], []>} : vector<8x32xbf16>, vector<32x128xbf16>, vector<8x128xf32> -> vector<8x128xf32>
    %c0_30 = arith.constant 0 : index
    %c0_31 = arith.constant 0 : index
    %39 = vector.load %arg12[%c0_30, %c0_31] : memref<10x128xbf16, #tpu.memory_space<vmem>>, vector<10x128xbf16>
    %cst_32 = arith.constant dense<0.000000e+00> : vector<8x128xf32>
    %40 = tpu.matmul %1, %39, %cst_32 {dimension_numbers = #tpu.dot_dimension_numbers<[1], [0], [0], [1], [0, 0, 1, 1], [], []>} : vector<8x10xbf16>, vector<10x128xbf16>, vector<8x128xf32> -> vector<8x128xf32>
    %41 = arith.addf %38, %40 : vector<8x128xf32>
    %c0_33 = arith.constant 0 : index
    %c0_34 = arith.constant 0 : index
    %42 = vector.load %arg13[%c0_33, %c0_34] : memref<1x128xf32, #tpu.memory_space<vmem>>, vector<1x128xf32>
    %43 = vector.broadcast %42 : vector<1x128xf32> to vector<8x128xf32>
    %44 = arith.addf %41, %43 : vector<8x128xf32>
    %cst_35 = arith.constant 0.000000e+00 : f32
    %45 = vector.broadcast %cst_35 : f32 to vector<8x128xf32>
    %46 = arith.maximumf %44, %45 : vector<8x128xf32>
    %47 = arith.truncf %46 : vector<8x128xf32> to vector<8x128xbf16>
    %c0_36 = arith.constant 0 : index
    %c0_37 = arith.constant 0 : index
    %48 = vector.load %arg14[%c0_36, %c0_37] : memref<128x256xbf16, #tpu.memory_space<vmem>>, vector<128x256xbf16>
    %cst_38 = arith.constant dense<0.000000e+00> : vector<8x256xf32>
    %49 = tpu.matmul %47, %48, %cst_38 {dimension_numbers = #tpu.dot_dimension_numbers<[1], [0], [0], [1], [0, 0, 1, 1], [], []>} : vector<8x128xbf16>, vector<128x256xbf16>, vector<8x256xf32> -> vector<8x256xf32>
    %c0_39 = arith.constant 0 : index
    %c0_40 = arith.constant 0 : index
    %50 = vector.load %arg15[%c0_39, %c0_40] : memref<1x256xf32, #tpu.memory_space<vmem>>, vector<1x256xf32>
    %51 = vector.broadcast %50 : vector<1x256xf32> to vector<8x256xf32>
    %52 = arith.addf %49, %51 : vector<8x256xf32>
    %cst_41 = arith.constant 0.000000e+00 : f32
    %53 = vector.broadcast %cst_41 : f32 to vector<8x256xf32>
    %54 = arith.maximumf %52, %53 : vector<8x256xf32>
    %55 = arith.truncf %54 : vector<8x256xf32> to vector<8x256xbf16>
    %c0_42 = arith.constant 0 : index
    %c0_43 = arith.constant 0 : index
    %56 = vector.load %arg16[%c0_42, %c0_43] : memref<256x784xbf16, #tpu.memory_space<vmem>>, vector<256x784xbf16>
    %cst_44 = arith.constant dense<0.000000e+00> : vector<8x784xf32>
    %57 = tpu.matmul %55, %56, %cst_44 {dimension_numbers = #tpu.dot_dimension_numbers<[1], [0], [0], [1], [0, 0, 1, 1], [], []>} : vector<8x256xbf16>, vector<256x784xbf16>, vector<8x784xf32> -> vector<8x784xf32>
    %c0_45 = arith.constant 0 : index
    %c0_46 = arith.constant 0 : index
    %58 = vector.load %arg17[%c0_45, %c0_46] : memref<1x784xf32, #tpu.memory_space<vmem>>, vector<1x784xf32>
    %59 = vector.broadcast %58 : vector<1x784xf32> to vector<8x784xf32>
    %60 = arith.addf %57, %59 : vector<8x784xf32>
    %61 = arith.negf %60 : vector<8x784xf32>
    %62 = math.exp %61 : vector<8x784xf32>
    %cst_47 = arith.constant 1.000000e+00 : f32
    %63 = vector.broadcast %cst_47 : f32 to vector<8x784xf32>
    %64 = arith.addf %63, %62 : vector<8x784xf32>
    %65 = arith.divf %63, %64 : vector<8x784xf32>
    %66 = arith.truncf %65 : vector<8x784xf32> to vector<8x784xbf16>
    %c0_48 = arith.constant 0 : index
    %c0_49 = arith.constant 0 : index
    %67 = vector.load %arg18[%c0_48, %c0_49] : memref<8x784xbf16, #tpu.memory_space<vmem>>, vector<8x784xbf16>
    tpu.vector_store %arg18[%c0_48, %c0_49], %66 {strides = array<i32>} : memref<8x784xbf16, #tpu.memory_space<vmem>>, vector<8x784xbf16>,
    return
  }
  func.func @transform_0(%arg0: i32) -> (i32, i32) {
    %c0_i32 = arith.constant 0 : i32
    %c0_i32_0 = arith.constant 0 : i32
    return %arg0, %c0_i32 : i32, i32
  }
  func.func @transform_1(%arg0: i32) -> (i32, i32) {
    %c0_i32 = arith.constant 0 : i32
    %c0_i32_0 = arith.constant 0 : i32
    return %arg0, %c0_i32 : i32, i32
  }
  func.func @transform_2(%arg0: i32) -> (i32, i32) {
    %c0_i32 = arith.constant 0 : i32
    %c0_i32_0 = arith.constant 0 : i32
    return %arg0, %c0_i32 : i32, i32
  }
  func.func @transform_3(%arg0: i32) -> (i32, i32) {
    %c0_i32 = arith.constant 0 : i32
    %c0_i32_0 = arith.constant 0 : i32
    %c0_i32_1 = arith.constant 0 : i32
    return %c0_i32, %c0_i32_0 : i32, i32
  }
  func.func @transform_4(%arg0: i32) -> (i32, i32) {
    %c0_i32 = arith.constant 0 : i32
    %c0_i32_0 = arith.constant 0 : i32
    %c0_i32_1 = arith.constant 0 : i32
    return %c0_i32, %c0_i32_0 : i32, i32
  }
  func.func @transform_5(%arg0: i32) -> (i32, i32) {
    %c0_i32 = arith.constant 0 : i32
    %c0_i32_0 = arith.constant 0 : i32
    %c0_i32_1 = arith.constant 0 : i32
    return %c0_i32, %c0_i32_0 : i32, i32
  }
  func.func @transform_6(%arg0: i32) -> (i32, i32) {
    %c0_i32 = arith.constant 0 : i32
    %c0_i32_0 = arith.constant 0 : i32
    %c0_i32_1 = arith.constant 0 : i32
    return %c0_i32, %c0_i32_0 : i32, i32
  }
  func.func @transform_7(%arg0: i32) -> (i32, i32) {
    %c0_i32 = arith.constant 0 : i32
    %c0_i32_0 = arith.constant 0 : i32
    %c0_i32_1 = arith.constant 0 : i32
    return %c0_i32, %c0_i32_0 : i32, i32
  }
  func.func @transform_8(%arg0: i32) -> (i32, i32) {
    %c0_i32 = arith.constant 0 : i32
    %c0_i32_0 = arith.constant 0 : i32
    %c0_i32_1 = arith.constant 0 : i32
    return %c0_i32, %c0_i32_0 : i32, i32
  }
  func.func @transform_9(%arg0: i32) -> (i32, i32) {
    %c0_i32 = arith.constant 0 : i32
    %c0_i32_0 = arith.constant 0 : i32
    %c0_i32_1 = arith.constant 0 : i32
    return %c0_i32, %c0_i32_0 : i32, i32
  }
  func.func @transform_10(%arg0: i32) -> (i32, i32) {
    %c0_i32 = arith.constant 0 : i32
    %c0_i32_0 = arith.constant 0 : i32
    %c0_i32_1 = arith.constant 0 : i32
    return %c0_i32, %c0_i32_0 : i32, i32
  }
  func.func @transform_11(%arg0: i32) -> (i32, i32) {
    %c0_i32 = arith.constant 0 : i32
    %c0_i32_0 = arith.constant 0 : i32
    %c0_i32_1 = arith.constant 0 : i32
    return %c0_i32, %c0_i32_0 : i32, i32
  }
  func.func @transform_12(%arg0: i32) -> (i32, i32) {
    %c0_i32 = arith.constant 0 : i32
    %c0_i32_0 = arith.constant 0 : i32
    %c0_i32_1 = arith.constant 0 : i32
    return %c0_i32, %c0_i32_0 : i32, i32
  }
  func.func @transform_13(%arg0: i32) -> (i32, i32) {
    %c0_i32 = arith.constant 0 : i32
    %c0_i32_0 = arith.constant 0 : i32
    %c0_i32_1 = arith.constant 0 : i32
    return %c0_i32, %c0_i32_0 : i32, i32
  }
  func.func @transform_14(%arg0: i32) -> (i32, i32) {
    %c0_i32 = arith.constant 0 : i32
    %c0_i32_0 = arith.constant 0 : i32
    %c0_i32_1 = arith.constant 0 : i32
    return %c0_i32, %c0_i32_0 : i32, i32
  }
  func.func @transform_15(%arg0: i32) -> (i32, i32) {
    %c0_i32 = arith.constant 0 : i32
    %c0_i32_0 = arith.constant 0 : i32
    %c0_i32_1 = arith.constant 0 : i32
    return %c0_i32, %c0_i32_0 : i32, i32
  }
  func.func @transform_16(%arg0: i32) -> (i32, i32) {
    %c0_i32 = arith.constant 0 : i32
    %c0_i32_0 = arith.constant 0 : i32
    %c0_i32_1 = arith.constant 0 : i32
    return %c0_i32, %c0_i32_0 : i32, i32
  }
  func.func @transform_17(%arg0: i32) -> (i32, i32) {
    %c0_i32 = arith.constant 0 : i32
    %c0_i32_0 = arith.constant 0 : i32
    return %arg0, %c0_i32 : i32, i32
  }
  func.func @transform_18(%arg0: i32) -> (i32, i32) {
    %c0_i32 = arith.constant 0 : i32
    %c0_i32_0 = arith.constant 0 : i32
    return %arg0, %c0_i32 : i32, i32
  }
}

</mosaic_0001>

<llo_original>
// kernel: tpu_custom_call.1
$region0: #{tpu_custom_call.1}
  #allocation0 [shape = 'u32[]', space=smem, size = 0x4, offset = 0x4, fixed_abs, tag = 'smem constant byte address 0x4 - core index']
  #allocation1 [shape = 'u32[144,128]{1,0:T(1,128)}', space=vmem, size = 0x12000, scoped, tag = 'internal scratch']
  %s0 = inlined_call_operand.vmem [shape: bf16[8,784], index: 0, kind: input, shape index: {}]
  %s1 = inlined_call_operand.vmem [shape: bf16[8,10], index: 1, kind: input, shape index: {}]
  %s2 = inlined_call_operand.vmem [shape: bf16[8,32], index: 2, kind: input, shape index: {}]
  %s3 = inlined_call_operand.vmem [shape: bf16[784,256], index: 3, kind: input, shape index: {}]
  %s4 = inlined_call_operand.vmem [shape: bf16[10,256], index: 4, kind: input, shape index: {}]
  %s5 = inlined_call_operand.vmem [shape: f32[1,256], index: 5, kind: input, shape index: {}]
  %s6 = inlined_call_operand.vmem [shape: bf16[256,128], index: 6, kind: input, shape index: {}]
  %s7 = inlined_call_operand.vmem [shape: f32[1,128], index: 7, kind: input, shape index: {}]
  %s8 = inlined_call_operand.vmem [shape: bf16[128,128], index: 8, kind: input, shape index: {}]
  %s9 = inlined_call_operand.vmem [shape: f32[1,128], index: 9, kind: input, shape index: {}]
  %s10 = inlined_call_operand.vmem [shape: bf16[32,128], index: 10, kind: input, shape index: {}]
  %s11 = inlined_call_operand.vmem [shape: bf16[10,128], index: 11, kind: input, shape index: {}]
  %s12 = inlined_call_operand.vmem [shape: f32[1,128], index: 12, kind: input, shape index: {}]
  %s13 = inlined_call_operand.vmem [shape: bf16[128,256], index: 13, kind: input, shape index: {}]
  %s14 = inlined_call_operand.vmem [shape: f32[1,256], index: 14, kind: input, shape index: {}]
  %s15 = inlined_call_operand.vmem [shape: bf16[256,784], index: 15, kind: input, shape index: {}]
  %s16 = inlined_call_operand.vmem [shape: f32[1,784], index: 16, kind: input, shape index: {}]
  %s17 = inlined_call_operand.hbm [shape: bf16[8,784], index: 17, kind: output, shape index: {0}]
  %s18 = inlined_call_operand.hbm [shape: f32[8,128], index: 18, kind: output, shape index: {1}]
  %19 = xla_tuple %s17, %s18
  %s20 = sld [smem:[#allocation0]]
  $region86: #{tpu_custom_call.1} parent=0
    _
  %s22 = ssub.s32 1, %s20
  %s23 = scalar_select 0, %s22, %s20
  $region1: #{tpu_custom_call.1} parent=0
    #allocation2 [shape = 'u8[14336]{0}', space=vmem, size = 0x3800, scoped, tag = 'output window, operand 0, single buffered']
    #allocation3 [shape = 's32[1]{0}', space=sflag, size = 0x4, scoped, tag = 'scoped memory for tpu_custom_call.1']
    #allocation4 [shape = 'u8[4096]{0}', space=vmem, size = 0x1000, scoped, tag = 'output window, operand 1, single buffered']
    #allocation5 [shape = 's32[1]{0}', space=sflag, size = 0x4, scoped, tag = 'scoped memory for tpu_custom_call.1']
    %24 = vsyncpa [#allocation3], 0
    %25 = vsyncpa [#allocation5], 0
    // Predicated region
    $region2: #{tpu_custom_call.1} parent=1 // pred_check
      _
    $region3: #{tpu_custom_call.1} parent=1 // pred_check_branch
      %27 = sbr.rel (0) target = $region5
    $region4: #{tpu_custom_call.1} parent=1 // pred_region
      _
    $region5: #{tpu_custom_call.1} parent=1 // pred_fallthru
      _
    // Predicated region
    $region6: #{tpu_custom_call.1} parent=1 // pred_check
      _
    $region7: #{tpu_custom_call.1} parent=1 // pred_check_branch
      %29 = sbr.rel (0) target = $region9
    $region8: #{tpu_custom_call.1} parent=1 // pred_region
      _
    $region9: #{tpu_custom_call.1} parent=1 // pred_fallthru
      _
    // Predicated region
    $region10: #{tpu_custom_call.1} parent=1 // pred_check
      _
    $region11: #{tpu_custom_call.1} parent=1 // pred_check_branch
      %31 = sbr.rel (0) target = $region13
    $region12: #{tpu_custom_call.1} parent=1 // pred_region
      _
    $region13: #{tpu_custom_call.1} parent=1 // pred_fallthru
      _
    // Predicated region
    $region14: #{tpu_custom_call.1} parent=1 // pred_check
      _
    $region15: #{tpu_custom_call.1} parent=1 // pred_check_branch
      %33 = sbr.rel (0) target = $region17
    $region16: #{tpu_custom_call.1} parent=1 // pred_region
      _
    $region17: #{tpu_custom_call.1} parent=1 // pred_fallthru
      _
    // Predicated region
    $region18: #{tpu_custom_call.1} parent=1 // pred_check
      _
    $region19: #{tpu_custom_call.1} parent=1 // pred_check_branch
      %35 = sbr.rel (0) target = $region21
    $region20: #{tpu_custom_call.1} parent=1 // pred_region
      _
    $region21: #{tpu_custom_call.1} parent=1 // pred_fallthru
      _
    // Predicated region
    $region22: #{tpu_custom_call.1} parent=1 // pred_check
      _
    $region23: #{tpu_custom_call.1} parent=1 // pred_check_branch
      %37 = sbr.rel (0) target = $region25
    $region24: #{tpu_custom_call.1} parent=1 // pred_region
      _
    $region25: #{tpu_custom_call.1} parent=1 // pred_fallthru
      _
    // Predicated region
    $region26: #{tpu_custom_call.1} parent=1 // pred_check
      _
    $region27: #{tpu_custom_call.1} parent=1 // pred_check_branch
      %39 = sbr.rel (0) target = $region29
    $region28: #{tpu_custom_call.1} parent=1 // pred_region
      _
    $region29: #{tpu_custom_call.1} parent=1 // pred_fallthru
      _
    // Predicated region
    $region30: #{tpu_custom_call.1} parent=1 // pred_check
      _
    $region31: #{tpu_custom_call.1} parent=1 // pred_check_branch
      %41 = sbr.rel (0) target = $region33
    $region32: #{tpu_custom_call.1} parent=1 // pred_region
      _
    $region33: #{tpu_custom_call.1} parent=1 // pred_fallthru
      _
    // Predicated region
    $region34: #{tpu_custom_call.1} parent=1 // pred_check
      _
    $region35: #{tpu_custom_call.1} parent=1 // pred_check_branch
      %43 = sbr.rel (0) target = $region37
    $region36: #{tpu_custom_call.1} parent=1 // pred_region
      _
    $region37: #{tpu_custom_call.1} parent=1 // pred_fallthru
      _
    // Predicated region
    $region38: #{tpu_custom_call.1} parent=1 // pred_check
      _
    $region39: #{tpu_custom_call.1} parent=1 // pred_check_branch
      %45 = sbr.rel (0) target = $region41
    $region40: #{tpu_custom_call.1} parent=1 // pred_region
      _
    $region41: #{tpu_custom_call.1} parent=1 // pred_fallthru
      _
    // Predicated region
    $region42: #{tpu_custom_call.1} parent=1 // pred_check
      _
    $region43: #{tpu_custom_call.1} parent=1 // pred_check_branch
      %47 = sbr.rel (0) target = $region45
    $region44: #{tpu_custom_call.1} parent=1 // pred_region
      _
    $region45: #{tpu_custom_call.1} parent=1 // pred_fallthru
      _
    // Predicated region
    $region46: #{tpu_custom_call.1} parent=1 // pred_check
      _
    $region47: #{tpu_custom_call.1} parent=1 // pred_check_branch
      %49 = sbr.rel (0) target = $region49
    $region48: #{tpu_custom_call.1} parent=1 // pred_region
      _
    $region49: #{tpu_custom_call.1} parent=1 // pred_fallthru
      _
    // Predicated region
    $region50: #{tpu_custom_call.1} parent=1 // pred_check
      _
    $region51: #{tpu_custom_call.1} parent=1 // pred_check_branch
      %51 = sbr.rel (0) target = $region53
    $region52: #{tpu_custom_call.1} parent=1 // pred_region
      _
    $region53: #{tpu_custom_call.1} parent=1 // pred_fallthru
      _
    // Predicated region
    $region54: #{tpu_custom_call.1} parent=1 // pred_check
      _
    $region55: #{tpu_custom_call.1} parent=1 // pred_check_branch
      %53 = sbr.rel (0) target = $region57
    $region56: #{tpu_custom_call.1} parent=1 // pred_region
      _
    $region57: #{tpu_custom_call.1} parent=1 // pred_fallthru
      _
    // Predicated region
    $region58: #{tpu_custom_call.1} parent=1 // pred_check
      _
    $region59: #{tpu_custom_call.1} parent=1 // pred_check_branch
      %55 = sbr.rel (0) target = $region61
    $region60: #{tpu_custom_call.1} parent=1 // pred_region
      _
    $region61: #{tpu_custom_call.1} parent=1 // pred_fallthru
      _
    // Predicated region
    $region62: #{tpu_custom_call.1} parent=1 // pred_check
      _
    $region63: #{tpu_custom_call.1} parent=1 // pred_check_branch
      %57 = sbr.rel (0) target = $region65
    $region64: #{tpu_custom_call.1} parent=1 // pred_region
      _
    $region65: #{tpu_custom_call.1} parent=1 // pred_fallthru
      _
    // Predicated region
    $region66: #{tpu_custom_call.1} parent=1 // pred_check
      _
    $region67: #{tpu_custom_call.1} parent=1 // pred_check_branch
      %59 = sbr.rel (0) target = $region69
    $region68: #{tpu_custom_call.1} parent=1 // pred_region
      _
    $region69: #{tpu_custom_call.1} parent=1 // pred_fallthru
      _
    %v61 = vld [vmem:[%s0] sm:$0xff]
    %v62 = vld [vmem:[%s0 + $0x8] sm:$0xff]
    %v63 = vld [vmem:[%s0 + $0x10] sm:$0xff]
    %v64 = vld [vmem:[%s0 + $0x18] sm:$0xf]
    %v65 = vld [vmem:[%s1] sm:$0xf]
    %v66 = vld [vmem:[%s3] sm:$0xff]
    %v67 = vld [vmem:[%s3 + $0x8] sm:$0xff]
    %v68 = vld [vmem:[%s3 + $0x10] sm:$0xff]
    %v69 = vld [vmem:[%s3 + $0x18] sm:$0xff]
    %v70 = vld [vmem:[%s3 + $0x20] sm:$0xff]
    %v71 = vld [vmem:[%s3 + $0x28] sm:$0xff]
    %v72 = vld [vmem:[%s3 + $0x30] sm:$0xff]
    %v73 = vld [vmem:[%s3 + $0x38] sm:$0xff]
    %v74 = vld [vmem:[%s3 + $0x40] sm:$0xff]
    %v75 = vld [vmem:[%s3 + $0x48] sm:$0xff]
    %v76 = vld [vmem:[%s3 + $0x50] sm:$0xff]
    %v77 = vld [vmem:[%s3 + $0x58] sm:$0xff]
    %v78 = vld [vmem:[%s3 + $0x60] sm:$0xff]
    %v79 = vld [vmem:[%s3 + $0x68] sm:$0xff]
    %v80 = vld [vmem:[%s3 + $0x70] sm:$0xff]
    %v81 = vld [vmem:[%s3 + $0x78] sm:$0xff]
    %v82 = vld [vmem:[%s3 + $0x80] sm:$0xff]
    %v83 = vld [vmem:[%s3 + $0x88] sm:$0xff]
    %v84 = vld [vmem:[%s3 + $0x90] sm:$0xff]
    %v85 = vld [vmem:[%s3 + $0x98] sm:$0xff]
    %v86 = vld [vmem:[%s3 + $0xa0] sm:$0xff]
    %v87 = vld [vmem:[%s3 + $0xa8] sm:$0xff]
    %v88 = vld [vmem:[%s3 + $0xb0] sm:$0xff]
    %v89 = vld [vmem:[%s3 + $0xb8] sm:$0xff]
    %v90 = vld [vmem:[%s3 + $0xc0] sm:$0xff]
    %v91 = vld [vmem:[%s3 + $0xc8] sm:$0xff]
    %v92 = vld [vmem:[%s3 + $0xd0] sm:$0xff]
    %v93 = vld [vmem:[%s3 + $0xd8] sm:$0xff]
    %v94 = vld [vmem:[%s3 + $0xe0] sm:$0xff]
    %v95 = vld [vmem:[%s3 + $0xe8] sm:$0xff]
    %v96 = vld [vmem:[%s3 + $0xf0] sm:$0xff]
    %v97 = vld [vmem:[%s3 + $0xf8] sm:$0xff]
    %v98 = vld [vmem:[%s3 + $0x100] sm:$0xff]
    %v99 = vld [vmem:[%s3 + $0x108] sm:$0xff]
    %v100 = vld [vmem:[%s3 + $0x110] sm:$0xff]
    %v101 = vld [vmem:[%s3 + $0x118] sm:$0xff]
    %v102 = vld [vmem:[%s3 + $0x120] sm:$0xff]
    %v103 = vld [vmem:[%s3 + $0x128] sm:$0xff]
    %v104 = vld [vmem:[%s3 + $0x130] sm:$0xff]
    %v105 = vld [vmem:[%s3 + $0x138] sm:$0xff]
    %v106 = vld [vmem:[%s3 + $0x140] sm:$0xff]
    %v107 = vld [vmem:[%s3 + $0x148] sm:$0xff]
    %v108 = vld [vmem:[%s3 + $0x150] sm:$0xff]
    %v109 = vld [vmem:[%s3 + $0x158] sm:$0xff]
    %v110 = vld [vmem:[%s3 + $0x160] sm:$0xff]
    %v111 = vld [vmem:[%s3 + $0x168] sm:$0xff]
    %v112 = vld [vmem:[%s3 + $0x170] sm:$0xff]
    %v113 = vld [vmem:[%s3 + $0x178] sm:$0xff]
    %v114 = vld [vmem:[%s3 + $0x180] sm:$0xff]
    %v115 = vld [vmem:[%s3 + $0x188] sm:$0xff]
    %v116 = vld [vmem:[%s3 + $0x190] sm:$0xff]
    %v117 = vld [vmem:[%s3 + $0x198] sm:$0xff]
    %v118 = vld [vmem:[%s3 + $0x1a0] sm:$0xff]
    %v119 = vld [vmem:[%s3 + $0x1a8] sm:$0xff]
    %v120 = vld [vmem:[%s3 + $0x1b0] sm:$0xff]
    %v121 = vld [vmem:[%s3 + $0x1b8] sm:$0xff]
    %v122 = vld [vmem:[%s3 + $0x1c0] sm:$0xff]
    %v123 = vld [vmem:[%s3 + $0x1c8] sm:$0xff]
    %v124 = vld [vmem:[%s3 + $0x1d0] sm:$0xff]
    %v125 = vld [vmem:[%s3 + $0x1d8] sm:$0xff]
    %v126 = vld [vmem:[%s3 + $0x1e0] sm:$0xff]
    %v127 = vld [vmem:[%s3 + $0x1e8] sm:$0xff]
    %v128 = vld [vmem:[%s3 + $0x1f0] sm:$0xff]
    %v129 = vld [vmem:[%s3 + $0x1f8] sm:$0xff]
    %v130 = vld [vmem:[%s3 + $0x200] sm:$0xff]
    %v131 = vld [vmem:[%s3 + $0x208] sm:$0xff]
    %v132 = vld [vmem:[%s3 + $0x210] sm:$0xff]
    %v133 = vld [vmem:[%s3 + $0x218] sm:$0xff]
    %v134 = vld [vmem:[%s3 + $0x220] sm:$0xff]
    %v135 = vld [vmem:[%s3 + $0x228] sm:$0xff]
    %v136 = vld [vmem:[%s3 + $0x230] sm:$0xff]
    %v137 = vld [vmem:[%s3 + $0x238] sm:$0xff]
    %v138 = vld [vmem:[%s3 + $0x240] sm:$0xff]
    %v139 = vld [vmem:[%s3 + $0x248] sm:$0xff]
    %v140 = vld [vmem:[%s3 + $0x250] sm:$0xff]
    %v141 = vld [vmem:[%s3 + $0x258] sm:$0xff]
    %v142 = vld [vmem:[%s3 + $0x260] sm:$0xff]
    %v143 = vld [vmem:[%s3 + $0x268] sm:$0xff]
    %v144 = vld [vmem:[%s3 + $0x270] sm:$0xff]
    %v145 = vld [vmem:[%s3 + $0x278] sm:$0xff]
    %v146 = vld [vmem:[%s3 + $0x280] sm:$0xff]
    %v147 = vld [vmem:[%s3 + $0x288] sm:$0xff]
    %v148 = vld [vmem:[%s3 + $0x290] sm:$0xff]
    %v149 = vld [vmem:[%s3 + $0x298] sm:$0xff]
    %v150 = vld [vmem:[%s3 + $0x2a0] sm:$0xff]
    %v151 = vld [vmem:[%s3 + $0x2a8] sm:$0xff]
    %v152 = vld [vmem:[%s3 + $0x2b0] sm:$0xff]
    %v153 = vld [vmem:[%s3 + $0x2b8] sm:$0xff]
    %v154 = vld [vmem:[%s3 + $0x2c0] sm:$0xff]
    %v155 = vld [vmem:[%s3 + $0x2c8] sm:$0xff]
    %v156 = vld [vmem:[%s3 + $0x2d0] sm:$0xff]
    %v157 = vld [vmem:[%s3 + $0x2d8] sm:$0xff]
    %v158 = vld [vmem:[%s3 + $0x2e0] sm:$0xff]
    %v159 = vld [vmem:[%s3 + $0x2e8] sm:$0xff]
    %v160 = vld [vmem:[%s3 + $0x2f0] sm:$0xff]
    %v161 = vld [vmem:[%s3 + $0x2f8] sm:$0xff]
    %v162 = vld [vmem:[%s3 + $0x300] sm:$0xff]
    %v163 = vld [vmem:[%s3 + $0x308] sm:$0xff]
    %v164 = vld [vmem:[%s4] sm:$0xff]
    %v165 = vld [vmem:[%s4 + $0x8] sm:$0x11]
    %v168 = vunpack.c.l.b16 %v164
    %v169 = vunpack.c.h.b16 %v164
    %v170 = vunpack.c.l.b16 %v165
    %v171 = vunpack.c.h.b16 %v165
    %v172 = vpack.c.b16 %v170, %v168
    %v173 = vpack.c.b16 %v171, %v169
    %vm174 = vcmask 80896
    %v176 = vsel %vm174, %v65, 0
    %vm178 = vcmask 1044480
    %v180 = vsel %vm178, %v172, 0
    %v183 = vsel %vm178, %v173, 0
    %185 = vmatprep.subr.bf16.mxu0 0
    %186 = vmatpush1.bf16.msra.mxu0 0
    %187 = vmatprep.subr.bf16.mxu0 0
    %188 = vmatpush1.bf16.msra.mxu0 0
    %189 = vmatprep.subr.bf16.mxu0 0
    %190 = vmatpush1.bf16.msra.mxu0 0
    %191 = vmatprep.subr.bf16.mxu0 0
    %192 = vmatpush1.bf16.msra.mxu0 0
    %193 = vmatprep.subr.bf16.mxu0 0
    %194 = vmatpush1.bf16.msra.mxu0 0
    %195 = vmatprep.subr.bf16.mxu0 0
    %196 = vmatpush1.bf16.msra.mxu0 0
    %197 = vmatprep.subr.bf16.mxu0 0
    %198 = vmatpush1.bf16.msra.mxu0 0
    %199 = vmatprep.subr.bf16.mxu0 %v183
    %200 = vmatpush1.bf16.msra.mxu0 %v180
    %201 = vmatprep.subr.bf16.mxu0 0
    %202 = vmatpush2.bf16.msra.mxu0 0
    %203 = vmatprep.subr.bf16.mxu0 0
    %204 = vmatpush2.bf16.msra.mxu0 0
    %205 = vmatprep.subr.bf16.mxu0 0
    %206 = vmatpush2.bf16.msra.mxu0 0
    %207 = vmatprep.subr.bf16.mxu0 0
    %208 = vmatpush2.bf16.msra.mxu0 0
    %209 = vmatprep.subr.bf16.mxu0 0
    %210 = vmatpush2.bf16.msra.mxu0 0
    %211 = vmatprep.subr.bf16.mxu0 0
    %212 = vmatpush2.bf16.msra.mxu0 0
    %213 = vmatprep.subr.bf16.mxu0 0
    %214 = vmatpush2.bf16.msra.mxu0 0
    %215 = vmatprep.subr.bf16.mxu0 0
    %216 = vmatpush2.bf16.msra.mxu0 0
    %217 = vmatprep.mubr.bf16.mxu0 0
    %218 = vmatmul.mubr.bf16.gmra.mxu0 %v176
    %v219 = vpop.f32.mrf.mxu0
    %v220 = vadd.f32 0.0, %v219
    %v221 = vpop.f32.mrf.mxu0
    %v222 = vadd.f32 0.0, %v221
    %v223 = vpop.f32.mrf.mxu0
    %v224 = vpop.f32.mrf.mxu0
    %225 = vdwg.mxu0
    %v230 = vunpack.c.l.b16 %v61
    %v231 = vunpack.c.h.b16 %v61
    %v232 = vunpack.c.l.b16 %v62
    %v233 = vunpack.c.h.b16 %v62
    %v234 = vunpack.c.l.b16 %v63
    %v235 = vunpack.c.h.b16 %v63
    %v236 = vunpack.c.l.b16 %v64
    %v237 = vpack.c.b16 %v230, %v230
    %v238 = vpack.c.b16 %v231, %v231
    %v239 = vpack.c.b16 %v232, %v232
    %v240 = vpack.c.b16 %v233, %v233
    %v241 = vpack.c.b16 %v234, %v234
    %v242 = vpack.c.b16 %v235, %v235
    %v243 = vpack.c.b16 %v236, %v236
    %v348 = vunpack.c.l.b16 %v66
    %v349 = vunpack.c.h.b16 %v66
    %v350 = vunpack.c.l.b16 %v67
    %v351 = vunpack.c.h.b16 %v67
    %v352 = vunpack.c.l.b16 %v68
    %v353 = vunpack.c.h.b16 %v68
    %v354 = vunpack.c.l.b16 %v69
    %v355 = vunpack.c.h.b16 %v69
    %v356 = vunpack.c.l.b16 %v70
    %v357 = vunpack.c.h.b16 %v70
    %v358 = vunpack.c.l.b16 %v71
    %v359 = vunpack.c.h.b16 %v71
    %v360 = vunpack.c.l.b16 %v72
    %v361 = vunpack.c.h.b16 %v72
    %v362 = vunpack.c.l.b16 %v73
    %v363 = vunpack.c.h.b16 %v73
    %v364 = vunpack.c.l.b16 %v74
    %v365 = vunpack.c.h.b16 %v74
    %v366 = vunpack.c.l.b16 %v75
    %v367 = vunpack.c.h.b16 %v75
    %v368 = vunpack.c.l.b16 %v76
    %v369 = vunpack.c.h.b16 %v76
    %v370 = vunpack.c.l.b16 %v77
    %v371 = vunpack.c.h.b16 %v77
    %v372 = vunpack.c.l.b16 %v78
    %v373 = vunpack.c.h.b16 %v78
    %v374 = vunpack.c.l.b16 %v79
    %v375 = vunpack.c.h.b16 %v79
    %v376 = vunpack.c.l.b16 %v80
    %v377 = vunpack.c.h.b16 %v80
    %v378 = vunpack.c.l.b16 %v81
    %v379 = vunpack.c.h.b16 %v81
    %v380 = vunpack.c.l.b16 %v82
    %v381 = vunpack.c.h.b16 %v82
    %v382 = vunpack.c.l.b16 %v83
    %v383 = vunpack.c.h.b16 %v83
    %v384 = vunpack.c.l.b16 %v84
    %v385 = vunpack.c.h.b16 %v84
    %v386 = vunpack.c.l.b16 %v85
    %v387 = vunpack.c.h.b16 %v85
    %v388 = vunpack.c.l.b16 %v86
    %v389 = vunpack.c.h.b16 %v86
    %v390 = vunpack.c.l.b16 %v87
    %v391 = vunpack.c.h.b16 %v87
    %v392 = vunpack.c.l.b16 %v88
    %v393 = vunpack.c.h.b16 %v88
    %v394 = vunpack.c.l.b16 %v89
    %v395 = vunpack.c.h.b16 %v89
    %v396 = vunpack.c.l.b16 %v90
    %v397 = vunpack.c.h.b16 %v90
    %v398 = vunpack.c.l.b16 %v91
    %v399 = vunpack.c.h.b16 %v91
    %v400 = vunpack.c.l.b16 %v92
    %v401 = vunpack.c.h.b16 %v92
    %v402 = vunpack.c.l.b16 %v93
    %v403 = vunpack.c.h.b16 %v93
    %v404 = vunpack.c.l.b16 %v94
    %v405 = vunpack.c.h.b16 %v94
    %v406 = vunpack.c.l.b16 %v95
    %v407 = vunpack.c.h.b16 %v95
    %v408 = vunpack.c.l.b16 %v96
    %v409 = vunpack.c.h.b16 %v96
    %v410 = vunpack.c.l.b16 %v97
    %v411 = vunpack.c.h.b16 %v97
    %v412 = vunpack.c.l.b16 %v98
    %v413 = vunpack.c.h.b16 %v98
    %v414 = vunpack.c.l.b16 %v99
    %v415 = vunpack.c.h.b16 %v99
    %v416 = vunpack.c.l.b16 %v100
    %v417 = vunpack.c.h.b16 %v100
    %v418 = vunpack.c.l.b16 %v101
    %v419 = vunpack.c.h.b16 %v101
    %v420 = vunpack.c.l.b16 %v102
    %v421 = vunpack.c.h.b16 %v102
    %v422 = vunpack.c.l.b16 %v103
    %v423 = vunpack.c.h.b16 %v103
    %v424 = vunpack.c.l.b16 %v104
    %v425 = vunpack.c.h.b16 %v104
    %v426 = vunpack.c.l.b16 %v105
    %v427 = vunpack.c.h.b16 %v105
    %v428 = vunpack.c.l.b16 %v106
    %v429 = vunpack.c.h.b16 %v106
    %v430 = vunpack.c.l.b16 %v107
    %v431 = vunpack.c.h.b16 %v107
    %v432 = vunpack.c.l.b16 %v108
    %v433 = vunpack.c.h.b16 %v108
    %v434 = vunpack.c.l.b16 %v109
    %v435 = vunpack.c.h.b16 %v109
    %v436 = vunpack.c.l.b16 %v110
    %v437 = vunpack.c.h.b16 %v110
    %v438 = vunpack.c.l.b16 %v111
    %v439 = vunpack.c.h.b16 %v111
    %v440 = vunpack.c.l.b16 %v112
    %v441 = vunpack.c.h.b16 %v112
    %v442 = vunpack.c.l.b16 %v113
    %v443 = vunpack.c.h.b16 %v113
    %v444 = vunpack.c.l.b16 %v114
    %v445 = vunpack.c.h.b16 %v114
    %v446 = vunpack.c.l.b16 %v115
    %v447 = vunpack.c.h.b16 %v115
    %v448 = vunpack.c.l.b16 %v116
    %v449 = vunpack.c.h.b16 %v116
    %v450 = vunpack.c.l.b16 %v117
    %v451 = vunpack.c.h.b16 %v117
    %v452 = vunpack.c.l.b16 %v118
    %v453 = vunpack.c.h.b16 %v118
    %v454 = vunpack.c.l.b16 %v119
    %v455 = vunpack.c.h.b16 %v119
    %v456 = vunpack.c.l.b16 %v120
    %v457 = vunpack.c.h.b16 %v120
    %v458 = vunpack.c.l.b16 %v121
    %v459 = vunpack.c.h.b16 %v121
    %v460 = vunpack.c.l.b16 %v122
    %v461 = vunpack.c.h.b16 %v122
    %v462 = vunpack.c.l.b16 %v123
    %v463 = vunpack.c.h.b16 %v123
    %v464 = vunpack.c.l.b16 %v124
    %v465 = vunpack.c.h.b16 %v124
    %v466 = vunpack.c.l.b16 %v125
    %v467 = vunpack.c.h.b16 %v125
    %v468 = vunpack.c.l.b16 %v126
    %v469 = vunpack.c.h.b16 %v126
    %v470 = vunpack.c.l.b16 %v127
    %v471 = vunpack.c.h.b16 %v127
    %v472 = vunpack.c.l.b16 %v128
    %v473 = vunpack.c.h.b16 %v128
    %v474 = vunpack.c.l.b16 %v129
    %v475 = vunpack.c.h.b16 %v129
    %v476 = vunpack.c.l.b16 %v130
    %v477 = vunpack.c.h.b16 %v130
    %v478 = vunpack.c.l.b16 %v131
    %v479 = vunpack.c.h.b16 %v131
    %v480 = vunpack.c.l.b16 %v132
    %v481 = vunpack.c.h.b16 %v132
    %v482 = vunpack.c.l.b16 %v133
    %v483 = vunpack.c.h.b16 %v133
    %v484 = vunpack.c.l.b16 %v134
    %v485 = vunpack.c.h.b16 %v134
    %v486 = vunpack.c.l.b16 %v135
    %v487 = vunpack.c.h.b16 %v135
    %v488 = vunpack.c.l.b16 %v136
    %v489 = vunpack.c.h.b16 %v136
    %v490 = vunpack.c.l.b16 %v137
    %v491 = vunpack.c.h.b16 %v137
    %v492 = vunpack.c.l.b16 %v138
    %v493 = vunpack.c.h.b16 %v138
    %v494 = vunpack.c.l.b16 %v139
    %v495 = vunpack.c.h.b16 %v139
    %v496 = vunpack.c.l.b16 %v140
    %v497 = vunpack.c.h.b16 %v140
    %v498 = vunpack.c.l.b16 %v141
    %v499 = vunpack.c.h.b16 %v141
    %v500 = vunpack.c.l.b16 %v142
    %v501 = vunpack.c.h.b16 %v142
    %v502 = vunpack.c.l.b16 %v143
    %v503 = vunpack.c.h.b16 %v143
    %v504 = vunpack.c.l.b16 %v144
    %v505 = vunpack.c.h.b16 %v144
    %v506 = vunpack.c.l.b16 %v145
    %v507 = vunpack.c.h.b16 %v145
    %v508 = vunpack.c.l.b16 %v146
    %v509 = vunpack.c.h.b16 %v146
    %v510 = vunpack.c.l.b16 %v147
    %v511 = vunpack.c.h.b16 %v147
    %v512 = vunpack.c.l.b16 %v148
    %v513 = vunpack.c.h.b16 %v148
    %v514 = vunpack.c.l.b16 %v149
    %v515 = vunpack.c.h.b16 %v149
    %v516 = vunpack.c.l.b16 %v150
    %v517 = vunpack.c.h.b16 %v150
    %v518 = vunpack.c.l.b16 %v151
    %v519 = vunpack.c.h.b16 %v151
    %v520 = vunpack.c.l.b16 %v152
    %v521 = vunpack.c.h.b16 %v152
    %v522 = vunpack.c.l.b16 %v153
    %v523 = vunpack.c.h.b16 %v153
    %v524 = vunpack.c.l.b16 %v154
    %v525 = vunpack.c.h.b16 %v154
    %v526 = vunpack.c.l.b16 %v155
    %v527 = vunpack.c.h.b16 %v155
    %v528 = vunpack.c.l.b16 %v156
    %v529 = vunpack.c.h.b16 %v156
    %v530 = vunpack.c.l.b16 %v157
    %v531 = vunpack.c.h.b16 %v157
    %v532 = vunpack.c.l.b16 %v158
    %v533 = vunpack.c.h.b16 %v158
    %v534 = vunpack.c.l.b16 %v159
    %v535 = vunpack.c.h.b16 %v159
    %v536 = vunpack.c.l.b16 %v160
    %v537 = vunpack.c.h.b16 %v160
    %v538 = vunpack.c.l.b16 %v161
    %v539 = vunpack.c.h.b16 %v161
    %v540 = vunpack.c.l.b16 %v162
    %v541 = vunpack.c.h.b16 %v162
    %v542 = vunpack.c.l.b16 %v163
    %v543 = vunpack.c.h.b16 %v163
    %v544 = vpack.c.b16 %v350, %v348
    %v545 = vpack.c.b16 %v351, %v349
    %v546 = vpack.c.b16 %v354, %v352
    %v547 = vpack.c.b16 %v355, %v353
    %v548 = vpack.c.b16 %v358, %v356
    %v549 = vpack.c.b16 %v359, %v357
    %v550 = vpack.c.b16 %v362, %v360
    %v551 = vpack.c.b16 %v363, %v361
    %v552 = vpack.c.b16 %v366, %v364
    %v553 = vpack.c.b16 %v367, %v365
    %v554 = vpack.c.b16 %v370, %v368
    %v555 = vpack.c.b16 %v371, %v369
    %v556 = vpack.c.b16 %v374, %v372
    %v557 = vpack.c.b16 %v375, %v373
    %v558 = vpack.c.b16 %v378, %v376
    %v559 = vpack.c.b16 %v379, %v377
    %v560 = vpack.c.b16 %v382, %v380
    %v561 = vpack.c.b16 %v383, %v381
    %v562 = vpack.c.b16 %v386, %v384
    %v563 = vpack.c.b16 %v387, %v385
    %v564 = vpack.c.b16 %v390, %v388
    %v565 = vpack.c.b16 %v391, %v389
    %v566 = vpack.c.b16 %v394, %v392
    %v567 = vpack.c.b16 %v395, %v393
    %v568 = vpack.c.b16 %v398, %v396
    %v569 = vpack.c.b16 %v399, %v397
    %v570 = vpack.c.b16 %v402, %v400
    %v571 = vpack.c.b16 %v403, %v401
    %v572 = vpack.c.b16 %v406, %v404
    %v573 = vpack.c.b16 %v407, %v405
    %v574 = vpack.c.b16 %v410, %v408
    %v575 = vpack.c.b16 %v411, %v409
    %v576 = vpack.c.b16 %v414, %v412
    %v577 = vpack.c.b16 %v415, %v413
    %v578 = vpack.c.b16 %v418, %v416
    %v579 = vpack.c.b16 %v419, %v417
    %v580 = vpack.c.b16 %v422, %v420
    %v581 = vpack.c.b16 %v423, %v421
    %v582 = vpack.c.b16 %v426, %v424
    %v583 = vpack.c.b16 %v427, %v425
    %v584 = vpack.c.b16 %v430, %v428
    %v585 = vpack.c.b16 %v431, %v429
    %v586 = vpack.c.b16 %v434, %v432
    %v587 = vpack.c.b16 %v435, %v433
    %v588 = vpack.c.b16 %v438, %v436
    %v589 = vpack.c.b16 %v439, %v437
    %v590 = vpack.c.b16 %v442, %v440
    %v591 = vpack.c.b16 %v443, %v441
    %v592 = vpack.c.b16 %v446, %v444
    %v593 = vpack.c.b16 %v447, %v445
    %v594 = vpack.c.b16 %v450, %v448
    %v595 = vpack.c.b16 %v451, %v449
    %v596 = vpack.c.b16 %v454, %v452
    %v597 = vpack.c.b16 %v455, %v453
    %v598 = vpack.c.b16 %v458, %v456
    %v599 = vpack.c.b16 %v459, %v457
    %v600 = vpack.c.b16 %v462, %v460
    %v601 = vpack.c.b16 %v463, %v461
    %v602 = vpack.c.b16 %v466, %v464
    %v603 = vpack.c.b16 %v467, %v465
    %v604 = vpack.c.b16 %v470, %v468
    %v605 = vpack.c.b16 %v471, %v469
    %v606 = vpack.c.b16 %v474, %v472
    %v607 = vpack.c.b16 %v475, %v473
    %v608 = vpack.c.b16 %v478, %v476
    %v609 = vpack.c.b16 %v479, %v477
    %v610 = vpack.c.b16 %v482, %v480
    %v611 = vpack.c.b16 %v483, %v481
    %v612 = vpack.c.b16 %v486, %v484
    %v613 = vpack.c.b16 %v487, %v485
    %v614 = vpack.c.b16 %v490, %v488
    %v615 = vpack.c.b16 %v491, %v489
    %v616 = vpack.c.b16 %v494, %v492
    %v617 = vpack.c.b16 %v495, %v493
    %v618 = vpack.c.b16 %v498, %v496
    %v619 = vpack.c.b16 %v499, %v497
    %v620 = vpack.c.b16 %v502, %v500
    %v621 = vpack.c.b16 %v503, %v501
    %v622 = vpack.c.b16 %v506, %v504
    %v623 = vpack.c.b16 %v507, %v505
    %v624 = vpack.c.b16 %v510, %v508
    %v625 = vpack.c.b16 %v511, %v509
    %v626 = vpack.c.b16 %v514, %v512
    %v627 = vpack.c.b16 %v515, %v513
    %v628 = vpack.c.b16 %v518, %v516
    %v629 = vpack.c.b16 %v519, %v517
    %v630 = vpack.c.b16 %v522, %v520
    %v631 = vpack.c.b16 %v523, %v521
    %v632 = vpack.c.b16 %v526, %v524
    %v633 = vpack.c.b16 %v527, %v525
    %v634 = vpack.c.b16 %v530, %v528
    %v635 = vpack.c.b16 %v531, %v529
    %v636 = vpack.c.b16 %v534, %v532
    %v637 = vpack.c.b16 %v535, %v533
    %v638 = vpack.c.b16 %v538, %v536
    %v639 = vpack.c.b16 %v539, %v537
    %v640 = vpack.c.b16 %v542, %v540
    %v641 = vpack.c.b16 %v543, %v541
    %vm740 = vcmask 130048
    %v742 = vsel %vm740, %v243, 0
    %744 = vmatprep.subr.bf16.mxu0 %v559
    %745 = vmatpush1.bf16.msra.mxu0 %v558
    %746 = vmatprep.subr.bf16.mxu0 %v557
    %747 = vmatpush1.bf16.msra.mxu0 %v556
    %748 = vmatprep.subr.bf16.mxu0 %v555
    %749 = vmatpush1.bf16.msra.mxu0 %v554
    %750 = vmatprep.subr.bf16.mxu0 %v553
    %751 = vmatpush1.bf16.msra.mxu0 %v552
    %752 = vmatprep.subr.bf16.mxu0 %v551
    %753 = vmatpush1.bf16.msra.mxu0 %v550
    %754 = vmatprep.subr.bf16.mxu0 %v549
    %755 = vmatpush1.bf16.msra.mxu0 %v548
    %756 = vmatprep.subr.bf16.mxu0 %v547
    %757 = vmatpush1.bf16.msra.mxu0 %v546
    %758 = vmatprep.subr.bf16.mxu0 %v545
    %759 = vmatpush1.bf16.msra.mxu0 %v544
    %760 = vmatprep.subr.bf16.mxu0 %v575
    %761 = vmatpush2.bf16.msra.mxu0 %v574
    %762 = vmatprep.subr.bf16.mxu0 %v573
    %763 = vmatpush2.bf16.msra.mxu0 %v572
    %764 = vmatprep.subr.bf16.mxu0 %v571
    %765 = vmatpush2.bf16.msra.mxu0 %v570
    %766 = vmatprep.subr.bf16.mxu0 %v569
    %767 = vmatpush2.bf16.msra.mxu0 %v568
    %768 = vmatprep.subr.bf16.mxu0 %v567
    %769 = vmatpush2.bf16.msra.mxu0 %v566
    %770 = vmatprep.subr.bf16.mxu0 %v565
    %771 = vmatpush2.bf16.msra.mxu0 %v564
    %772 = vmatprep.subr.bf16.mxu0 %v563
    %773 = vmatpush2.bf16.msra.mxu0 %v562
    %774 = vmatprep.subr.bf16.mxu0 %v561
    %775 = vmatpush2.bf16.msra.mxu0 %v560
    %776 = vmatprep.mubr.bf16.mxu0 %v238
    %777 = vmatmul.mubr.bf16.gmra.mxu0 %v237
    %v778 = vpop.f32.mrf.mxu0
    %v779 = vadd.f32 %v220, %v778
    %v780 = vpop.f32.mrf.mxu0
    %v781 = vadd.f32 %v222, %v780
    %v782 = vpop.f32.mrf.mxu0
    %v783 = vpop.f32.mrf.mxu0
    %784 = vdwg.mxu0
    %785 = vmatprep.subr.bf16.mxu0 %v591
    %786 = vmatpush1.bf16.msra.mxu0 %v590
    %787 = vmatprep.subr.bf16.mxu0 %v589
    %788 = vmatpush1.bf16.msra.mxu0 %v588
    %789 = vmatprep.subr.bf16.mxu0 %v587
    %790 = vmatpush1.bf16.msra.mxu0 %v586
    %791 = vmatprep.subr.bf16.mxu0 %v585
    %792 = vmatpush1.bf16.msra.mxu0 %v584
    %793 = vmatprep.subr.bf16.mxu0 %v583
    %794 = vmatpush1.bf16.msra.mxu0 %v582
    %795 = vmatprep.subr.bf16.mxu0 %v581
    %796 = vmatpush1.bf16.msra.mxu0 %v580
    %797 = vmatprep.subr.bf16.mxu0 %v579
    %798 = vmatpush1.bf16.msra.mxu0 %v578
    %799 = vmatprep.subr.bf16.mxu0 %v577
    %800 = vmatpush1.bf16.msra.mxu0 %v576
    %801 = vmatprep.subr.bf16.mxu0 %v607
    %802 = vmatpush2.bf16.msra.mxu0 %v606
    %803 = vmatprep.subr.bf16.mxu0 %v605
    %804 = vmatpush2.bf16.msra.mxu0 %v604
    %805 = vmatprep.subr.bf16.mxu0 %v603
    %806 = vmatpush2.bf16.msra.mxu0 %v602
    %807 = vmatprep.subr.bf16.mxu0 %v601
    %808 = vmatpush2.bf16.msra.mxu0 %v600
    %809 = vmatprep.subr.bf16.mxu0 %v599
    %810 = vmatpush2.bf16.msra.mxu0 %v598
    %811 = vmatprep.subr.bf16.mxu0 %v597
    %812 = vmatpush2.bf16.msra.mxu0 %v596
    %813 = vmatprep.subr.bf16.mxu0 %v595
    %814 = vmatpush2.bf16.msra.mxu0 %v594
    %815 = vmatprep.subr.bf16.mxu0 %v593
    %816 = vmatpush2.bf16.msra.mxu0 %v592
    %817 = vmatprep.mubr.bf16.mxu0 %v240
    %818 = vmatmul.mubr.bf16.gmra.mxu0 %v239
    %v819 = vpop.f32.mrf.mxu0
    %v820 = vadd.f32 %v779, %v819
    %v821 = vpop.f32.mrf.mxu0
    %v822 = vadd.f32 %v781, %v821
    %v823 = vpop.f32.mrf.mxu0
    %v824 = vpop.f32.mrf.mxu0
    %825 = vdwg.mxu0
    %826 = vmatprep.subr.bf16.mxu0 %v623
    %827 = vmatpush1.bf16.msra.mxu0 %v622
    %828 = vmatprep.subr.bf16.mxu0 %v621
    %829 = vmatpush1.bf16.msra.mxu0 %v620
    %830 = vmatprep.subr.bf16.mxu0 %v619
    %831 = vmatpush1.bf16.msra.mxu0 %v618
    %832 = vmatprep.subr.bf16.mxu0 %v617
    %833 = vmatpush1.bf16.msra.mxu0 %v616
    %834 = vmatprep.subr.bf16.mxu0 %v615
    %835 = vmatpush1.bf16.msra.mxu0 %v614
    %836 = vmatprep.subr.bf16.mxu0 %v613
    %837 = vmatpush1.bf16.msra.mxu0 %v612
    %838 = vmatprep.subr.bf16.mxu0 %v611
    %839 = vmatpush1.bf16.msra.mxu0 %v610
    %840 = vmatprep.subr.bf16.mxu0 %v609
    %841 = vmatpush1.bf16.msra.mxu0 %v608
    %842 = vmatprep.subr.bf16.mxu0 %v639
    %843 = vmatpush2.bf16.msra.mxu0 %v638
    %844 = vmatprep.subr.bf16.mxu0 %v637
    %845 = vmatpush2.bf16.msra.mxu0 %v636
    %846 = vmatprep.subr.bf16.mxu0 %v635
    %847 = vmatpush2.bf16.msra.mxu0 %v634
    %848 = vmatprep.subr.bf16.mxu0 %v633
    %849 = vmatpush2.bf16.msra.mxu0 %v632
    %850 = vmatprep.subr.bf16.mxu0 %v631
    %851 = vmatpush2.bf16.msra.mxu0 %v630
    %852 = vmatprep.subr.bf16.mxu0 %v629
    %853 = vmatpush2.bf16.msra.mxu0 %v628
    %854 = vmatprep.subr.bf16.mxu0 %v627
    %855 = vmatpush2.bf16.msra.mxu0 %v626
    %856 = vmatprep.subr.bf16.mxu0 %v625
    %857 = vmatpush2.bf16.msra.mxu0 %v624
    %858 = vmatprep.mubr.bf16.mxu0 %v242
    %859 = vmatmul.mubr.bf16.gmra.mxu0 %v241
    %v860 = vpop.f32.mrf.mxu0
    %v861 = vadd.f32 %v820, %v860
    %v862 = vpop.f32.mrf.mxu0
    %v863 = vadd.f32 %v822, %v862
    %v864 = vpop.f32.mrf.mxu0
    %v865 = vpop.f32.mrf.mxu0
    %866 = vdwg.mxu0
    %867 = vmatprep.subr.bf16.mxu0 0
    %868 = vmatpush1.bf16.msra.mxu0 0
    %869 = vmatprep.subr.bf16.mxu0 0
    %870 = vmatpush1.bf16.msra.mxu0 0
    %871 = vmatprep.subr.bf16.mxu0 0
    %872 = vmatpush1.bf16.msra.mxu0 0
    %873 = vmatprep.subr.bf16.mxu0 0
    %874 = vmatpush1.bf16.msra.mxu0 0
    %875 = vmatprep.subr.bf16.mxu0 0
    %876 = vmatpush1.bf16.msra.mxu0 0
    %877 = vmatprep.subr.bf16.mxu0 0
    %878 = vmatpush1.bf16.msra.mxu0 0
    %879 = vmatprep.subr.bf16.mxu0 0
    %880 = vmatpush1.bf16.msra.mxu0 0
    %881 = vmatprep.subr.bf16.mxu0 %v641
    %882 = vmatpush1.bf16.msra.mxu0 %v640
    %883 = vmatprep.subr.bf16.mxu0 0
    %884 = vmatpush2.bf16.msra.mxu0 0
    %885 = vmatprep.subr.bf16.mxu0 0
    %886 = vmatpush2.bf16.msra.mxu0 0
    %887 = vmatprep.subr.bf16.mxu0 0
    %888 = vmatpush2.bf16.msra.mxu0 0
    %889 = vmatprep.subr.bf16.mxu0 0
    %890 = vmatpush2.bf16.msra.mxu0 0
    %891 = vmatprep.subr.bf16.mxu0 0
    %892 = vmatpush2.bf16.msra.mxu0 0
    %893 = vmatprep.subr.bf16.mxu0 0
    %894 = vmatpush2.bf16.msra.mxu0 0
    %895 = vmatprep.subr.bf16.mxu0 0
    %896 = vmatpush2.bf16.msra.mxu0 0
    %897 = vmatprep.subr.bf16.mxu0 0
    %898 = vmatpush2.bf16.msra.mxu0 0
    %899 = vmatprep.mubr.bf16.mxu0 0
    %900 = vmatmul.mubr.bf16.gmra.mxu0 %v742
    %v901 = vpop.f32.mrf.mxu0
    %v902 = vadd.f32 %v861, %v901
    %v903 = vpop.f32.mrf.mxu0
    %v904 = vadd.f32 %v863, %v903
    %v905 = vpop.f32.mrf.mxu0
    %v906 = vpop.f32.mrf.mxu0
    %907 = vdwg.mxu0
    %v908 = vld [vmem:[%s5] sm:$0x3]
    %v910 = vlaneseq
    %v911 = vshrl.u32 %v910, 7
    %v912 = vsub.s32 0, %v911
    %v913 = vrot.slane %v908, %v912
    %v914 = vlaneseq
    %v915 = vshrl.u32 %v914, 7
    %v916 = vsub.s32 1, %v915
    %v917 = vrot.slane %v908, %v916
    %v920 = vadd.f32 %v902, %v913
    %v921 = vadd.f32 %v904, %v917
    %v922 = vmax.f32 %v920, 0.0
    %v923 = vmax.f32 %v921, 0.0
    %v924 = vpack.c.bf16 %v922, %v922
    %v925 = vpack.c.bf16 %v923, %v923
    %v926 = vld [vmem:[%s6] sm:$0xf]
    %v927 = vld [vmem:[%s6 + $0x4] sm:$0xf]
    %v928 = vld [vmem:[%s6 + $0x8] sm:$0xf]
    %v929 = vld [vmem:[%s6 + $0xc] sm:$0xf]
    %v930 = vld [vmem:[%s6 + $0x10] sm:$0xf]
    %v931 = vld [vmem:[%s6 + $0x14] sm:$0xf]
    %v932 = vld [vmem:[%s6 + $0x18] sm:$0xf]
    %v933 = vld [vmem:[%s6 + $0x1c] sm:$0xf]
    %v934 = vld [vmem:[%s6 + $0x20] sm:$0xf]
    %v935 = vld [vmem:[%s6 + $0x24] sm:$0xf]
    %v936 = vld [vmem:[%s6 + $0x28] sm:$0xf]
    %v937 = vld [vmem:[%s6 + $0x2c] sm:$0xf]
    %v938 = vld [vmem:[%s6 + $0x30] sm:$0xf]
    %v939 = vld [vmem:[%s6 + $0x34] sm:$0xf]
    %v940 = vld [vmem:[%s6 + $0x38] sm:$0xf]
    %v941 = vld [vmem:[%s6 + $0x3c] sm:$0xf]
    %v942 = vld [vmem:[%s6 + $0x40] sm:$0xf]
    %v943 = vld [vmem:[%s6 + $0x44] sm:$0xf]
    %v944 = vld [vmem:[%s6 + $0x48] sm:$0xf]
    %v945 = vld [vmem:[%s6 + $0x4c] sm:$0xf]
    %v946 = vld [vmem:[%s6 + $0x50] sm:$0xf]
    %v947 = vld [vmem:[%s6 + $0x54] sm:$0xf]
    %v948 = vld [vmem:[%s6 + $0x58] sm:$0xf]
    %v949 = vld [vmem:[%s6 + $0x5c] sm:$0xf]
    %v950 = vld [vmem:[%s6 + $0x60] sm:$0xf]
    %v951 = vld [vmem:[%s6 + $0x64] sm:$0xf]
    %v952 = vld [vmem:[%s6 + $0x68] sm:$0xf]
    %v953 = vld [vmem:[%s6 + $0x6c] sm:$0xf]
    %v954 = vld [vmem:[%s6 + $0x70] sm:$0xf]
    %v955 = vld [vmem:[%s6 + $0x74] sm:$0xf]
    %v956 = vld [vmem:[%s6 + $0x78] sm:$0xf]
    %v957 = vld [vmem:[%s6 + $0x7c] sm:$0xf]
    %v958 = vld [vmem:[%s7] sm:$0x1]
    %v960 = vlaneseq
    %v961 = vshrl.u32 %v960, 7
    %v962 = vsub.s32 0, %v961
    %v963 = vrot.slane %v958, %v962
    %v997 = vunpack.c.l.b16 %v926
    %v998 = vunpack.c.l.b16 %v927
    %v999 = vunpack.c.l.b16 %v928
    %v1000 = vunpack.c.l.b16 %v929
    %v1001 = vunpack.c.l.b16 %v930
    %v1002 = vunpack.c.l.b16 %v931
    %v1003 = vunpack.c.l.b16 %v932
    %v1004 = vunpack.c.l.b16 %v933
    %v1005 = vunpack.c.l.b16 %v934
    %v1006 = vunpack.c.l.b16 %v935
    %v1007 = vunpack.c.l.b16 %v936
    %v1008 = vunpack.c.l.b16 %v937
    %v1009 = vunpack.c.l.b16 %v938
    %v1010 = vunpack.c.l.b16 %v939
    %v1011 = vunpack.c.l.b16 %v940
    %v1012 = vunpack.c.l.b16 %v941
    %v1013 = vunpack.c.l.b16 %v942
    %v1014 = vunpack.c.l.b16 %v943
    %v1015 = vunpack.c.l.b16 %v944
    %v1016 = vunpack.c.l.b16 %v945
    %v1017 = vunpack.c.l.b16 %v946
    %v1018 = vunpack.c.l.b16 %v947
    %v1019 = vunpack.c.l.b16 %v948
    %v1020 = vunpack.c.l.b16 %v949
    %v1021 = vunpack.c.l.b16 %v950
    %v1022 = vunpack.c.l.b16 %v951
    %v1023 = vunpack.c.l.b16 %v952
    %v1024 = vunpack.c.l.b16 %v953
    %v1025 = vunpack.c.l.b16 %v954
    %v1026 = vunpack.c.l.b16 %v955
    %v1027 = vunpack.c.l.b16 %v956
    %v1028 = vunpack.c.l.b16 %v957
    %v1029 = vpack.c.b16 %v998, %v997
    %v1030 = vpack.c.b16 %v1000, %v999
    %v1031 = vpack.c.b16 %v1002, %v1001
    %v1032 = vpack.c.b16 %v1004, %v1003
    %v1033 = vpack.c.b16 %v1006, %v1005
    %v1034 = vpack.c.b16 %v1008, %v1007
    %v1035 = vpack.c.b16 %v1010, %v1009
    %v1036 = vpack.c.b16 %v1012, %v1011
    %v1037 = vpack.c.b16 %v1014, %v1013
    %v1038 = vpack.c.b16 %v1016, %v1015
    %v1039 = vpack.c.b16 %v1018, %v1017
    %v1040 = vpack.c.b16 %v1020, %v1019
    %v1041 = vpack.c.b16 %v1022, %v1021
    %v1042 = vpack.c.b16 %v1024, %v1023
    %v1043 = vpack.c.b16 %v1026, %v1025
    %v1044 = vpack.c.b16 %v1028, %v1027
    %1061 = vmatprep.subr.bf16.mxu0 0
    %1062 = vmatpush1.bf16.msra.mxu0 %v1036
    %1063 = vmatprep.subr.bf16.mxu0 0
    %1064 = vmatpush1.bf16.msra.mxu0 %v1035
    %1065 = vmatprep.subr.bf16.mxu0 0
    %1066 = vmatpush1.bf16.msra.mxu0 %v1034
    %1067 = vmatprep.subr.bf16.mxu0 0
    %1068 = vmatpush1.bf16.msra.mxu0 %v1033
    %1069 = vmatprep.subr.bf16.mxu0 0
    %1070 = vmatpush1.bf16.msra.mxu0 %v1032
    %1071 = vmatprep.subr.bf16.mxu0 0
    %1072 = vmatpush1.bf16.msra.mxu0 %v1031
    %1073 = vmatprep.subr.bf16.mxu0 0
    %1074 = vmatpush1.bf16.msra.mxu0 %v1030
    %1075 = vmatprep.subr.bf16.mxu0 0
    %1076 = vmatpush1.bf16.msra.mxu0 %v1029
    %1077 = vmatprep.subr.bf16.mxu0 0
    %1078 = vmatpush2.bf16.msra.mxu0 %v1044
    %1079 = vmatprep.subr.bf16.mxu0 0
    %1080 = vmatpush2.bf16.msra.mxu0 %v1043
    %1081 = vmatprep.subr.bf16.mxu0 0
    %1082 = vmatpush2.bf16.msra.mxu0 %v1042
    %1083 = vmatprep.subr.bf16.mxu0 0
    %1084 = vmatpush2.bf16.msra.mxu0 %v1041
    %1085 = vmatprep.subr.bf16.mxu0 0
    %1086 = vmatpush2.bf16.msra.mxu0 %v1040
    %1087 = vmatprep.subr.bf16.mxu0 0
    %1088 = vmatpush2.bf16.msra.mxu0 %v1039
    %1089 = vmatprep.subr.bf16.mxu0 0
    %1090 = vmatpush2.bf16.msra.mxu0 %v1038
    %1091 = vmatprep.subr.bf16.mxu0 0
    %1092 = vmatpush2.bf16.msra.mxu0 %v1037
    %1093 = vmatprep.mubr.bf16.mxu0 %v925
    %1094 = vmatmul.mubr.bf16.gmra.mxu0 %v924
    %v1095 = vpop.f32.mrf.mxu0
    %v1096 = vadd.f32 %v963, %v1095
    %v1097 = vpop.f32.mrf.mxu0
    %v1098 = vpop.f32.mrf.mxu0
    %v1099 = vpop.f32.mrf.mxu0
    %1100 = vdwg.mxu0
    %v1101 = vmax.f32 %v1096, 0.0
    %v1102 = vpack.c.bf16 %v1101, %v1101
    %v1103 = vld [vmem:[%s8] sm:$0xf]
    %v1104 = vld [vmem:[%s8 + $0x4] sm:$0xf]
    %v1105 = vld [vmem:[%s8 + $0x8] sm:$0xf]
    %v1106 = vld [vmem:[%s8 + $0xc] sm:$0xf]
    %v1107 = vld [vmem:[%s8 + $0x10] sm:$0xf]
    %v1108 = vld [vmem:[%s8 + $0x14] sm:$0xf]
    %v1109 = vld [vmem:[%s8 + $0x18] sm:$0xf]
    %v1110 = vld [vmem:[%s8 + $0x1c] sm:$0xf]
    %v1111 = vld [vmem:[%s8 + $0x20] sm:$0xf]
    %v1112 = vld [vmem:[%s8 + $0x24] sm:$0xf]
    %v1113 = vld [vmem:[%s8 + $0x28] sm:$0xf]
    %v1114 = vld [vmem:[%s8 + $0x2c] sm:$0xf]
    %v1115 = vld [vmem:[%s8 + $0x30] sm:$0xf]
    %v1116 = vld [vmem:[%s8 + $0x34] sm:$0xf]
    %v1117 = vld [vmem:[%s8 + $0x38] sm:$0xf]
    %v1118 = vld [vmem:[%s8 + $0x3c] sm:$0xf]
    %v1119 = vld [vmem:[%s9] sm:$0x1]
    %v1121 = vlaneseq
    %v1122 = vshrl.u32 %v1121, 7
    %v1123 = vsub.s32 0, %v1122
    %v1124 = vrot.slane %v1119, %v1123
    %v1142 = vunpack.c.l.b16 %v1103
    %v1143 = vunpack.c.l.b16 %v1104
    %v1144 = vunpack.c.l.b16 %v1105
    %v1145 = vunpack.c.l.b16 %v1106
    %v1146 = vunpack.c.l.b16 %v1107
    %v1147 = vunpack.c.l.b16 %v1108
    %v1148 = vunpack.c.l.b16 %v1109
    %v1149 = vunpack.c.l.b16 %v1110
    %v1150 = vunpack.c.l.b16 %v1111
    %v1151 = vunpack.c.l.b16 %v1112
    %v1152 = vunpack.c.l.b16 %v1113
    %v1153 = vunpack.c.l.b16 %v1114
    %v1154 = vunpack.c.l.b16 %v1115
    %v1155 = vunpack.c.l.b16 %v1116
    %v1156 = vunpack.c.l.b16 %v1117
    %v1157 = vunpack.c.l.b16 %v1118
    %v1158 = vpack.c.b16 %v1143, %v1142
    %v1159 = vpack.c.b16 %v1145, %v1144
    %v1160 = vpack.c.b16 %v1147, %v1146
    %v1161 = vpack.c.b16 %v1149, %v1148
    %v1162 = vpack.c.b16 %v1151, %v1150
    %v1163 = vpack.c.b16 %v1153, %v1152
    %v1164 = vpack.c.b16 %v1155, %v1154
    %v1165 = vpack.c.b16 %v1157, %v1156
    %1174 = vmatprep.subr.bf16.mxu0 0
    %1175 = vmatpush1.bf16.msra.mxu0 %v1165
    %1176 = vmatprep.subr.bf16.mxu0 0
    %1177 = vmatpush1.bf16.msra.mxu0 %v1164
    %1178 = vmatprep.subr.bf16.mxu0 0
    %1179 = vmatpush1.bf16.msra.mxu0 %v1163
    %1180 = vmatprep.subr.bf16.mxu0 0
    %1181 = vmatpush1.bf16.msra.mxu0 %v1162
    %1182 = vmatprep.subr.bf16.mxu0 0
    %1183 = vmatpush1.bf16.msra.mxu0 %v1161
    %1184 = vmatprep.subr.bf16.mxu0 0
    %1185 = vmatpush1.bf16.msra.mxu0 %v1160
    %1186 = vmatprep.subr.bf16.mxu0 0
    %1187 = vmatpush1.bf16.msra.mxu0 %v1159
    %1188 = vmatprep.subr.bf16.mxu0 0
    %1189 = vmatpush1.bf16.msra.mxu0 %v1158
    %1190 = vmatprep.subr.bf16.mxu0 0
    %1191 = vmatpush2.bf16.msra.mxu0 0
    %1192 = vmatprep.subr.bf16.mxu0 0
    %1193 = vmatpush2.bf16.msra.mxu0 0
    %1194 = vmatprep.subr.bf16.mxu0 0
    %1195 = vmatpush2.bf16.msra.mxu0 0
    %1196 = vmatprep.subr.bf16.mxu0 0
    %1197 = vmatpush2.bf16.msra.mxu0 0
    %1198 = vmatprep.subr.bf16.mxu0 0
    %1199 = vmatpush2.bf16.msra.mxu0 0
    %1200 = vmatprep.subr.bf16.mxu0 0
    %1201 = vmatpush2.bf16.msra.mxu0 0
    %1202 = vmatprep.subr.bf16.mxu0 0
    %1203 = vmatpush2.bf16.msra.mxu0 0
    %1204 = vmatprep.subr.bf16.mxu0 0
    %1205 = vmatpush2.bf16.msra.mxu0 0
    %1206 = vmatprep.mubr.bf16.mxu0 0
    %1207 = vmatmul.mubr.bf16.gmra.mxu0 %v1102
    %v1208 = vpop.f32.mrf.mxu0
    %v1209 = vadd.f32 %v1124, %v1208
    %v1210 = vpop.f32.mrf.mxu0
    %v1211 = vpop.f32.mrf.mxu0
    %v1212 = vpop.f32.mrf.mxu0
    %1213 = vdwg.mxu0
    %1214 = vst [vmem:[#allocation4] sm:$0xff] %v1209
    %v1215 = vmul.f32 %v1209, 0.5
    %v1216 = vmul.f32 %v1215, 1.442695
    %v1217 = vpow.pop %v1216
    %v1218 = vld [vmem:[%s2] sm:$0xf]
    %v1219 = vunpack.c.l.bf16 %v1218
    %1221 = vrot.lane.b32.xlu0 %v1217, 96
    %v1222 = vpop.permute.xlu0 %1221
    %v1224 = vmul.f32 %v1219, %v1222
    %v1225 = vadd.f32 %v1224, %v1209
    %v1226 = vpack.c.bf16 %v1225, %v1225
    %v1227 = vld [vmem:[%s10] sm:$0xf]
    %v1228 = vld [vmem:[%s10 + $0x4] sm:$0xf]
    %v1229 = vld [vmem:[%s10 + $0x8] sm:$0xf]
    %v1230 = vld [vmem:[%s10 + $0xc] sm:$0xf]
    %v1231 = vld [vmem:[%s11] sm:$0xf]
    %v1232 = vld [vmem:[%s11 + $0x4] sm:$0x1]
    %v1235 = vunpack.c.l.b16 %v1231
    %v1236 = vunpack.c.l.b16 %v1232
    %v1237 = vpack.c.b16 %v1236, %v1235
    %v1239 = vsel %vm178, %v1237, 0
    %1241 = vmatprep.subr.bf16.mxu0 0
    %1242 = vmatpush1.bf16.msra.mxu0 0
    %1243 = vmatprep.subr.bf16.mxu0 0
    %1244 = vmatpush1.bf16.msra.mxu0 0
    %1245 = vmatprep.subr.bf16.mxu0 0
    %1246 = vmatpush1.bf16.msra.mxu0 0
    %1247 = vmatprep.subr.bf16.mxu0 0
    %1248 = vmatpush1.bf16.msra.mxu0 0
    %1249 = vmatprep.subr.bf16.mxu0 0
    %1250 = vmatpush1.bf16.msra.mxu0 0
    %1251 = vmatprep.subr.bf16.mxu0 0
    %1252 = vmatpush1.bf16.msra.mxu0 0
    %1253 = vmatprep.subr.bf16.mxu0 0
    %1254 = vmatpush1.bf16.msra.mxu0 0
    %1255 = vmatprep.subr.bf16.mxu0 0
    %1256 = vmatpush1.bf16.msra.mxu0 %v1239
    %1257 = vmatprep.subr.bf16.mxu0 0
    %1258 = vmatpush2.bf16.msra.mxu0 0
    %1259 = vmatprep.subr.bf16.mxu0 0
    %1260 = vmatpush2.bf16.msra.mxu0 0
    %1261 = vmatprep.subr.bf16.mxu0 0
    %1262 = vmatpush2.bf16.msra.mxu0 0
    %1263 = vmatprep.subr.bf16.mxu0 0
    %1264 = vmatpush2.bf16.msra.mxu0 0
    %1265 = vmatprep.subr.bf16.mxu0 0
    %1266 = vmatpush2.bf16.msra.mxu0 0
    %1267 = vmatprep.subr.bf16.mxu0 0
    %1268 = vmatpush2.bf16.msra.mxu0 0
    %1269 = vmatprep.subr.bf16.mxu0 0
    %1270 = vmatpush2.bf16.msra.mxu0 0
    %1271 = vmatprep.subr.bf16.mxu0 0
    %1272 = vmatpush2.bf16.msra.mxu0 0
    %1273 = vmatprep.mubr.bf16.mxu0 0
    %1274 = vmatmul.mubr.bf16.gmra.mxu0 %v176
    %v1275 = vpop.f32.mrf.mxu0
    %v1276 = vadd.f32 0.0, %v1275
    %v1277 = vpop.f32.mrf.mxu0
    %v1278 = vpop.f32.mrf.mxu0
    %v1279 = vpop.f32.mrf.mxu0
    %1280 = vdwg.mxu0
    %v1285 = vunpack.c.l.b16 %v1227
    %v1286 = vunpack.c.l.b16 %v1228
    %v1287 = vunpack.c.l.b16 %v1229
    %v1288 = vunpack.c.l.b16 %v1230
    %v1289 = vpack.c.b16 %v1286, %v1285
    %v1290 = vpack.c.b16 %v1288, %v1287
    %vm1293 = vcmask 261120
    %v1295 = vsel %vm1293, %v1226, 0
    %1297 = vmatprep.subr.bf16.mxu0 0
    %1298 = vmatpush1.bf16.msra.mxu0 0
    %1299 = vmatprep.subr.bf16.mxu0 0
    %1300 = vmatpush1.bf16.msra.mxu0 0
    %1301 = vmatprep.subr.bf16.mxu0 0
    %1302 = vmatpush1.bf16.msra.mxu0 0
    %1303 = vmatprep.subr.bf16.mxu0 0
    %1304 = vmatpush1.bf16.msra.mxu0 0
    %1305 = vmatprep.subr.bf16.mxu0 0
    %1306 = vmatpush1.bf16.msra.mxu0 0
    %1307 = vmatprep.subr.bf16.mxu0 0
    %1308 = vmatpush1.bf16.msra.mxu0 0
    %1309 = vmatprep.subr.bf16.mxu0 0
    %1310 = vmatpush1.bf16.msra.mxu0 %v1290
    %1311 = vmatprep.subr.bf16.mxu0 0
    %1312 = vmatpush1.bf16.msra.mxu0 %v1289
    %1313 = vmatprep.subr.bf16.mxu0 0
    %1314 = vmatpush2.bf16.msra.mxu0 0
    %1315 = vmatprep.subr.bf16.mxu0 0
    %1316 = vmatpush2.bf16.msra.mxu0 0
    %1317 = vmatprep.subr.bf16.mxu0 0
    %1318 = vmatpush2.bf16.msra.mxu0 0
    %1319 = vmatprep.subr.bf16.mxu0 0
    %1320 = vmatpush2.bf16.msra.mxu0 0
    %1321 = vmatprep.subr.bf16.mxu0 0
    %1322 = vmatpush2.bf16.msra.mxu0 0
    %1323 = vmatprep.subr.bf16.mxu0 0
    %1324 = vmatpush2.bf16.msra.mxu0 0
    %1325 = vmatprep.subr.bf16.mxu0 0
    %1326 = vmatpush2.bf16.msra.mxu0 0
    %1327 = vmatprep.subr.bf16.mxu0 0
    %1328 = vmatpush2.bf16.msra.mxu0 0
    %1329 = vmatprep.mubr.bf16.mxu0 0
    %1330 = vmatmul.mubr.bf16.gmra.mxu0 %v1295
    %v1331 = vpop.f32.mrf.mxu0
    %v1332 = vadd.f32 %v1276, %v1331
    %v1333 = vpop.f32.mrf.mxu0
    %v1334 = vpop.f32.mrf.mxu0
    %v1335 = vpop.f32.mrf.mxu0
    %1336 = vdwg.mxu0
    %v1337 = vld [vmem:[%s12] sm:$0x1]
    %v1339 = vlaneseq
    %v1340 = vshrl.u32 %v1339, 7
    %v1341 = vsub.s32 0, %v1340
    %v1342 = vrot.slane %v1337, %v1341
    %v1344 = vadd.f32 %v1332, %v1342
    %v1345 = vmax.f32 %v1344, 0.0
    %v1346 = vpack.c.bf16 %v1345, %v1345
    %v1347 = vld [vmem:[%s13] sm:$0xff]
    %v1348 = vld [vmem:[%s13 + $0x8] sm:$0xff]
    %v1349 = vld [vmem:[%s13 + $0x10] sm:$0xff]
    %v1350 = vld [vmem:[%s13 + $0x18] sm:$0xff]
    %v1351 = vld [vmem:[%s13 + $0x20] sm:$0xff]
    %v1352 = vld [vmem:[%s13 + $0x28] sm:$0xff]
    %v1353 = vld [vmem:[%s13 + $0x30] sm:$0xff]
    %v1354 = vld [vmem:[%s13 + $0x38] sm:$0xff]
    %v1355 = vld [vmem:[%s13 + $0x40] sm:$0xff]
    %v1356 = vld [vmem:[%s13 + $0x48] sm:$0xff]
    %v1357 = vld [vmem:[%s13 + $0x50] sm:$0xff]
    %v1358 = vld [vmem:[%s13 + $0x58] sm:$0xff]
    %v1359 = vld [vmem:[%s13 + $0x60] sm:$0xff]
    %v1360 = vld [vmem:[%s13 + $0x68] sm:$0xff]
    %v1361 = vld [vmem:[%s13 + $0x70] sm:$0xff]
    %v1362 = vld [vmem:[%s13 + $0x78] sm:$0xff]
    %v1363 = vld [vmem:[%s14] sm:$0x3]
    %v1365 = vlaneseq
    %v1366 = vshrl.u32 %v1365, 7
    %v1367 = vsub.s32 0, %v1366
    %v1368 = vrot.slane %v1363, %v1367
    %v1369 = vlaneseq
    %v1370 = vshrl.u32 %v1369, 7
    %v1371 = vsub.s32 1, %v1370
    %v1372 = vrot.slane %v1363, %v1371
    %v1391 = vunpack.c.l.b16 %v1347
    %v1392 = vunpack.c.h.b16 %v1347
    %v1393 = vunpack.c.l.b16 %v1348
    %v1394 = vunpack.c.h.b16 %v1348
    %v1395 = vunpack.c.l.b16 %v1349
    %v1396 = vunpack.c.h.b16 %v1349
    %v1397 = vunpack.c.l.b16 %v1350
    %v1398 = vunpack.c.h.b16 %v1350
    %v1399 = vunpack.c.l.b16 %v1351
    %v1400 = vunpack.c.h.b16 %v1351
    %v1401 = vunpack.c.l.b16 %v1352
    %v1402 = vunpack.c.h.b16 %v1352
    %v1403 = vunpack.c.l.b16 %v1353
    %v1404 = vunpack.c.h.b16 %v1353
    %v1405 = vunpack.c.l.b16 %v1354
    %v1406 = vunpack.c.h.b16 %v1354
    %v1407 = vunpack.c.l.b16 %v1355
    %v1408 = vunpack.c.h.b16 %v1355
    %v1409 = vunpack.c.l.b16 %v1356
    %v1410 = vunpack.c.h.b16 %v1356
    %v1411 = vunpack.c.l.b16 %v1357
    %v1412 = vunpack.c.h.b16 %v1357
    %v1413 = vunpack.c.l.b16 %v1358
    %v1414 = vunpack.c.h.b16 %v1358
    %v1415 = vunpack.c.l.b16 %v1359
    %v1416 = vunpack.c.h.b16 %v1359
    %v1417 = vunpack.c.l.b16 %v1360
    %v1418 = vunpack.c.h.b16 %v1360
    %v1419 = vunpack.c.l.b16 %v1361
    %v1420 = vunpack.c.h.b16 %v1361
    %v1421 = vunpack.c.l.b16 %v1362
    %v1422 = vunpack.c.h.b16 %v1362
    %v1423 = vpack.c.b16 %v1393, %v1391
    %v1424 = vpack.c.b16 %v1394, %v1392
    %v1425 = vpack.c.b16 %v1397, %v1395
    %v1426 = vpack.c.b16 %v1398, %v1396
    %v1427 = vpack.c.b16 %v1401, %v1399
    %v1428 = vpack.c.b16 %v1402, %v1400
    %v1429 = vpack.c.b16 %v1405, %v1403
    %v1430 = vpack.c.b16 %v1406, %v1404
    %v1431 = vpack.c.b16 %v1409, %v1407
    %v1432 = vpack.c.b16 %v1410, %v1408
    %v1433 = vpack.c.b16 %v1413, %v1411
    %v1434 = vpack.c.b16 %v1414, %v1412
    %v1435 = vpack.c.b16 %v1417, %v1415
    %v1436 = vpack.c.b16 %v1418, %v1416
    %v1437 = vpack.c.b16 %v1421, %v1419
    %v1438 = vpack.c.b16 %v1422, %v1420
    %1455 = vmatprep.subr.bf16.mxu0 %v1438
    %1456 = vmatpush1.bf16.msra.mxu0 %v1437
    %1457 = vmatprep.subr.bf16.mxu0 %v1436
    %1458 = vmatpush1.bf16.msra.mxu0 %v1435
    %1459 = vmatprep.subr.bf16.mxu0 %v1434
    %1460 = vmatpush1.bf16.msra.mxu0 %v1433
    %1461 = vmatprep.subr.bf16.mxu0 %v1432
    %1462 = vmatpush1.bf16.msra.mxu0 %v1431
    %1463 = vmatprep.subr.bf16.mxu0 %v1430
    %1464 = vmatpush1.bf16.msra.mxu0 %v1429
    %1465 = vmatprep.subr.bf16.mxu0 %v1428
    %1466 = vmatpush1.bf16.msra.mxu0 %v1427
    %1467 = vmatprep.subr.bf16.mxu0 %v1426
    %1468 = vmatpush1.bf16.msra.mxu0 %v1425
    %1469 = vmatprep.subr.bf16.mxu0 %v1424
    %1470 = vmatpush1.bf16.msra.mxu0 %v1423
    %1471 = vmatprep.subr.bf16.mxu0 0
    %1472 = vmatpush2.bf16.msra.mxu0 0
    %1473 = vmatprep.subr.bf16.mxu0 0
    %1474 = vmatpush2.bf16.msra.mxu0 0
    %1475 = vmatprep.subr.bf16.mxu0 0
    %1476 = vmatpush2.bf16.msra.mxu0 0
    %1477 = vmatprep.subr.bf16.mxu0 0
    %1478 = vmatpush2.bf16.msra.mxu0 0
    %1479 = vmatprep.subr.bf16.mxu0 0
    %1480 = vmatpush2.bf16.msra.mxu0 0
    %1481 = vmatprep.subr.bf16.mxu0 0
    %1482 = vmatpush2.bf16.msra.mxu0 0
    %1483 = vmatprep.subr.bf16.mxu0 0
    %1484 = vmatpush2.bf16.msra.mxu0 0
    %1485 = vmatprep.subr.bf16.mxu0 0
    %1486 = vmatpush2.bf16.msra.mxu0 0
    %1487 = vmatprep.mubr.bf16.mxu0 0
    %1488 = vmatmul.mubr.bf16.gmra.mxu0 %v1346
    %v1489 = vpop.f32.mrf.mxu0
    %v1490 = vadd.f32 %v1368, %v1489
    %v1491 = vpop.f32.mrf.mxu0
    %v1492 = vadd.f32 %v1372, %v1491
    %v1493 = vpop.f32.mrf.mxu0
    %v1494 = vpop.f32.mrf.mxu0
    %1495 = vdwg.mxu0
    %v1496 = vmax.f32 %v1490, 0.0
    %v1497 = vmax.f32 %v1492, 0.0
    %v1498 = vpack.c.bf16 %v1496, %v1496
    %v1499 = vpack.c.bf16 %v1497, %v1497
    %v1500 = vld [vmem:[%s15] sm:$0xff]
    %v1501 = vld [vmem:[%s15 + $0x8] sm:$0xff]
    %v1502 = vld [vmem:[%s15 + $0x10] sm:$0xff]
    %v1503 = vld [vmem:[%s15 + $0x18] sm:$0xf]
    %v1504 = vld [vmem:[%s15 + $0x1c] sm:$0xff]
    %v1505 = vld [vmem:[%s15 + $0x24] sm:$0xff]
    %v1506 = vld [vmem:[%s15 + $0x2c] sm:$0xff]
    %v1507 = vld [vmem:[%s15 + $0x34] sm:$0xf]
    %v1508 = vld [vmem:[%s15 + $0x38] sm:$0xff]
    %v1509 = vld [vmem:[%s15 + $0x40] sm:$0xff]
    %v1510 = vld [vmem:[%s15 + $0x48] sm:$0xff]
    %v1511 = vld [vmem:[%s15 + $0x50] sm:$0xf]
    %v1512 = vld [vmem:[%s15 + $0x54] sm:$0xff]
    %v1513 = vld [vmem:[%s15 + $0x5c] sm:$0xff]
    %v1514 = vld [vmem:[%s15 + $0x64] sm:$0xff]
    %v1515 = vld [vmem:[%s15 + $0x6c] sm:$0xf]
    %v1516 = vld [vmem:[%s15 + $0x70] sm:$0xff]
    %v1517 = vld [vmem:[%s15 + $0x78] sm:$0xff]
    %v1518 = vld [vmem:[%s15 + $0x80] sm:$0xff]
    %v1519 = vld [vmem:[%s15 + $0x88] sm:$0xf]
    %v1520 = vld [vmem:[%s15 + $0x8c] sm:$0xff]
    %v1521 = vld [vmem:[%s15 + $0x94] sm:$0xff]
    %v1522 = vld [vmem:[%s15 + $0x9c] sm:$0xff]
    %v1523 = vld [vmem:[%s15 + $0xa4] sm:$0xf]
    %v1524 = vld [vmem:[%s15 + $0xa8] sm:$0xff]
    %v1525 = vld [vmem:[%s15 + $0xb0] sm:$0xff]
    %v1526 = vld [vmem:[%s15 + $0xb8] sm:$0xff]
    %v1527 = vld [vmem:[%s15 + $0xc0] sm:$0xf]
    %v1528 = vld [vmem:[%s15 + $0xc4] sm:$0xff]
    %v1529 = vld [vmem:[%s15 + $0xcc] sm:$0xff]
    %v1530 = vld [vmem:[%s15 + $0xd4] sm:$0xff]
    %v1531 = vld [vmem:[%s15 + $0xdc] sm:$0xf]
    %v1532 = vld [vmem:[%s15 + $0xe0] sm:$0xff]
    %v1533 = vld [vmem:[%s15 + $0xe8] sm:$0xff]
    %v1534 = vld [vmem:[%s15 + $0xf0] sm:$0xff]
    %v1535 = vld [vmem:[%s15 + $0xf8] sm:$0xf]
    %v1536 = vld [vmem:[%s15 + $0xfc] sm:$0xff]
    %v1537 = vld [vmem:[%s15 + $0x104] sm:$0xff]
    %v1538 = vld [vmem:[%s15 + $0x10c] sm:$0xff]
    %v1539 = vld [vmem:[%s15 + $0x114] sm:$0xf]
    %v1540 = vld [vmem:[%s15 + $0x118] sm:$0xff]
    %v1541 = vld [vmem:[%s15 + $0x120] sm:$0xff]
    %v1542 = vld [vmem:[%s15 + $0x128] sm:$0xff]
    %v1543 = vld [vmem:[%s15 + $0x130] sm:$0xf]
    %v1544 = vld [vmem:[%s15 + $0x134] sm:$0xff]
    %v1545 = vld [vmem:[%s15 + $0x13c] sm:$0xff]
    %v1546 = vld [vmem:[%s15 + $0x144] sm:$0xff]
    %v1547 = vld [vmem:[%s15 + $0x14c] sm:$0xf]
    %v1548 = vld [vmem:[%s15 + $0x150] sm:$0xff]
    %v1549 = vld [vmem:[%s15 + $0x158] sm:$0xff]
    %v1550 = vld [vmem:[%s15 + $0x160] sm:$0xff]
    %v1551 = vld [vmem:[%s15 + $0x168] sm:$0xf]
    %v1552 = vld [vmem:[%s15 + $0x16c] sm:$0xff]
    %v1553 = vld [vmem:[%s15 + $0x174] sm:$0xff]
    %v1554 = vld [vmem:[%s15 + $0x17c] sm:$0xff]
    %v1555 = vld [vmem:[%s15 + $0x184] sm:$0xf]
    %v1556 = vld [vmem:[%s15 + $0x188] sm:$0xff]
    %v1557 = vld [vmem:[%s15 + $0x190] sm:$0xff]
    %v1558 = vld [vmem:[%s15 + $0x198] sm:$0xff]
    %v1559 = vld [vmem:[%s15 + $0x1a0] sm:$0xf]
    %v1560 = vld [vmem:[%s15 + $0x1a4] sm:$0xff]
    %v1561 = vld [vmem:[%s15 + $0x1ac] sm:$0xff]
    %v1562 = vld [vmem:[%s15 + $0x1b4] sm:$0xff]
    %v1563 = vld [vmem:[%s15 + $0x1bc] sm:$0xf]
    %v1564 = vld [vmem:[%s15 + $0x1c0] sm:$0xff]
    %v1565 = vld [vmem:[%s15 + $0x1c8] sm:$0xff]
    %v1566 = vld [vmem:[%s15 + $0x1d0] sm:$0xff]
    %v1567 = vld [vmem:[%s15 + $0x1d8] sm:$0xf]
    %v1568 = vld [vmem:[%s15 + $0x1dc] sm:$0xff]
    %v1569 = vld [vmem:[%s15 + $0x1e4] sm:$0xff]
    %v1570 = vld [vmem:[%s15 + $0x1ec] sm:$0xff]
    %v1571 = vld [vmem:[%s15 + $0x1f4] sm:$0xf]
    %v1572 = vld [vmem:[%s15 + $0x1f8] sm:$0xff]
    %v1573 = vld [vmem:[%s15 + $0x200] sm:$0xff]
    %v1574 = vld [vmem:[%s15 + $0x208] sm:$0xff]
    %v1575 = vld [vmem:[%s15 + $0x210] sm:$0xf]
    %v1576 = vld [vmem:[%s15 + $0x214] sm:$0xff]
    %v1577 = vld [vmem:[%s15 + $0x21c] sm:$0xff]
    %v1578 = vld [vmem:[%s15 + $0x224] sm:$0xff]
    %v1579 = vld [vmem:[%s15 + $0x22c] sm:$0xf]
    %v1580 = vld [vmem:[%s15 + $0x230] sm:$0xff]
    %v1581 = vld [vmem:[%s15 + $0x238] sm:$0xff]
    %v1582 = vld [vmem:[%s15 + $0x240] sm:$0xff]
    %v1583 = vld [vmem:[%s15 + $0x248] sm:$0xf]
    %v1584 = vld [vmem:[%s15 + $0x24c] sm:$0xff]
    %v1585 = vld [vmem:[%s15 + $0x254] sm:$0xff]
    %v1586 = vld [vmem:[%s15 + $0x25c] sm:$0xff]
    %v1587 = vld [vmem:[%s15 + $0x264] sm:$0xf]
    %v1588 = vld [vmem:[%s15 + $0x268] sm:$0xff]
    %v1589 = vld [vmem:[%s15 + $0x270] sm:$0xff]
    %v1590 = vld [vmem:[%s15 + $0x278] sm:$0xff]
    %v1591 = vld [vmem:[%s15 + $0x280] sm:$0xf]
    %v1592 = vld [vmem:[%s15 + $0x284] sm:$0xff]
    %v1593 = vld [vmem:[%s15 + $0x28c] sm:$0xff]
    %v1594 = vld [vmem:[%s15 + $0x294] sm:$0xff]
    %v1595 = vld [vmem:[%s15 + $0x29c] sm:$0xf]
    %v1596 = vld [vmem:[%s15 + $0x2a0] sm:$0xff]
    %v1597 = vld [vmem:[%s15 + $0x2a8] sm:$0xff]
    %v1598 = vld [vmem:[%s15 + $0x2b0] sm:$0xff]
    %v1599 = vld [vmem:[%s15 + $0x2b8] sm:$0xf]
    %v1600 = vld [vmem:[%s15 + $0x2bc] sm:$0xff]
    %v1601 = vld [vmem:[%s15 + $0x2c4] sm:$0xff]
    %v1602 = vld [vmem:[%s15 + $0x2cc] sm:$0xff]
    %v1603 = vld [vmem:[%s15 + $0x2d4] sm:$0xf]
    %v1604 = vld [vmem:[%s15 + $0x2d8] sm:$0xff]
    %v1605 = vld [vmem:[%s15 + $0x2e0] sm:$0xff]
    %v1606 = vld [vmem:[%s15 + $0x2e8] sm:$0xff]
    %v1607 = vld [vmem:[%s15 + $0x2f0] sm:$0xf]
    %v1608 = vld [vmem:[%s15 + $0x2f4] sm:$0xff]
    %v1609 = vld [vmem:[%s15 + $0x2fc] sm:$0xff]
    %v1610 = vld [vmem:[%s15 + $0x304] sm:$0xff]
    %v1611 = vld [vmem:[%s15 + $0x30c] sm:$0xf]
    %v1612 = vld [vmem:[%s15 + $0x310] sm:$0xff]
    %v1613 = vld [vmem:[%s15 + $0x318] sm:$0xff]
    %v1614 = vld [vmem:[%s15 + $0x320] sm:$0xff]
    %v1615 = vld [vmem:[%s15 + $0x328] sm:$0xf]
    %v1616 = vld [vmem:[%s15 + $0x32c] sm:$0xff]
    %v1617 = vld [vmem:[%s15 + $0x334] sm:$0xff]
    %v1618 = vld [vmem:[%s15 + $0x33c] sm:$0xff]
    %v1619 = vld [vmem:[%s15 + $0x344] sm:$0xf]
    %v1620 = vld [vmem:[%s15 + $0x348] sm:$0xff]
    %v1621 = vld [vmem:[%s15 + $0x350] sm:$0xff]
    %v1622 = vld [vmem:[%s15 + $0x358] sm:$0xff]
    %v1623 = vld [vmem:[%s15 + $0x360] sm:$0xf]
    %v1624 = vld [vmem:[%s15 + $0x364] sm:$0xff]
    %v1625 = vld [vmem:[%s15 + $0x36c] sm:$0xff]
    %v1626 = vld [vmem:[%s15 + $0x374] sm:$0xff]
    %v1627 = vld [vmem:[%s15 + $0x37c] sm:$0xf]
    %v1628 = vld [vmem:[%s16] sm:$0x7f]
    %v1630 = vlaneseq
    %v1631 = vshrl.u32 %v1630, 7
    %v1632 = vsub.s32 0, %v1631
    %v1633 = vrot.slane %v1628, %v1632
    %v1634 = vlaneseq
    %v1635 = vshrl.u32 %v1634, 7
    %v1636 = vsub.s32 1, %v1635
    %v1637 = vrot.slane %v1628, %v1636
    %v1638 = vlaneseq
    %v1639 = vshrl.u32 %v1638, 7
    %v1640 = vsub.s32 2, %v1639
    %v1641 = vrot.slane %v1628, %v1640
    %v1642 = vlaneseq
    %v1643 = vshrl.u32 %v1642, 7
    %v1644 = vsub.s32 3, %v1643
    %v1645 = vrot.slane %v1628, %v1644
    %v1646 = vlaneseq
    %v1647 = vshrl.u32 %v1646, 7
    %v1648 = vsub.s32 4, %v1647
    %v1649 = vrot.slane %v1628, %v1648
    %v1650 = vlaneseq
    %v1651 = vshrl.u32 %v1650, 7
    %v1652 = vsub.s32 5, %v1651
    %v1653 = vrot.slane %v1628, %v1652
    %v1654 = vlaneseq
    %v1655 = vshrl.u32 %v1654, 7
    %v1656 = vsub.s32 6, %v1655
    %v1657 = vrot.slane %v1628, %v1656
    %v1793 = vunpack.c.l.b16 %v1500
    %v1794 = vunpack.c.h.b16 %v1500
    %v1795 = vunpack.c.l.b16 %v1501
    %v1796 = vunpack.c.h.b16 %v1501
    %v1797 = vunpack.c.l.b16 %v1502
    %v1798 = vunpack.c.h.b16 %v1502
    %v1799 = vunpack.c.l.b16 %v1503
    %v1800 = vunpack.c.l.b16 %v1504
    %v1801 = vunpack.c.h.b16 %v1504
    %v1802 = vunpack.c.l.b16 %v1505
    %v1803 = vunpack.c.h.b16 %v1505
    %v1804 = vunpack.c.l.b16 %v1506
    %v1805 = vunpack.c.h.b16 %v1506
    %v1806 = vunpack.c.l.b16 %v1507
    %v1807 = vunpack.c.l.b16 %v1508
    %v1808 = vunpack.c.h.b16 %v1508
    %v1809 = vunpack.c.l.b16 %v1509
    %v1810 = vunpack.c.h.b16 %v1509
    %v1811 = vunpack.c.l.b16 %v1510
    %v1812 = vunpack.c.h.b16 %v1510
    %v1813 = vunpack.c.l.b16 %v1511
    %v1814 = vunpack.c.l.b16 %v1512
    %v1815 = vunpack.c.h.b16 %v1512
    %v1816 = vunpack.c.l.b16 %v1513
    %v1817 = vunpack.c.h.b16 %v1513
    %v1818 = vunpack.c.l.b16 %v1514
    %v1819 = vunpack.c.h.b16 %v1514
    %v1820 = vunpack.c.l.b16 %v1515
    %v1821 = vunpack.c.l.b16 %v1516
    %v1822 = vunpack.c.h.b16 %v1516
    %v1823 = vunpack.c.l.b16 %v1517
    %v1824 = vunpack.c.h.b16 %v1517
    %v1825 = vunpack.c.l.b16 %v1518
    %v1826 = vunpack.c.h.b16 %v1518
    %v1827 = vunpack.c.l.b16 %v1519
    %v1828 = vunpack.c.l.b16 %v1520
    %v1829 = vunpack.c.h.b16 %v1520
    %v1830 = vunpack.c.l.b16 %v1521
    %v1831 = vunpack.c.h.b16 %v1521
    %v1832 = vunpack.c.l.b16 %v1522
    %v1833 = vunpack.c.h.b16 %v1522
    %v1834 = vunpack.c.l.b16 %v1523
    %v1835 = vunpack.c.l.b16 %v1524
    %v1836 = vunpack.c.h.b16 %v1524
    %v1837 = vunpack.c.l.b16 %v1525
    %v1838 = vunpack.c.h.b16 %v1525
    %v1839 = vunpack.c.l.b16 %v1526
    %v1840 = vunpack.c.h.b16 %v1526
    %v1841 = vunpack.c.l.b16 %v1527
    %v1842 = vunpack.c.l.b16 %v1528
    %v1843 = vunpack.c.h.b16 %v1528
    %v1844 = vunpack.c.l.b16 %v1529
    %v1845 = vunpack.c.h.b16 %v1529
    %v1846 = vunpack.c.l.b16 %v1530
    %v1847 = vunpack.c.h.b16 %v1530
    %v1848 = vunpack.c.l.b16 %v1531
    %v1849 = vunpack.c.l.b16 %v1532
    %v1850 = vunpack.c.h.b16 %v1532
    %v1851 = vunpack.c.l.b16 %v1533
    %v1852 = vunpack.c.h.b16 %v1533
    %v1853 = vunpack.c.l.b16 %v1534
    %v1854 = vunpack.c.h.b16 %v1534
    %v1855 = vunpack.c.l.b16 %v1535
    %v1856 = vunpack.c.l.b16 %v1536
    %v1857 = vunpack.c.h.b16 %v1536
    %v1858 = vunpack.c.l.b16 %v1537
    %v1859 = vunpack.c.h.b16 %v1537
    %v1860 = vunpack.c.l.b16 %v1538
    %v1861 = vunpack.c.h.b16 %v1538
    %v1862 = vunpack.c.l.b16 %v1539
    %v1863 = vunpack.c.l.b16 %v1540
    %v1864 = vunpack.c.h.b16 %v1540
    %v1865 = vunpack.c.l.b16 %v1541
    %v1866 = vunpack.c.h.b16 %v1541
    %v1867 = vunpack.c.l.b16 %v1542
    %v1868 = vunpack.c.h.b16 %v1542
    %v1869 = vunpack.c.l.b16 %v1543
    %v1870 = vunpack.c.l.b16 %v1544
    %v1871 = vunpack.c.h.b16 %v1544
    %v1872 = vunpack.c.l.b16 %v1545
    %v1873 = vunpack.c.h.b16 %v1545
    %v1874 = vunpack.c.l.b16 %v1546
    %v1875 = vunpack.c.h.b16 %v1546
    %v1876 = vunpack.c.l.b16 %v1547
    %v1877 = vunpack.c.l.b16 %v1548
    %v1878 = vunpack.c.h.b16 %v1548
    %v1879 = vunpack.c.l.b16 %v1549
    %v1880 = vunpack.c.h.b16 %v1549
    %v1881 = vunpack.c.l.b16 %v1550
    %v1882 = vunpack.c.h.b16 %v1550
    %v1883 = vunpack.c.l.b16 %v1551
    %v1884 = vunpack.c.l.b16 %v1552
    %v1885 = vunpack.c.h.b16 %v1552
    %v1886 = vunpack.c.l.b16 %v1553
    %v1887 = vunpack.c.h.b16 %v1553
    %v1888 = vunpack.c.l.b16 %v1554
    %v1889 = vunpack.c.h.b16 %v1554
    %v1890 = vunpack.c.l.b16 %v1555
    %v1891 = vunpack.c.l.b16 %v1556
    %v1892 = vunpack.c.h.b16 %v1556
    %v1893 = vunpack.c.l.b16 %v1557
    %v1894 = vunpack.c.h.b16 %v1557
    %v1895 = vunpack.c.l.b16 %v1558
    %v1896 = vunpack.c.h.b16 %v1558
    %v1897 = vunpack.c.l.b16 %v1559
    %v1898 = vunpack.c.l.b16 %v1560
    %v1899 = vunpack.c.h.b16 %v1560
    %v1900 = vunpack.c.l.b16 %v1561
    %v1901 = vunpack.c.h.b16 %v1561
    %v1902 = vunpack.c.l.b16 %v1562
    %v1903 = vunpack.c.h.b16 %v1562
    %v1904 = vunpack.c.l.b16 %v1563
    %v1905 = vunpack.c.l.b16 %v1564
    %v1906 = vunpack.c.h.b16 %v1564
    %v1907 = vunpack.c.l.b16 %v1565
    %v1908 = vunpack.c.h.b16 %v1565
    %v1909 = vunpack.c.l.b16 %v1566
    %v1910 = vunpack.c.h.b16 %v1566
    %v1911 = vunpack.c.l.b16 %v1567
    %v1912 = vunpack.c.l.b16 %v1568
    %v1913 = vunpack.c.h.b16 %v1568
    %v1914 = vunpack.c.l.b16 %v1569
    %v1915 = vunpack.c.h.b16 %v1569
    %v1916 = vunpack.c.l.b16 %v1570
    %v1917 = vunpack.c.h.b16 %v1570
    %v1918 = vunpack.c.l.b16 %v1571
    %v1919 = vunpack.c.l.b16 %v1572
    %v1920 = vunpack.c.h.b16 %v1572
    %v1921 = vunpack.c.l.b16 %v1573
    %v1922 = vunpack.c.h.b16 %v1573
    %v1923 = vunpack.c.l.b16 %v1574
    %v1924 = vunpack.c.h.b16 %v1574
    %v1925 = vunpack.c.l.b16 %v1575
    %v1926 = vunpack.c.l.b16 %v1576
    %v1927 = vunpack.c.h.b16 %v1576
    %v1928 = vunpack.c.l.b16 %v1577
    %v1929 = vunpack.c.h.b16 %v1577
    %v1930 = vunpack.c.l.b16 %v1578
    %v1931 = vunpack.c.h.b16 %v1578
    %v1932 = vunpack.c.l.b16 %v1579
    %v1933 = vunpack.c.l.b16 %v1580
    %v1934 = vunpack.c.h.b16 %v1580
    %v1935 = vunpack.c.l.b16 %v1581
    %v1936 = vunpack.c.h.b16 %v1581
    %v1937 = vunpack.c.l.b16 %v1582
    %v1938 = vunpack.c.h.b16 %v1582
    %v1939 = vunpack.c.l.b16 %v1583
    %v1940 = vunpack.c.l.b16 %v1584
    %v1941 = vunpack.c.h.b16 %v1584
    %v1942 = vunpack.c.l.b16 %v1585
    %v1943 = vunpack.c.h.b16 %v1585
    %v1944 = vunpack.c.l.b16 %v1586
    %v1945 = vunpack.c.h.b16 %v1586
    %v1946 = vunpack.c.l.b16 %v1587
    %v1947 = vunpack.c.l.b16 %v1588
    %v1948 = vunpack.c.h.b16 %v1588
    %v1949 = vunpack.c.l.b16 %v1589
    %v1950 = vunpack.c.h.b16 %v1589
    %v1951 = vunpack.c.l.b16 %v1590
    %v1952 = vunpack.c.h.b16 %v1590
    %v1953 = vunpack.c.l.b16 %v1591
    %v1954 = vunpack.c.l.b16 %v1592
    %v1955 = vunpack.c.h.b16 %v1592
    %v1956 = vunpack.c.l.b16 %v1593
    %v1957 = vunpack.c.h.b16 %v1593
    %v1958 = vunpack.c.l.b16 %v1594
    %v1959 = vunpack.c.h.b16 %v1594
    %v1960 = vunpack.c.l.b16 %v1595
    %v1961 = vunpack.c.l.b16 %v1596
    %v1962 = vunpack.c.h.b16 %v1596
    %v1963 = vunpack.c.l.b16 %v1597
    %v1964 = vunpack.c.h.b16 %v1597
    %v1965 = vunpack.c.l.b16 %v1598
    %v1966 = vunpack.c.h.b16 %v1598
    %v1967 = vunpack.c.l.b16 %v1599
    %v1968 = vunpack.c.l.b16 %v1600
    %v1969 = vunpack.c.h.b16 %v1600
    %v1970 = vunpack.c.l.b16 %v1601
    %v1971 = vunpack.c.h.b16 %v1601
    %v1972 = vunpack.c.l.b16 %v1602
    %v1973 = vunpack.c.h.b16 %v1602
    %v1974 = vunpack.c.l.b16 %v1603
    %v1975 = vunpack.c.l.b16 %v1604
    %v1976 = vunpack.c.h.b16 %v1604
    %v1977 = vunpack.c.l.b16 %v1605
    %v1978 = vunpack.c.h.b16 %v1605
    %v1979 = vunpack.c.l.b16 %v1606
    %v1980 = vunpack.c.h.b16 %v1606
    %v1981 = vunpack.c.l.b16 %v1607
    %v1982 = vunpack.c.l.b16 %v1608
    %v1983 = vunpack.c.h.b16 %v1608
    %v1984 = vunpack.c.l.b16 %v1609
    %v1985 = vunpack.c.h.b16 %v1609
    %v1986 = vunpack.c.l.b16 %v1610
    %v1987 = vunpack.c.h.b16 %v1610
    %v1988 = vunpack.c.l.b16 %v1611
    %v1989 = vunpack.c.l.b16 %v1612
    %v1990 = vunpack.c.h.b16 %v1612
    %v1991 = vunpack.c.l.b16 %v1613
    %v1992 = vunpack.c.h.b16 %v1613
    %v1993 = vunpack.c.l.b16 %v1614
    %v1994 = vunpack.c.h.b16 %v1614
    %v1995 = vunpack.c.l.b16 %v1615
    %v1996 = vunpack.c.l.b16 %v1616
    %v1997 = vunpack.c.h.b16 %v1616
    %v1998 = vunpack.c.l.b16 %v1617
    %v1999 = vunpack.c.h.b16 %v1617
    %v2000 = vunpack.c.l.b16 %v1618
    %v2001 = vunpack.c.h.b16 %v1618
    %v2002 = vunpack.c.l.b16 %v1619
    %v2003 = vunpack.c.l.b16 %v1620
    %v2004 = vunpack.c.h.b16 %v1620
    %v2005 = vunpack.c.l.b16 %v1621
    %v2006 = vunpack.c.h.b16 %v1621
    %v2007 = vunpack.c.l.b16 %v1622
    %v2008 = vunpack.c.h.b16 %v1622
    %v2009 = vunpack.c.l.b16 %v1623
    %v2010 = vunpack.c.l.b16 %v1624
    %v2011 = vunpack.c.h.b16 %v1624
    %v2012 = vunpack.c.l.b16 %v1625
    %v2013 = vunpack.c.h.b16 %v1625
    %v2014 = vunpack.c.l.b16 %v1626
    %v2015 = vunpack.c.h.b16 %v1626
    %v2016 = vunpack.c.l.b16 %v1627
    %v2017 = vpack.c.b16 %v1800, %v1793
    %v2018 = vpack.c.b16 %v1801, %v1794
    %v2019 = vpack.c.b16 %v1802, %v1795
    %v2020 = vpack.c.b16 %v1803, %v1796
    %v2021 = vpack.c.b16 %v1804, %v1797
    %v2022 = vpack.c.b16 %v1805, %v1798
    %v2023 = vpack.c.b16 %v1806, %v1799
    %v2024 = vpack.c.b16 %v1814, %v1807
    %v2025 = vpack.c.b16 %v1815, %v1808
    %v2026 = vpack.c.b16 %v1816, %v1809
    %v2027 = vpack.c.b16 %v1817, %v1810
    %v2028 = vpack.c.b16 %v1818, %v1811
    %v2029 = vpack.c.b16 %v1819, %v1812
    %v2030 = vpack.c.b16 %v1820, %v1813
    %v2031 = vpack.c.b16 %v1828, %v1821
    %v2032 = vpack.c.b16 %v1829, %v1822
    %v2033 = vpack.c.b16 %v1830, %v1823
    %v2034 = vpack.c.b16 %v1831, %v1824
    %v2035 = vpack.c.b16 %v1832, %v1825
    %v2036 = vpack.c.b16 %v1833, %v1826
    %v2037 = vpack.c.b16 %v1834, %v1827
    %v2038 = vpack.c.b16 %v1842, %v1835
    %v2039 = vpack.c.b16 %v1843, %v1836
    %v2040 = vpack.c.b16 %v1844, %v1837
    %v2041 = vpack.c.b16 %v1845, %v1838
    %v2042 = vpack.c.b16 %v1846, %v1839
    %v2043 = vpack.c.b16 %v1847, %v1840
    %v2044 = vpack.c.b16 %v1848, %v1841
    %v2045 = vpack.c.b16 %v1856, %v1849
    %v2046 = vpack.c.b16 %v1857, %v1850
    %v2047 = vpack.c.b16 %v1858, %v1851
    %v2048 = vpack.c.b16 %v1859, %v1852
    %v2049 = vpack.c.b16 %v1860, %v1853
    %v2050 = vpack.c.b16 %v1861, %v1854
    %v2051 = vpack.c.b16 %v1862, %v1855
    %v2052 = vpack.c.b16 %v1870, %v1863
    %v2053 = vpack.c.b16 %v1871, %v1864
    %v2054 = vpack.c.b16 %v1872, %v1865
    %v2055 = vpack.c.b16 %v1873, %v1866
    %v2056 = vpack.c.b16 %v1874, %v1867
    %v2057 = vpack.c.b16 %v1875, %v1868
    %v2058 = vpack.c.b16 %v1876, %v1869
    %v2059 = vpack.c.b16 %v1884, %v1877
    %v2060 = vpack.c.b16 %v1885, %v1878
    %v2061 = vpack.c.b16 %v1886, %v1879
    %v2062 = vpack.c.b16 %v1887, %v1880
    %v2063 = vpack.c.b16 %v1888, %v1881
    %v2064 = vpack.c.b16 %v1889, %v1882
    %v2065 = vpack.c.b16 %v1890, %v1883
    %v2066 = vpack.c.b16 %v1898, %v1891
    %v2067 = vpack.c.b16 %v1899, %v1892
    %v2068 = vpack.c.b16 %v1900, %v1893
    %v2069 = vpack.c.b16 %v1901, %v1894
    %v2070 = vpack.c.b16 %v1902, %v1895
    %v2071 = vpack.c.b16 %v1903, %v1896
    %v2072 = vpack.c.b16 %v1904, %v1897
    %v2073 = vpack.c.b16 %v1912, %v1905
    %v2074 = vpack.c.b16 %v1913, %v1906
    %v2075 = vpack.c.b16 %v1914, %v1907
    %v2076 = vpack.c.b16 %v1915, %v1908
    %v2077 = vpack.c.b16 %v1916, %v1909
    %v2078 = vpack.c.b16 %v1917, %v1910
    %v2079 = vpack.c.b16 %v1918, %v1911
    %v2080 = vpack.c.b16 %v1926, %v1919
    %v2081 = vpack.c.b16 %v1927, %v1920
    %v2082 = vpack.c.b16 %v1928, %v1921
    %v2083 = vpack.c.b16 %v1929, %v1922
    %v2084 = vpack.c.b16 %v1930, %v1923
    %v2085 = vpack.c.b16 %v1931, %v1924
    %v2086 = vpack.c.b16 %v1932, %v1925
    %v2087 = vpack.c.b16 %v1940, %v1933
    %v2088 = vpack.c.b16 %v1941, %v1934
    %v2089 = vpack.c.b16 %v1942, %v1935
    %v2090 = vpack.c.b16 %v1943, %v1936
    %v2091 = vpack.c.b16 %v1944, %v1937
    %v2092 = vpack.c.b16 %v1945, %v1938
    %v2093 = vpack.c.b16 %v1946, %v1939
    %v2094 = vpack.c.b16 %v1954, %v1947
    %v2095 = vpack.c.b16 %v1955, %v1948
    %v2096 = vpack.c.b16 %v1956, %v1949
    %v2097 = vpack.c.b16 %v1957, %v1950
    %v2098 = vpack.c.b16 %v1958, %v1951
    %v2099 = vpack.c.b16 %v1959, %v1952
    %v2100 = vpack.c.b16 %v1960, %v1953
    %v2101 = vpack.c.b16 %v1968, %v1961
    %v2102 = vpack.c.b16 %v1969, %v1962
    %v2103 = vpack.c.b16 %v1970, %v1963
    %v2104 = vpack.c.b16 %v1971, %v1964
    %v2105 = vpack.c.b16 %v1972, %v1965
    %v2106 = vpack.c.b16 %v1973, %v1966
    %v2107 = vpack.c.b16 %v1974, %v1967
    %v2108 = vpack.c.b16 %v1982, %v1975
    %v2109 = vpack.c.b16 %v1983, %v1976
    %v2110 = vpack.c.b16 %v1984, %v1977
    %v2111 = vpack.c.b16 %v1985, %v1978
    %v2112 = vpack.c.b16 %v1986, %v1979
    %v2113 = vpack.c.b16 %v1987, %v1980
    %v2114 = vpack.c.b16 %v1988, %v1981
    %v2115 = vpack.c.b16 %v1996, %v1989
    %v2116 = vpack.c.b16 %v1997, %v1990
    %v2117 = vpack.c.b16 %v1998, %v1991
    %v2118 = vpack.c.b16 %v1999, %v1992
    %v2119 = vpack.c.b16 %v2000, %v1993
    %v2120 = vpack.c.b16 %v2001, %v1994
    %v2121 = vpack.c.b16 %v2002, %v1995
    %v2122 = vpack.c.b16 %v2010, %v2003
    %v2123 = vpack.c.b16 %v2011, %v2004
    %v2124 = vpack.c.b16 %v2012, %v2005
    %v2125 = vpack.c.b16 %v2013, %v2006
    %v2126 = vpack.c.b16 %v2014, %v2007
    %v2127 = vpack.c.b16 %v2015, %v2008
    %v2128 = vpack.c.b16 %v2016, %v2009
    %2241 = vmatprep.subr.bf16.mxu0 %v2067
    %2242 = vmatpush1.bf16.msra.mxu0 %v2066
    %2243 = vmatprep.subr.bf16.mxu0 %v2060
    %2244 = vmatpush1.bf16.msra.mxu0 %v2059
    %2245 = vmatprep.subr.bf16.mxu0 %v2053
    %2246 = vmatpush1.bf16.msra.mxu0 %v2052
    %2247 = vmatprep.subr.bf16.mxu0 %v2046
    %2248 = vmatpush1.bf16.msra.mxu0 %v2045
    %2249 = vmatprep.subr.bf16.mxu0 %v2039
    %2250 = vmatpush1.bf16.msra.mxu0 %v2038
    %2251 = vmatprep.subr.bf16.mxu0 %v2032
    %2252 = vmatpush1.bf16.msra.mxu0 %v2031
    %2253 = vmatprep.subr.bf16.mxu0 %v2025
    %2254 = vmatpush1.bf16.msra.mxu0 %v2024
    %2255 = vmatprep.subr.bf16.mxu0 %v2018
    %2256 = vmatpush1.bf16.msra.mxu0 %v2017
    %2257 = vmatprep.subr.bf16.mxu0 %v2123
    %2258 = vmatpush2.bf16.msra.mxu0 %v2122
    %2259 = vmatprep.subr.bf16.mxu0 %v2116
    %2260 = vmatpush2.bf16.msra.mxu0 %v2115
    %2261 = vmatprep.subr.bf16.mxu0 %v2109
    %2262 = vmatpush2.bf16.msra.mxu0 %v2108
    %2263 = vmatprep.subr.bf16.mxu0 %v2102
    %2264 = vmatpush2.bf16.msra.mxu0 %v2101
    %2265 = vmatprep.subr.bf16.mxu0 %v2095
    %2266 = vmatpush2.bf16.msra.mxu0 %v2094
    %2267 = vmatprep.subr.bf16.mxu0 %v2088
    %2268 = vmatpush2.bf16.msra.mxu0 %v2087
    %2269 = vmatprep.subr.bf16.mxu0 %v2081
    %2270 = vmatpush2.bf16.msra.mxu0 %v2080
    %2271 = vmatprep.subr.bf16.mxu0 %v2074
    %2272 = vmatpush2.bf16.msra.mxu0 %v2073
    %2273 = vmatprep.mubr.bf16.mxu0 %v1499
    %2274 = vmatmul.mubr.bf16.gmra.mxu0 %v1498
    %v2275 = vpop.f32.mrf.mxu0
    %v2276 = vadd.f32 %v1633, %v2275
    %v2277 = vpop.f32.mrf.mxu0
    %v2278 = vadd.f32 %v1637, %v2277
    %v2279 = vpop.f32.mrf.mxu0
    %v2280 = vpop.f32.mrf.mxu0
    %2281 = vdwg.mxu0
    %2282 = vmatprep.subr.bf16.mxu0 %v2069
    %2283 = vmatpush1.bf16.msra.mxu0 %v2068
    %2284 = vmatprep.subr.bf16.mxu0 %v2062
    %2285 = vmatpush1.bf16.msra.mxu0 %v2061
    %2286 = vmatprep.subr.bf16.mxu0 %v2055
    %2287 = vmatpush1.bf16.msra.mxu0 %v2054
    %2288 = vmatprep.subr.bf16.mxu0 %v2048
    %2289 = vmatpush1.bf16.msra.mxu0 %v2047
    %2290 = vmatprep.subr.bf16.mxu0 %v2041
    %2291 = vmatpush1.bf16.msra.mxu0 %v2040
    %2292 = vmatprep.subr.bf16.mxu0 %v2034
    %2293 = vmatpush1.bf16.msra.mxu0 %v2033
    %2294 = vmatprep.subr.bf16.mxu0 %v2027
    %2295 = vmatpush1.bf16.msra.mxu0 %v2026
    %2296 = vmatprep.subr.bf16.mxu0 %v2020
    %2297 = vmatpush1.bf16.msra.mxu0 %v2019
    %2298 = vmatprep.subr.bf16.mxu0 %v2125
    %2299 = vmatpush2.bf16.msra.mxu0 %v2124
    %2300 = vmatprep.subr.bf16.mxu0 %v2118
    %2301 = vmatpush2.bf16.msra.mxu0 %v2117
    %2302 = vmatprep.subr.bf16.mxu0 %v2111
    %2303 = vmatpush2.bf16.msra.mxu0 %v2110
    %2304 = vmatprep.subr.bf16.mxu0 %v2104
    %2305 = vmatpush2.bf16.msra.mxu0 %v2103
    %2306 = vmatprep.subr.bf16.mxu0 %v2097
    %2307 = vmatpush2.bf16.msra.mxu0 %v2096
    %2308 = vmatprep.subr.bf16.mxu0 %v2090
    %2309 = vmatpush2.bf16.msra.mxu0 %v2089
    %2310 = vmatprep.subr.bf16.mxu0 %v2083
    %2311 = vmatpush2.bf16.msra.mxu0 %v2082
    %2312 = vmatprep.subr.bf16.mxu0 %v2076
    %2313 = vmatpush2.bf16.msra.mxu0 %v2075
    %2314 = vmatprep.mubr.bf16.mxu0 %v1499
    %2315 = vmatmul.mubr.bf16.gmra.mxu0 %v1498
    %v2316 = vpop.f32.mrf.mxu0
    %v2317 = vadd.f32 %v1641, %v2316
    %v2318 = vpop.f32.mrf.mxu0
    %v2319 = vadd.f32 %v1645, %v2318
    %v2320 = vpop.f32.mrf.mxu0
    %v2321 = vpop.f32.mrf.mxu0
    %2322 = vdwg.mxu0
    %2323 = vmatprep.subr.bf16.mxu0 %v2071
    %2324 = vmatpush1.bf16.msra.mxu0 %v2070
    %2325 = vmatprep.subr.bf16.mxu0 %v2064
    %2326 = vmatpush1.bf16.msra.mxu0 %v2063
    %2327 = vmatprep.subr.bf16.mxu0 %v2057
    %2328 = vmatpush1.bf16.msra.mxu0 %v2056
    %2329 = vmatprep.subr.bf16.mxu0 %v2050
    %2330 = vmatpush1.bf16.msra.mxu0 %v2049
    %2331 = vmatprep.subr.bf16.mxu0 %v2043
    %2332 = vmatpush1.bf16.msra.mxu0 %v2042
    %2333 = vmatprep.subr.bf16.mxu0 %v2036
    %2334 = vmatpush1.bf16.msra.mxu0 %v2035
    %2335 = vmatprep.subr.bf16.mxu0 %v2029
    %2336 = vmatpush1.bf16.msra.mxu0 %v2028
    %2337 = vmatprep.subr.bf16.mxu0 %v2022
    %2338 = vmatpush1.bf16.msra.mxu0 %v2021
    %2339 = vmatprep.subr.bf16.mxu0 %v2127
    %2340 = vmatpush2.bf16.msra.mxu0 %v2126
    %2341 = vmatprep.subr.bf16.mxu0 %v2120
    %2342 = vmatpush2.bf16.msra.mxu0 %v2119
    %2343 = vmatprep.subr.bf16.mxu0 %v2113
    %2344 = vmatpush2.bf16.msra.mxu0 %v2112
    %2345 = vmatprep.subr.bf16.mxu0 %v2106
    %2346 = vmatpush2.bf16.msra.mxu0 %v2105
    %2347 = vmatprep.subr.bf16.mxu0 %v2099
    %2348 = vmatpush2.bf16.msra.mxu0 %v2098
    %2349 = vmatprep.subr.bf16.mxu0 %v2092
    %2350 = vmatpush2.bf16.msra.mxu0 %v2091
    %2351 = vmatprep.subr.bf16.mxu0 %v2085
    %2352 = vmatpush2.bf16.msra.mxu0 %v2084
    %2353 = vmatprep.subr.bf16.mxu0 %v2078
    %2354 = vmatpush2.bf16.msra.mxu0 %v2077
    %2355 = vmatprep.mubr.bf16.mxu0 %v1499
    %2356 = vmatmul.mubr.bf16.gmra.mxu0 %v1498
    %v2357 = vpop.f32.mrf.mxu0
    %v2358 = vadd.f32 %v1649, %v2357
    %v2359 = vpop.f32.mrf.mxu0
    %v2360 = vadd.f32 %v1653, %v2359
    %v2361 = vpop.f32.mrf.mxu0
    %v2362 = vpop.f32.mrf.mxu0
    %2363 = vdwg.mxu0
    %2364 = vmatprep.subr.bf16.mxu0 0
    %2365 = vmatpush1.bf16.msra.mxu0 %v2072
    %2366 = vmatprep.subr.bf16.mxu0 0
    %2367 = vmatpush1.bf16.msra.mxu0 %v2065
    %2368 = vmatprep.subr.bf16.mxu0 0
    %2369 = vmatpush1.bf16.msra.mxu0 %v2058
    %2370 = vmatprep.subr.bf16.mxu0 0
    %2371 = vmatpush1.bf16.msra.mxu0 %v2051
    %2372 = vmatprep.subr.bf16.mxu0 0
    %2373 = vmatpush1.bf16.msra.mxu0 %v2044
    %2374 = vmatprep.subr.bf16.mxu0 0
    %2375 = vmatpush1.bf16.msra.mxu0 %v2037
    %2376 = vmatprep.subr.bf16.mxu0 0
    %2377 = vmatpush1.bf16.msra.mxu0 %v2030
    %2378 = vmatprep.subr.bf16.mxu0 0
    %2379 = vmatpush1.bf16.msra.mxu0 %v2023
    %2380 = vmatprep.subr.bf16.mxu0 0
    %2381 = vmatpush2.bf16.msra.mxu0 %v2128
    %2382 = vmatprep.subr.bf16.mxu0 0
    %2383 = vmatpush2.bf16.msra.mxu0 %v2121
    %2384 = vmatprep.subr.bf16.mxu0 0
    %2385 = vmatpush2.bf16.msra.mxu0 %v2114
    %2386 = vmatprep.subr.bf16.mxu0 0
    %2387 = vmatpush2.bf16.msra.mxu0 %v2107
    %2388 = vmatprep.subr.bf16.mxu0 0
    %2389 = vmatpush2.bf16.msra.mxu0 %v2100
    %2390 = vmatprep.subr.bf16.mxu0 0
    %2391 = vmatpush2.bf16.msra.mxu0 %v2093
    %2392 = vmatprep.subr.bf16.mxu0 0
    %2393 = vmatpush2.bf16.msra.mxu0 %v2086
    %2394 = vmatprep.subr.bf16.mxu0 0
    %2395 = vmatpush2.bf16.msra.mxu0 %v2079
    %2396 = vmatprep.mubr.bf16.mxu0 %v1499
    %2397 = vmatmul.mubr.bf16.gmra.mxu0 %v1498
    %v2398 = vpop.f32.mrf.mxu0
    %v2399 = vadd.f32 %v1657, %v2398
    %v2400 = vpop.f32.mrf.mxu0
    %v2401 = vpop.f32.mrf.mxu0
    %v2402 = vpop.f32.mrf.mxu0
    %2403 = vdwg.mxu0
    %v2404 = vxor.u32 %v2276, 2147483648
    %v2405 = vxor.u32 %v2278, 2147483648
    %v2406 = vxor.u32 %v2317, 2147483648
    %v2407 = vxor.u32 %v2319, 2147483648
    %v2408 = vxor.u32 %v2358, 2147483648
    %v2409 = vxor.u32 %v2360, 2147483648
    %v2410 = vxor.u32 %v2399, 2147483648
    %v2411 = vmul.f32 %v2404, 1.442695
    %v2412 = vpow.pop %v2411
    %v2413 = vmul.f32 %v2405, 1.442695
    %v2414 = vpow.pop %v2413
    %v2415 = vmul.f32 %v2406, 1.442695
    %v2416 = vpow.pop %v2415
    %v2417 = vmul.f32 %v2407, 1.442695
    %v2418 = vpow.pop %v2417
    %v2419 = vmul.f32 %v2408, 1.442695
    %v2420 = vpow.pop %v2419
    %v2421 = vmul.f32 %v2409, 1.442695
    %v2422 = vpow.pop %v2421
    %v2423 = vmul.f32 %v2410, 1.442695
    %v2424 = vpow.pop %v2423
    %v2425 = vadd.f32 %v2412, 1.0
    %v2426 = vadd.f32 %v2414, 1.0
    %v2427 = vadd.f32 %v2416, 1.0
    %v2428 = vadd.f32 %v2418, 1.0
    %v2429 = vadd.f32 %v2420, 1.0
    %v2430 = vadd.f32 %v2422, 1.0
    %v2431 = vadd.f32 %v2424, 1.0
    %v2432 = vrcp.pop %v2425
    %v2433 = vmul.f32 1.0, %v2432
    %v2434 = vrcp.pop %v2426
    %v2435 = vmul.f32 1.0, %v2434
    %v2436 = vrcp.pop %v2427
    %v2437 = vmul.f32 1.0, %v2436
    %v2438 = vrcp.pop %v2428
    %v2439 = vmul.f32 1.0, %v2438
    %v2440 = vrcp.pop %v2429
    %v2441 = vmul.f32 1.0, %v2440
    %v2442 = vrcp.pop %v2430
    %v2443 = vmul.f32 1.0, %v2442
    %v2444 = vrcp.pop %v2431
    %v2445 = vmul.f32 1.0, %v2444
    %v2446 = vpack.c.bf16 %v2433, %v2433
    %v2447 = vpack.c.bf16 %v2435, %v2435
    %v2448 = vpack.c.bf16 %v2437, %v2437
    %v2449 = vpack.c.bf16 %v2439, %v2439
    %v2450 = vpack.c.bf16 %v2441, %v2441
    %v2451 = vpack.c.bf16 %v2443, %v2443
    %v2452 = vpack.c.bf16 %v2445, %v2445
    %v2460 = vunpack.c.l.b16 %v2446
    %v2461 = vunpack.c.l.b16 %v2447
    %v2462 = vunpack.c.l.b16 %v2448
    %v2463 = vunpack.c.l.b16 %v2449
    %v2464 = vunpack.c.l.b16 %v2450
    %v2465 = vunpack.c.l.b16 %v2451
    %v2466 = vunpack.c.l.b16 %v2452
    %v2467 = vpack.c.b16 %v2461, %v2460
    %v2468 = vpack.c.b16 %v2463, %v2462
    %v2469 = vpack.c.b16 %v2465, %v2464
    %v2470 = vpack.c.b16 %v2466, %v2466
    %2475 = vst [vmem:[#allocation2] sm:$0xff] %v2467
    %2476 = vst [vmem:[#allocation2 + $0x8] sm:$0xff] %v2468
    %2477 = vst [vmem:[#allocation2 + $0x10] sm:$0xff] %v2469
    %vm2478 = vcmask 125952
    %2479 = vst.msk [vmem:[#allocation2 + $0x18] sm:$0xf] %vm2478, %v2470
    // Predicated region
    $region70: #{tpu_custom_call.1} parent=1 // pred_check
      _
    $region71: #{tpu_custom_call.1} parent=1 // pred_check_branch
      %2481 = sbr.rel (0) target = $region73
    $region72: #{tpu_custom_call.1} parent=1 // pred_region
      %s2483 = ssub.s32 448, 448
      %2484 = vsyncadd [#allocation3], %s2483
      %s2486 = sshll.u32 [#allocation2], 4
      %s2487 = int_to_ptr.vmem [resolvable:$true] %s2486
      %2489 = dma.vmem_to_hbm [thread:$0]  %s2487, 448, %s17, [#allocation3]
    $region73: #{tpu_custom_call.1} parent=1 // pred_fallthru
      _
    // Predicated region
    $region74: #{tpu_custom_call.1} parent=1 // pred_check
      _
    $region75: #{tpu_custom_call.1} parent=1 // pred_check_branch
      %2491 = sbr.rel (0) target = $region77
    $region76: #{tpu_custom_call.1} parent=1 // pred_region
      %s2493 = ssub.s32 128, 128
      %2494 = vsyncadd [#allocation5], %s2493
      %s2496 = sshll.u32 [#allocation4], 4
      %s2497 = int_to_ptr.vmem [resolvable:$true] %s2496
      %2499 = dma.vmem_to_hbm [thread:$0]  %s2497, 128, %s18, [#allocation5]
    $region77: #{tpu_custom_call.1} parent=1 // pred_fallthru
      _
    // Predicated region
    $region78: #{tpu_custom_call.1} parent=1 // pred_check
      _
    $region79: #{tpu_custom_call.1} parent=1 // pred_check_branch
      %2501 = sbr.rel (0) target = $region81
    $region80: #{tpu_custom_call.1} parent=1 // pred_region
      %2502 = dma.done [#allocation3], 448
    $region81: #{tpu_custom_call.1} parent=1 // pred_fallthru
      _
    // Predicated region
    $region82: #{tpu_custom_call.1} parent=1 // pred_check
      _
    $region83: #{tpu_custom_call.1} parent=1 // pred_check_branch
      %2504 = sbr.rel (0) target = $region85
    $region84: #{tpu_custom_call.1} parent=1 // pred_region
      %2505 = dma.done [#allocation5], 128
    $region85: #{tpu_custom_call.1} parent=1 // pred_fallthru
      _
    %2506 = vsyncpa [#allocation3], 1
    %2507 = vsyncpa [#allocation5], 1

// kernel: tpu_custom_call.1
$region0: #{tpu_custom_call.1}
  #allocation0 [shape = 'u32[]', space=smem, size = 0x4, offset = 0x4, fixed_abs, tag = 'smem constant byte address 0x4 - core index']
  #allocation1 [shape = 'u32[144,128]{1,0:T(1,128)}', space=vmem, size = 0x12000, scoped, tag = 'internal scratch']
  %s0 = inlined_call_operand.vmem [shape: bf16[8,784], index: 0, kind: input, shape index: {}]
  %s1 = inlined_call_operand.vmem [shape: bf16[8,10], index: 1, kind: input, shape index: {}]
  %s2 = inlined_call_operand.vmem [shape: bf16[8,32], index: 2, kind: input, shape index: {}]
  %s3 = inlined_call_operand.vmem [shape: bf16[784,256], index: 3, kind: input, shape index: {}]
  %s4 = inlined_call_operand.vmem [shape: bf16[10,256], index: 4, kind: input, shape index: {}]
  %s5 = inlined_call_operand.vmem [shape: f32[1,256], index: 5, kind: input, shape index: {}]
  %s6 = inlined_call_operand.vmem [shape: bf16[256,128], index: 6, kind: input, shape index: {}]
  %s7 = inlined_call_operand.vmem [shape: f32[1,128], index: 7, kind: input, shape index: {}]
  %s8 = inlined_call_operand.vmem [shape: bf16[128,128], index: 8, kind: input, shape index: {}]
  %s9 = inlined_call_operand.vmem [shape: f32[1,128], index: 9, kind: input, shape index: {}]
  %s10 = inlined_call_operand.vmem [shape: bf16[32,128], index: 10, kind: input, shape index: {}]
  %s11 = inlined_call_operand.vmem [shape: bf16[10,128], index: 11, kind: input, shape index: {}]
  %s12 = inlined_call_operand.vmem [shape: f32[1,128], index: 12, kind: input, shape index: {}]
  %s13 = inlined_call_operand.vmem [shape: bf16[128,256], index: 13, kind: input, shape index: {}]
  %s14 = inlined_call_operand.vmem [shape: f32[1,256], index: 14, kind: input, shape index: {}]
  %s15 = inlined_call_operand.vmem [shape: bf16[256,784], index: 15, kind: input, shape index: {}]
  %s16 = inlined_call_operand.vmem [shape: f32[1,784], index: 16, kind: input, shape index: {}]
  %s17 = inlined_call_operand.hbm [shape: bf16[8,784], index: 17, kind: output, shape index: {0}]
  %s18 = inlined_call_operand.hbm [shape: f32[8,128], index: 18, kind: output, shape index: {1}]
  %19 = xla_tuple %s17, %s18
  %s20 = sld [smem:[#allocation0]]
  $region86: #{tpu_custom_call.1} parent=0
    _
  %s22 = ssub.s32 1, %s20
  %s23 = scalar_select 0, %s22, %s20
  $region1: #{tpu_custom_call.1} parent=0
    #allocation2 [shape = 'u8[14336]{0}', space=vmem, size = 0x3800, scoped, tag = 'output window, operand 0, single buffered']
    #allocation3 [shape = 's32[1]{0}', space=sflag, size = 0x4, scoped, tag = 'scoped memory for tpu_custom_call.1']
    #allocation4 [shape = 'u8[4096]{0}', space=vmem, size = 0x1000, scoped, tag = 'output window, operand 1, single buffered']
    #allocation5 [shape = 's32[1]{0}', space=sflag, size = 0x4, scoped, tag = 'scoped memory for tpu_custom_call.1']
    %24 = vsyncpa [#allocation3], 0
    %25 = vsyncpa [#allocation5], 0
    // Predicated region
    $region2: #{tpu_custom_call.1} parent=1 // pred_check
      _
    $region3: #{tpu_custom_call.1} parent=1 // pred_check_branch
      %27 = sbr.rel (0) target = $region5
    $region4: #{tpu_custom_call.1} parent=1 // pred_region
      _
    $region5: #{tpu_custom_call.1} parent=1 // pred_fallthru
      _
    // Predicated region
    $region6: #{tpu_custom_call.1} parent=1 // pred_check
      _
    $region7: #{tpu_custom_call.1} parent=1 // pred_check_branch
      %29 = sbr.rel (0) target = $region9
    $region8: #{tpu_custom_call.1} parent=1 // pred_region
      _
    $region9: #{tpu_custom_call.1} parent=1 // pred_fallthru
      _
    // Predicated region
    $region10: #{tpu_custom_call.1} parent=1 // pred_check
      _
    $region11: #{tpu_custom_call.1} parent=1 // pred_check_branch
      %31 = sbr.rel (0) target = $region13
    $region12: #{tpu_custom_call.1} parent=1 // pred_region
      _
    $region13: #{tpu_custom_call.1} parent=1 // pred_fallthru
      _
    // Predicated region
    $region14: #{tpu_custom_call.1} parent=1 // pred_check
      _
    $region15: #{tpu_custom_call.1} parent=1 // pred_check_branch
      %33 = sbr.rel (0) target = $region17
    $region16: #{tpu_custom_call.1} parent=1 // pred_region
      _
    $region17: #{tpu_custom_call.1} parent=1 // pred_fallthru
      _
    // Predicated region
    $region18: #{tpu_custom_call.1} parent=1 // pred_check
      _
    $region19: #{tpu_custom_call.1} parent=1 // pred_check_branch
      %35 = sbr.rel (0) target = $region21
    $region20: #{tpu_custom_call.1} parent=1 // pred_region
      _
    $region21: #{tpu_custom_call.1} parent=1 // pred_fallthru
      _
    // Predicated region
    $region22: #{tpu_custom_call.1} parent=1 // pred_check
      _
    $region23: #{tpu_custom_call.1} parent=1 // pred_check_branch
      %37 = sbr.rel (0) target = $region25
    $region24: #{tpu_custom_call.1} parent=1 // pred_region
      _
    $region25: #{tpu_custom_call.1} parent=1 // pred_fallthru
      _
    // Predicated region
    $region26: #{tpu_custom_call.1} parent=1 // pred_check
      _
    $region27: #{tpu_custom_call.1} parent=1 // pred_check_branch
      %39 = sbr.rel (0) target = $region29
    $region28: #{tpu_custom_call.1} parent=1 // pred_region
      _
    $region29: #{tpu_custom_call.1} parent=1 // pred_fallthru
      _
    // Predicated region
    $region30: #{tpu_custom_call.1} parent=1 // pred_check
      _
    $region31: #{tpu_custom_call.1} parent=1 // pred_check_branch
      %41 = sbr.rel (0) target = $region33
    $region32: #{tpu_custom_call.1} parent=1 // pred_region
      _
    $region33: #{tpu_custom_call.1} parent=1 // pred_fallthru
      _
    // Predicated region
    $region34: #{tpu_custom_call.1} parent=1 // pred_check
      _
    $region35: #{tpu_custom_call.1} parent=1 // pred_check_branch
      %43 = sbr.rel (0) target = $region37
    $region36: #{tpu_custom_call.1} parent=1 // pred_region
      _
    $region37: #{tpu_custom_call.1} parent=1 // pred_fallthru
      _
    // Predicated region
    $region38: #{tpu_custom_call.1} parent=1 // pred_check
      _
    $region39: #{tpu_custom_call.1} parent=1 // pred_check_branch
      %45 = sbr.rel (0) target = $region41
    $region40: #{tpu_custom_call.1} parent=1 // pred_region
      _
    $region41: #{tpu_custom_call.1} parent=1 // pred_fallthru
      _
    // Predicated region
    $region42: #{tpu_custom_call.1} parent=1 // pred_check
      _
    $region43: #{tpu_custom_call.1} parent=1 // pred_check_branch
      %47 = sbr.rel (0) target = $region45
    $region44: #{tpu_custom_call.1} parent=1 // pred_region
      _
    $region45: #{tpu_custom_call.1} parent=1 // pred_fallthru
      _
    // Predicated region
    $region46: #{tpu_custom_call.1} parent=1 // pred_check
      _
    $region47: #{tpu_custom_call.1} parent=1 // pred_check_branch
      %49 = sbr.rel (0) target = $region49
    $region48: #{tpu_custom_call.1} parent=1 // pred_region
      _
    $region49: #{tpu_custom_call.1} parent=1 // pred_fallthru
      _
    // Predicated region
    $region50: #{tpu_custom_call.1} parent=1 // pred_check
      _
    $region51: #{tpu_custom_call.1} parent=1 // pred_check_branch
      %51 = sbr.rel (0) target = $region53
    $region52: #{tpu_custom_call.1} parent=1 // pred_region
      _
    $region53: #{tpu_custom_call.1} parent=1 // pred_fallthru
      _
    // Predicated region
    $region54: #{tpu_custom_call.1} parent=1 // pred_check
      _
    $region55: #{tpu_custom_call.1} parent=1 // pred_check_branch
      %53 = sbr.rel (0) target = $region57
    $region56: #{tpu_custom_call.1} parent=1 // pred_region
      _
    $region57: #{tpu_custom_call.1} parent=1 // pred_fallthru
      _
    // Predicated region
    $region58: #{tpu_custom_call.1} parent=1 // pred_check
      _
    $region59: #{tpu_custom_call.1} parent=1 // pred_check_branch
      %55 = sbr.rel (0) target = $region61
    $region60: #{tpu_custom_call.1} parent=1 // pred_region
      _
    $region61: #{tpu_custom_call.1} parent=1 // pred_fallthru
      _
    // Predicated region
    $region62: #{tpu_custom_call.1} parent=1 // pred_check
      _
    $region63: #{tpu_custom_call.1} parent=1 // pred_check_branch
      %57 = sbr.rel (0) target = $region65
    $region64: #{tpu_custom_call.1} parent=1 // pred_region
      _
    $region65: #{tpu_custom_call.1} parent=1 // pred_fallthru
      _
    // Predicated region
    $region66: #{tpu_custom_call.1} parent=1 // pred_check
      _
    $region67: #{tpu_custom_call.1} parent=1 // pred_check_branch
      %59 = sbr.rel (0) target = $region69
    $region68: #{tpu_custom_call.1} parent=1 // pred_region
      _
    $region69: #{tpu_custom_call.1} parent=1 // pred_fallthru
      _
    %v61 = vld [vmem:[%s0] sm:$0xff]
    %v62 = vld [vmem:[%s0 + $0x8] sm:$0xff]
    %v63 = vld [vmem:[%s0 + $0x10] sm:$0xff]
    %v64 = vld [vmem:[%s0 + $0x18] sm:$0xf]
    %v65 = vld [vmem:[%s1] sm:$0xf]
    %v66 = vld [vmem:[%s3] sm:$0xff]
    %v67 = vld [vmem:[%s3 + $0x8] sm:$0xff]
    %v68 = vld [vmem:[%s3 + $0x10] sm:$0xff]
    %v69 = vld [vmem:[%s3 + $0x18] sm:$0xff]
    %v70 = vld [vmem:[%s3 + $0x20] sm:$0xff]
    %v71 = vld [vmem:[%s3 + $0x28] sm:$0xff]
    %v72 = vld [vmem:[%s3 + $0x30] sm:$0xff]
    %v73 = vld [vmem:[%s3 + $0x38] sm:$0xff]
    %v74 = vld [vmem:[%s3 + $0x40] sm:$0xff]
    %v75 = vld [vmem:[%s3 + $0x48] sm:$0xff]
    %v76 = vld [vmem:[%s3 + $0x50] sm:$0xff]
    %v77 = vld [vmem:[%s3 + $0x58] sm:$0xff]
    %v78 = vld [vmem:[%s3 + $0x60] sm:$0xff]
    %v79 = vld [vmem:[%s3 + $0x68] sm:$0xff]
    %v80 = vld [vmem:[%s3 + $0x70] sm:$0xff]
    %v81 = vld [vmem:[%s3 + $0x78] sm:$0xff]
    %v82 = vld [vmem:[%s3 + $0x80] sm:$0xff]
    %v83 = vld [vmem:[%s3 + $0x88] sm:$0xff]
    %v84 = vld [vmem:[%s3 + $0x90] sm:$0xff]
    %v85 = vld [vmem:[%s3 + $0x98] sm:$0xff]
    %v86 = vld [vmem:[%s3 + $0xa0] sm:$0xff]
    %v87 = vld [vmem:[%s3 + $0xa8] sm:$0xff]
    %v88 = vld [vmem:[%s3 + $0xb0] sm:$0xff]
    %v89 = vld [vmem:[%s3 + $0xb8] sm:$0xff]
    %v90 = vld [vmem:[%s3 + $0xc0] sm:$0xff]
    %v91 = vld [vmem:[%s3 + $0xc8] sm:$0xff]
    %v92 = vld [vmem:[%s3 + $0xd0] sm:$0xff]
    %v93 = vld [vmem:[%s3 + $0xd8] sm:$0xff]
    %v94 = vld [vmem:[%s3 + $0xe0] sm:$0xff]
    %v95 = vld [vmem:[%s3 + $0xe8] sm:$0xff]
    %v96 = vld [vmem:[%s3 + $0xf0] sm:$0xff]
    %v97 = vld [vmem:[%s3 + $0xf8] sm:$0xff]
    %v98 = vld [vmem:[%s3 + $0x100] sm:$0xff]
    %v99 = vld [vmem:[%s3 + $0x108] sm:$0xff]
    %v100 = vld [vmem:[%s3 + $0x110] sm:$0xff]
    %v101 = vld [vmem:[%s3 + $0x118] sm:$0xff]
    %v102 = vld [vmem:[%s3 + $0x120] sm:$0xff]
    %v103 = vld [vmem:[%s3 + $0x128] sm:$0xff]
    %v104 = vld [vmem:[%s3 + $0x130] sm:$0xff]
    %v105 = vld [vmem:[%s3 + $0x138] sm:$0xff]
    %v106 = vld [vmem:[%s3 + $0x140] sm:$0xff]
    %v107 = vld [vmem:[%s3 + $0x148] sm:$0xff]
    %v108 = vld [vmem:[%s3 + $0x150] sm:$0xff]
    %v109 = vld [vmem:[%s3 + $0x158] sm:$0xff]
    %v110 = vld [vmem:[%s3 + $0x160] sm:$0xff]
    %v111 = vld [vmem:[%s3 + $0x168] sm:$0xff]
    %v112 = vld [vmem:[%s3 + $0x170] sm:$0xff]
    %v113 = vld [vmem:[%s3 + $0x178] sm:$0xff]
    %v114 = vld [vmem:[%s3 + $0x180] sm:$0xff]
    %v115 = vld [vmem:[%s3 + $0x188] sm:$0xff]
    %v116 = vld [vmem:[%s3 + $0x190] sm:$0xff]
    %v117 = vld [vmem:[%s3 + $0x198] sm:$0xff]
    %v118 = vld [vmem:[%s3 + $0x1a0] sm:$0xff]
    %v119 = vld [vmem:[%s3 + $0x1a8] sm:$0xff]
    %v120 = vld [vmem:[%s3 + $0x1b0] sm:$0xff]
    %v121 = vld [vmem:[%s3 + $0x1b8] sm:$0xff]
    %v122 = vld [vmem:[%s3 + $0x1c0] sm:$0xff]
    %v123 = vld [vmem:[%s3 + $0x1c8] sm:$0xff]
    %v124 = vld [vmem:[%s3 + $0x1d0] sm:$0xff]
    %v125 = vld [vmem:[%s3 + $0x1d8] sm:$0xff]
    %v126 = vld [vmem:[%s3 + $0x1e0] sm:$0xff]
    %v127 = vld [vmem:[%s3 + $0x1e8] sm:$0xff]
    %v128 = vld [vmem:[%s3 + $0x1f0] sm:$0xff]
    %v129 = vld [vmem:[%s3 + $0x1f8] sm:$0xff]
    %v130 = vld [vmem:[%s3 + $0x200] sm:$0xff]
    %v131 = vld [vmem:[%s3 + $0x208] sm:$0xff]
    %v132 = vld [vmem:[%s3 + $0x210] sm:$0xff]
    %v133 = vld [vmem:[%s3 + $0x218] sm:$0xff]
    %v134 = vld [vmem:[%s3 + $0x220] sm:$0xff]
    %v135 = vld [vmem:[%s3 + $0x228] sm:$0xff]
    %v136 = vld [vmem:[%s3 + $0x230] sm:$0xff]
    %v137 = vld [vmem:[%s3 + $0x238] sm:$0xff]
    %v138 = vld [vmem:[%s3 + $0x240] sm:$0xff]
    %v139 = vld [vmem:[%s3 + $0x248] sm:$0xff]
    %v140 = vld [vmem:[%s3 + $0x250] sm:$0xff]
    %v141 = vld [vmem:[%s3 + $0x258] sm:$0xff]
    %v142 = vld [vmem:[%s3 + $0x260] sm:$0xff]
    %v143 = vld [vmem:[%s3 + $0x268] sm:$0xff]
    %v144 = vld [vmem:[%s3 + $0x270] sm:$0xff]
    %v145 = vld [vmem:[%s3 + $0x278] sm:$0xff]
    %v146 = vld [vmem:[%s3 + $0x280] sm:$0xff]
    %v147 = vld [vmem:[%s3 + $0x288] sm:$0xff]
    %v148 = vld [vmem:[%s3 + $0x290] sm:$0xff]
    %v149 = vld [vmem:[%s3 + $0x298] sm:$0xff]
    %v150 = vld [vmem:[%s3 + $0x2a0] sm:$0xff]
    %v151 = vld [vmem:[%s3 + $0x2a8] sm:$0xff]
    %v152 = vld [vmem:[%s3 + $0x2b0] sm:$0xff]
    %v153 = vld [vmem:[%s3 + $0x2b8] sm:$0xff]
    %v154 = vld [vmem:[%s3 + $0x2c0] sm:$0xff]
    %v155 = vld [vmem:[%s3 + $0x2c8] sm:$0xff]
    %v156 = vld [vmem:[%s3 + $0x2d0] sm:$0xff]
    %v157 = vld [vmem:[%s3 + $0x2d8] sm:$0xff]
    %v158 = vld [vmem:[%s3 + $0x2e0] sm:$0xff]
    %v159 = vld [vmem:[%s3 + $0x2e8] sm:$0xff]
    %v160 = vld [vmem:[%s3 + $0x2f0] sm:$0xff]
    %v161 = vld [vmem:[%s3 + $0x2f8] sm:$0xff]
    %v162 = vld [vmem:[%s3 + $0x300] sm:$0xff]
    %v163 = vld [vmem:[%s3 + $0x308] sm:$0xff]
    %v164 = vld [vmem:[%s4] sm:$0xff]
    %v165 = vld [vmem:[%s4 + $0x8] sm:$0x11]
    %v168 = vunpack.c.l.b16 %v164
    %v169 = vunpack.c.h.b16 %v164
    %v170 = vunpack.c.l.b16 %v165
    %v171 = vunpack.c.h.b16 %v165
    %v172 = vpack.c.b16 %v170, %v168
    %v173 = vpack.c.b16 %v171, %v169
    %vm174 = vcmask 80896
    %v176 = vsel %vm174, %v65, 0
    %vm178 = vcmask 1044480
    %v180 = vsel %vm178, %v172, 0
    %v183 = vsel %vm178, %v173, 0
    %185 = vmatprep.subr.bf16.mxu0 0
    %186 = vmatpush1.bf16.msra.mxu0 0
    %187 = vmatprep.subr.bf16.mxu0 0
    %188 = vmatpush1.bf16.msra.mxu0 0
    %189 = vmatprep.subr.bf16.mxu0 0
    %190 = vmatpush1.bf16.msra.mxu0 0
    %191 = vmatprep.subr.bf16.mxu0 0
    %192 = vmatpush1.bf16.msra.mxu0 0
    %193 = vmatprep.subr.bf16.mxu0 0
    %194 = vmatpush1.bf16.msra.mxu0 0
    %195 = vmatprep.subr.bf16.mxu0 0
    %196 = vmatpush1.bf16.msra.mxu0 0
    %197 = vmatprep.subr.bf16.mxu0 0
    %198 = vmatpush1.bf16.msra.mxu0 0
    %199 = vmatprep.subr.bf16.mxu0 %v183
    %200 = vmatpush1.bf16.msra.mxu0 %v180
    %201 = vmatprep.subr.bf16.mxu0 0
    %202 = vmatpush2.bf16.msra.mxu0 0
    %203 = vmatprep.subr.bf16.mxu0 0
    %204 = vmatpush2.bf16.msra.mxu0 0
    %205 = vmatprep.subr.bf16.mxu0 0
    %206 = vmatpush2.bf16.msra.mxu0 0
    %207 = vmatprep.subr.bf16.mxu0 0
    %208 = vmatpush2.bf16.msra.mxu0 0
    %209 = vmatprep.subr.bf16.mxu0 0
    %210 = vmatpush2.bf16.msra.mxu0 0
    %211 = vmatprep.subr.bf16.mxu0 0
    %212 = vmatpush2.bf16.msra.mxu0 0
    %213 = vmatprep.subr.bf16.mxu0 0
    %214 = vmatpush2.bf16.msra.mxu0 0
    %215 = vmatprep.subr.bf16.mxu0 0
    %216 = vmatpush2.bf16.msra.mxu0 0
    %217 = vmatprep.mubr.bf16.mxu0 0
    %218 = vmatmul.mubr.bf16.gmra.mxu0 %v176
    %v219 = vpop.f32.mrf.mxu0
    %v220 = vadd.f32 0.0, %v219
    %v221 = vpop.f32.mrf.mxu0
    %v222 = vadd.f32 0.0, %v221
    %v223 = vpop.f32.mrf.mxu0
    %v224 = vpop.f32.mrf.mxu0
    %225 = vdwg.mxu0
    %v230 = vunpack.c.l.b16 %v61
    %v231 = vunpack.c.h.b16 %v61
    %v232 = vunpack.c.l.b16 %v62
    %v233 = vunpack.c.h.b16 %v62
    %v234 = vunpack.c.l.b16 %v63
    %v235 = vunpack.c.h.b16 %v63
    %v236 = vunpack.c.l.b16 %v64
    %v237 = vpack.c.b16 %v230, %v230
    %v238 = vpack.c.b16 %v231, %v231
    %v239 = vpack.c.b16 %v232, %v232
    %v240 = vpack.c.b16 %v233, %v233
    %v241 = vpack.c.b16 %v234, %v234
    %v242 = vpack.c.b16 %v235, %v235
    %v243 = vpack.c.b16 %v236, %v236
    %v348 = vunpack.c.l.b16 %v66
    %v349 = vunpack.c.h.b16 %v66
    %v350 = vunpack.c.l.b16 %v67
    %v351 = vunpack.c.h.b16 %v67
    %v352 = vunpack.c.l.b16 %v68
    %v353 = vunpack.c.h.b16 %v68
    %v354 = vunpack.c.l.b16 %v69
    %v355 = vunpack.c.h.b16 %v69
    %v356 = vunpack.c.l.b16 %v70
    %v357 = vunpack.c.h.b16 %v70
    %v358 = vunpack.c.l.b16 %v71
    %v359 = vunpack.c.h.b16 %v71
    %v360 = vunpack.c.l.b16 %v72
    %v361 = vunpack.c.h.b16 %v72
    %v362 = vunpack.c.l.b16 %v73
    %v363 = vunpack.c.h.b16 %v73
    %v364 = vunpack.c.l.b16 %v74
    %v365 = vunpack.c.h.b16 %v74
    %v366 = vunpack.c.l.b16 %v75
    %v367 = vunpack.c.h.b16 %v75
    %v368 = vunpack.c.l.b16 %v76
    %v369 = vunpack.c.h.b16 %v76
    %v370 = vunpack.c.l.b16 %v77
    %v371 = vunpack.c.h.b16 %v77
    %v372 = vunpack.c.l.b16 %v78
    %v373 = vunpack.c.h.b16 %v78
    %v374 = vunpack.c.l.b16 %v79
    %v375 = vunpack.c.h.b16 %v79
    %v376 = vunpack.c.l.b16 %v80
    %v377 = vunpack.c.h.b16 %v80
    %v378 = vunpack.c.l.b16 %v81
    %v379 = vunpack.c.h.b16 %v81
    %v380 = vunpack.c.l.b16 %v82
    %v381 = vunpack.c.h.b16 %v82
    %v382 = vunpack.c.l.b16 %v83
    %v383 = vunpack.c.h.b16 %v83
    %v384 = vunpack.c.l.b16 %v84
    %v385 = vunpack.c.h.b16 %v84
    %v386 = vunpack.c.l.b16 %v85
    %v387 = vunpack.c.h.b16 %v85
    %v388 = vunpack.c.l.b16 %v86
    %v389 = vunpack.c.h.b16 %v86
    %v390 = vunpack.c.l.b16 %v87
    %v391 = vunpack.c.h.b16 %v87
    %v392 = vunpack.c.l.b16 %v88
    %v393 = vunpack.c.h.b16 %v88
    %v394 = vunpack.c.l.b16 %v89
    %v395 = vunpack.c.h.b16 %v89
    %v396 = vunpack.c.l.b16 %v90
    %v397 = vunpack.c.h.b16 %v90
    %v398 = vunpack.c.l.b16 %v91
    %v399 = vunpack.c.h.b16 %v91
    %v400 = vunpack.c.l.b16 %v92
    %v401 = vunpack.c.h.b16 %v92
    %v402 = vunpack.c.l.b16 %v93
    %v403 = vunpack.c.h.b16 %v93
    %v404 = vunpack.c.l.b16 %v94
    %v405 = vunpack.c.h.b16 %v94
    %v406 = vunpack.c.l.b16 %v95
    %v407 = vunpack.c.h.b16 %v95
    %v408 = vunpack.c.l.b16 %v96
    %v409 = vunpack.c.h.b16 %v96
    %v410 = vunpack.c.l.b16 %v97
    %v411 = vunpack.c.h.b16 %v97
    %v412 = vunpack.c.l.b16 %v98
    %v413 = vunpack.c.h.b16 %v98
    %v414 = vunpack.c.l.b16 %v99
    %v415 = vunpack.c.h.b16 %v99
    %v416 = vunpack.c.l.b16 %v100
    %v417 = vunpack.c.h.b16 %v100
    %v418 = vunpack.c.l.b16 %v101
    %v419 = vunpack.c.h.b16 %v101
    %v420 = vunpack.c.l.b16 %v102
    %v421 = vunpack.c.h.b16 %v102
    %v422 = vunpack.c.l.b16 %v103
    %v423 = vunpack.c.h.b16 %v103
    %v424 = vunpack.c.l.b16 %v104
    %v425 = vunpack.c.h.b16 %v104
    %v426 = vunpack.c.l.b16 %v105
    %v427 = vunpack.c.h.b16 %v105
    %v428 = vunpack.c.l.b16 %v106
    %v429 = vunpack.c.h.b16 %v106
    %v430 = vunpack.c.l.b16 %v107
    %v431 = vunpack.c.h.b16 %v107
    %v432 = vunpack.c.l.b16 %v108
    %v433 = vunpack.c.h.b16 %v108
    %v434 = vunpack.c.l.b16 %v109
    %v435 = vunpack.c.h.b16 %v109
    %v436 = vunpack.c.l.b16 %v110
    %v437 = vunpack.c.h.b16 %v110
    %v438 = vunpack.c.l.b16 %v111
    %v439 = vunpack.c.h.b16 %v111
    %v440 = vunpack.c.l.b16 %v112
    %v441 = vunpack.c.h.b16 %v112
    %v442 = vunpack.c.l.b16 %v113
    %v443 = vunpack.c.h.b16 %v113
    %v444 = vunpack.c.l.b16 %v114
    %v445 = vunpack.c.h.b16 %v114
    %v446 = vunpack.c.l.b16 %v115
    %v447 = vunpack.c.h.b16 %v115
    %v448 = vunpack.c.l.b16 %v116
    %v449 = vunpack.c.h.b16 %v116
    %v450 = vunpack.c.l.b16 %v117
    %v451 = vunpack.c.h.b16 %v117
    %v452 = vunpack.c.l.b16 %v118
    %v453 = vunpack.c.h.b16 %v118
    %v454 = vunpack.c.l.b16 %v119
    %v455 = vunpack.c.h.b16 %v119
    %v456 = vunpack.c.l.b16 %v120
    %v457 = vunpack.c.h.b16 %v120
    %v458 = vunpack.c.l.b16 %v121
    %v459 = vunpack.c.h.b16 %v121
    %v460 = vunpack.c.l.b16 %v122
    %v461 = vunpack.c.h.b16 %v122
    %v462 = vunpack.c.l.b16 %v123
    %v463 = vunpack.c.h.b16 %v123
    %v464 = vunpack.c.l.b16 %v124
    %v465 = vunpack.c.h.b16 %v124
    %v466 = vunpack.c.l.b16 %v125
    %v467 = vunpack.c.h.b16 %v125
    %v468 = vunpack.c.l.b16 %v126
    %v469 = vunpack.c.h.b16 %v126
    %v470 = vunpack.c.l.b16 %v127
    %v471 = vunpack.c.h.b16 %v127
    %v472 = vunpack.c.l.b16 %v128
    %v473 = vunpack.c.h.b16 %v128
    %v474 = vunpack.c.l.b16 %v129
    %v475 = vunpack.c.h.b16 %v129
    %v476 = vunpack.c.l.b16 %v130
    %v477 = vunpack.c.h.b16 %v130
    %v478 = vunpack.c.l.b16 %v131
    %v479 = vunpack.c.h.b16 %v131
    %v480 = vunpack.c.l.b16 %v132
    %v481 = vunpack.c.h.b16 %v132
    %v482 = vunpack.c.l.b16 %v133
    %v483 = vunpack.c.h.b16 %v133
    %v484 = vunpack.c.l.b16 %v134
    %v485 = vunpack.c.h.b16 %v134
    %v486 = vunpack.c.l.b16 %v135
    %v487 = vunpack.c.h.b16 %v135
    %v488 = vunpack.c.l.b16 %v136
    %v489 = vunpack.c.h.b16 %v136
    %v490 = vunpack.c.l.b16 %v137
    %v491 = vunpack.c.h.b16 %v137
    %v492 = vunpack.c.l.b16 %v138
    %v493 = vunpack.c.h.b16 %v138
    %v494 = vunpack.c.l.b16 %v139
    %v495 = vunpack.c.h.b16 %v139
    %v496 = vunpack.c.l.b16 %v140
    %v497 = vunpack.c.h.b16 %v140
    %v498 = vunpack.c.l.b16 %v141
    %v499 = vunpack.c.h.b16 %v141
    %v500 = vunpack.c.l.b16 %v142
    %v501 = vunpack.c.h.b16 %v142
    %v502 = vunpack.c.l.b16 %v143
    %v503 = vunpack.c.h.b16 %v143
    %v504 = vunpack.c.l.b16 %v144
    %v505 = vunpack.c.h.b16 %v144
    %v506 = vunpack.c.l.b16 %v145
    %v507 = vunpack.c.h.b16 %v145
    %v508 = vunpack.c.l.b16 %v146
    %v509 = vunpack.c.h.b16 %v146
    %v510 = vunpack.c.l.b16 %v147
    %v511 = vunpack.c.h.b16 %v147
    %v512 = vunpack.c.l.b16 %v148
    %v513 = vunpack.c.h.b16 %v148
    %v514 = vunpack.c.l.b16 %v149
    %v515 = vunpack.c.h.b16 %v149
    %v516 = vunpack.c.l.b16 %v150
    %v517 = vunpack.c.h.b16 %v150
    %v518 = vunpack.c.l.b16 %v151
    %v519 = vunpack.c.h.b16 %v151
    %v520 = vunpack.c.l.b16 %v152
    %v521 = vunpack.c.h.b16 %v152
    %v522 = vunpack.c.l.b16 %v153
    %v523 = vunpack.c.h.b16 %v153
    %v524 = vunpack.c.l.b16 %v154
    %v525 = vunpack.c.h.b16 %v154
    %v526 = vunpack.c.l.b16 %v155
    %v527 = vunpack.c.h.b16 %v155
    %v528 = vunpack.c.l.b16 %v156
    %v529 = vunpack.c.h.b16 %v156
    %v530 = vunpack.c.l.b16 %v157
    %v531 = vunpack.c.h.b16 %v157
    %v532 = vunpack.c.l.b16 %v158
    %v533 = vunpack.c.h.b16 %v158
    %v534 = vunpack.c.l.b16 %v159
    %v535 = vunpack.c.h.b16 %v159
    %v536 = vunpack.c.l.b16 %v160
    %v537 = vunpack.c.h.b16 %v160
    %v538 = vunpack.c.l.b16 %v161
    %v539 = vunpack.c.h.b16 %v161
    %v540 = vunpack.c.l.b16 %v162
    %v541 = vunpack.c.h.b16 %v162
    %v542 = vunpack.c.l.b16 %v163
    %v543 = vunpack.c.h.b16 %v163
    %v544 = vpack.c.b16 %v350, %v348
    %v545 = vpack.c.b16 %v351, %v349
    %v546 = vpack.c.b16 %v354, %v352
    %v547 = vpack.c.b16 %v355, %v353
    %v548 = vpack.c.b16 %v358, %v356
    %v549 = vpack.c.b16 %v359, %v357
    %v550 = vpack.c.b16 %v362, %v360
    %v551 = vpack.c.b16 %v363, %v361
    %v552 = vpack.c.b16 %v366, %v364
    %v553 = vpack.c.b16 %v367, %v365
    %v554 = vpack.c.b16 %v370, %v368
    %v555 = vpack.c.b16 %v371, %v369
    %v556 = vpack.c.b16 %v374, %v372
    %v557 = vpack.c.b16 %v375, %v373
    %v558 = vpack.c.b16 %v378, %v376
    %v559 = vpack.c.b16 %v379, %v377
    %v560 = vpack.c.b16 %v382, %v380
    %v561 = vpack.c.b16 %v383, %v381
    %v562 = vpack.c.b16 %v386, %v384
    %v563 = vpack.c.b16 %v387, %v385
    %v564 = vpack.c.b16 %v390, %v388
    %v565 = vpack.c.b16 %v391, %v389
    %v566 = vpack.c.b16 %v394, %v392
    %v567 = vpack.c.b16 %v395, %v393
    %v568 = vpack.c.b16 %v398, %v396
    %v569 = vpack.c.b16 %v399, %v397
    %v570 = vpack.c.b16 %v402, %v400
    %v571 = vpack.c.b16 %v403, %v401
    %v572 = vpack.c.b16 %v406, %v404
    %v573 = vpack.c.b16 %v407, %v405
    %v574 = vpack.c.b16 %v410, %v408
    %v575 = vpack.c.b16 %v411, %v409
    %v576 = vpack.c.b16 %v414, %v412
    %v577 = vpack.c.b16 %v415, %v413
    %v578 = vpack.c.b16 %v418, %v416
    %v579 = vpack.c.b16 %v419, %v417
    %v580 = vpack.c.b16 %v422, %v420
    %v581 = vpack.c.b16 %v423, %v421
    %v582 = vpack.c.b16 %v426, %v424
    %v583 = vpack.c.b16 %v427, %v425
    %v584 = vpack.c.b16 %v430, %v428
    %v585 = vpack.c.b16 %v431, %v429
    %v586 = vpack.c.b16 %v434, %v432
    %v587 = vpack.c.b16 %v435, %v433
    %v588 = vpack.c.b16 %v438, %v436
    %v589 = vpack.c.b16 %v439, %v437
    %v590 = vpack.c.b16 %v442, %v440
    %v591 = vpack.c.b16 %v443, %v441
    %v592 = vpack.c.b16 %v446, %v444
    %v593 = vpack.c.b16 %v447, %v445
    %v594 = vpack.c.b16 %v450, %v448
    %v595 = vpack.c.b16 %v451, %v449
    %v596 = vpack.c.b16 %v454, %v452
    %v597 = vpack.c.b16 %v455, %v453
    %v598 = vpack.c.b16 %v458, %v456
    %v599 = vpack.c.b16 %v459, %v457
    %v600 = vpack.c.b16 %v462, %v460
    %v601 = vpack.c.b16 %v463, %v461
    %v602 = vpack.c.b16 %v466, %v464
    %v603 = vpack.c.b16 %v467, %v465
    %v604 = vpack.c.b16 %v470, %v468
    %v605 = vpack.c.b16 %v471, %v469
    %v606 = vpack.c.b16 %v474, %v472
    %v607 = vpack.c.b16 %v475, %v473
    %v608 = vpack.c.b16 %v478, %v476
    %v609 = vpack.c.b16 %v479, %v477
    %v610 = vpack.c.b16 %v482, %v480
    %v611 = vpack.c.b16 %v483, %v481
    %v612 = vpack.c.b16 %v486, %v484
    %v613 = vpack.c.b16 %v487, %v485
    %v614 = vpack.c.b16 %v490, %v488
    %v615 = vpack.c.b16 %v491, %v489
    %v616 = vpack.c.b16 %v494, %v492
    %v617 = vpack.c.b16 %v495, %v493
    %v618 = vpack.c.b16 %v498, %v496
    %v619 = vpack.c.b16 %v499, %v497
    %v620 = vpack.c.b16 %v502, %v500
    %v621 = vpack.c.b16 %v503, %v501
    %v622 = vpack.c.b16 %v506, %v504
    %v623 = vpack.c.b16 %v507, %v505
    %v624 = vpack.c.b16 %v510, %v508
    %v625 = vpack.c.b16 %v511, %v509
    %v626 = vpack.c.b16 %v514, %v512
    %v627 = vpack.c.b16 %v515, %v513
    %v628 = vpack.c.b16 %v518, %v516
    %v629 = vpack.c.b16 %v519, %v517
    %v630 = vpack.c.b16 %v522, %v520
    %v631 = vpack.c.b16 %v523, %v521
    %v632 = vpack.c.b16 %v526, %v524
    %v633 = vpack.c.b16 %v527, %v525
    %v634 = vpack.c.b16 %v530, %v528
    %v635 = vpack.c.b16 %v531, %v529
    %v636 = vpack.c.b16 %v534, %v532
    %v637 = vpack.c.b16 %v535, %v533
    %v638 = vpack.c.b16 %v538, %v536
    %v639 = vpack.c.b16 %v539, %v537
    %v640 = vpack.c.b16 %v542, %v540
    %v641 = vpack.c.b16 %v543, %v541
    %vm740 = vcmask 130048
    %v742 = vsel %vm740, %v243, 0
    %744 = vmatprep.subr.bf16.mxu0 %v559
    %745 = vmatpush1.bf16.msra.mxu0 %v558
    %746 = vmatprep.subr.bf16.mxu0 %v557
    %747 = vmatpush1.bf16.msra.mxu0 %v556
    %748 = vmatprep.subr.bf16.mxu0 %v555
    %749 = vmatpush1.bf16.msra.mxu0 %v554
    %750 = vmatprep.subr.bf16.mxu0 %v553
    %751 = vmatpush1.bf16.msra.mxu0 %v552
    %752 = vmatprep.subr.bf16.mxu0 %v551
    %753 = vmatpush1.bf16.msra.mxu0 %v550
    %754 = vmatprep.subr.bf16.mxu0 %v549
    %755 = vmatpush1.bf16.msra.mxu0 %v548
    %756 = vmatprep.subr.bf16.mxu0 %v547
    %757 = vmatpush1.bf16.msra.mxu0 %v546
    %758 = vmatprep.subr.bf16.mxu0 %v545
    %759 = vmatpush1.bf16.msra.mxu0 %v544
    %760 = vmatprep.subr.bf16.mxu0 %v575
    %761 = vmatpush2.bf16.msra.mxu0 %v574
    %762 = vmatprep.subr.bf16.mxu0 %v573
    %763 = vmatpush2.bf16.msra.mxu0 %v572
    %764 = vmatprep.subr.bf16.mxu0 %v571
    %765 = vmatpush2.bf16.msra.mxu0 %v570
    %766 = vmatprep.subr.bf16.mxu0 %v569
    %767 = vmatpush2.bf16.msra.mxu0 %v568
    %768 = vmatprep.subr.bf16.mxu0 %v567
    %769 = vmatpush2.bf16.msra.mxu0 %v566
    %770 = vmatprep.subr.bf16.mxu0 %v565
    %771 = vmatpush2.bf16.msra.mxu0 %v564
    %772 = vmatprep.subr.bf16.mxu0 %v563
    %773 = vmatpush2.bf16.msra.mxu0 %v562
    %774 = vmatprep.subr.bf16.mxu0 %v561
    %775 = vmatpush2.bf16.msra.mxu0 %v560
    %776 = vmatprep.mubr.bf16.mxu0 %v238
    %777 = vmatmul.mubr.bf16.gmra.mxu0 %v237
    %v778 = vpop.f32.mrf.mxu0
    %v779 = vadd.f32 %v220, %v778
    %v780 = vpop.f32.mrf.mxu0
    %v781 = vadd.f32 %v222, %v780
    %v782 = vpop.f32.mrf.mxu0
    %v783 = vpop.f32.mrf.mxu0
    %784 = vdwg.mxu0
    %785 = vmatprep.subr.bf16.mxu0 %v591
    %786 = vmatpush1.bf16.msra.mxu0 %v590
    %787 = vmatprep.subr.bf16.mxu0 %v589
    %788 = vmatpush1.bf16.msra.mxu0 %v588
    %789 = vmatprep.subr.bf16.mxu0 %v587
    %790 = vmatpush1.bf16.msra.mxu0 %v586
    %791 = vmatprep.subr.bf16.mxu0 %v585
    %792 = vmatpush1.bf16.msra.mxu0 %v584
    %793 = vmatprep.subr.bf16.mxu0 %v583
    %794 = vmatpush1.bf16.msra.mxu0 %v582
    %795 = vmatprep.subr.bf16.mxu0 %v581
    %796 = vmatpush1.bf16.msra.mxu0 %v580
    %797 = vmatprep.subr.bf16.mxu0 %v579
    %798 = vmatpush1.bf16.msra.mxu0 %v578
    %799 = vmatprep.subr.bf16.mxu0 %v577
    %800 = vmatpush1.bf16.msra.mxu0 %v576
    %801 = vmatprep.subr.bf16.mxu0 %v607
    %802 = vmatpush2.bf16.msra.mxu0 %v606
    %803 = vmatprep.subr.bf16.mxu0 %v605
    %804 = vmatpush2.bf16.msra.mxu0 %v604
    %805 = vmatprep.subr.bf16.mxu0 %v603
    %806 = vmatpush2.bf16.msra.mxu0 %v602
    %807 = vmatprep.subr.bf16.mxu0 %v601
    %808 = vmatpush2.bf16.msra.mxu0 %v600
    %809 = vmatprep.subr.bf16.mxu0 %v599
    %810 = vmatpush2.bf16.msra.mxu0 %v598
    %811 = vmatprep.subr.bf16.mxu0 %v597
    %812 = vmatpush2.bf16.msra.mxu0 %v596
    %813 = vmatprep.subr.bf16.mxu0 %v595
    %814 = vmatpush2.bf16.msra.mxu0 %v594
    %815 = vmatprep.subr.bf16.mxu0 %v593
    %816 = vmatpush2.bf16.msra.mxu0 %v592
    %817 = vmatprep.mubr.bf16.mxu0 %v240
    %818 = vmatmul.mubr.bf16.gmra.mxu0 %v239
    %v819 = vpop.f32.mrf.mxu0
    %v820 = vadd.f32 %v779, %v819
    %v821 = vpop.f32.mrf.mxu0
    %v822 = vadd.f32 %v781, %v821
    %v823 = vpop.f32.mrf.mxu0
    %v824 = vpop.f32.mrf.mxu0
    %825 = vdwg.mxu0
    %826 = vmatprep.subr.bf16.mxu0 %v623
    %827 = vmatpush1.bf16.msra.mxu0 %v622
    %828 = vmatprep.subr.bf16.mxu0 %v621
    %829 = vmatpush1.bf16.msra.mxu0 %v620
    %830 = vmatprep.subr.bf16.mxu0 %v619
    %831 = vmatpush1.bf16.msra.mxu0 %v618
    %832 = vmatprep.subr.bf16.mxu0 %v617
    %833 = vmatpush1.bf16.msra.mxu0 %v616
    %834 = vmatprep.subr.bf16.mxu0 %v615
    %835 = vmatpush1.bf16.msra.mxu0 %v614
    %836 = vmatprep.subr.bf16.mxu0 %v613
    %837 = vmatpush1.bf16.msra.mxu0 %v612
    %838 = vmatprep.subr.bf16.mxu0 %v611
    %839 = vmatpush1.bf16.msra.mxu0 %v610
    %840 = vmatprep.subr.bf16.mxu0 %v609
    %841 = vmatpush1.bf16.msra.mxu0 %v608
    %842 = vmatprep.subr.bf16.mxu0 %v639
    %843 = vmatpush2.bf16.msra.mxu0 %v638
    %844 = vmatprep.subr.bf16.mxu0 %v637
    %845 = vmatpush2.bf16.msra.mxu0 %v636
    %846 = vmatprep.subr.bf16.mxu0 %v635
    %847 = vmatpush2.bf16.msra.mxu0 %v634
    %848 = vmatprep.subr.bf16.mxu0 %v633
    %849 = vmatpush2.bf16.msra.mxu0 %v632
    %850 = vmatprep.subr.bf16.mxu0 %v631
    %851 = vmatpush2.bf16.msra.mxu0 %v630
    %852 = vmatprep.subr.bf16.mxu0 %v629
    %853 = vmatpush2.bf16.msra.mxu0 %v628
    %854 = vmatprep.subr.bf16.mxu0 %v627
    %855 = vmatpush2.bf16.msra.mxu0 %v626
    %856 = vmatprep.subr.bf16.mxu0 %v625
    %857 = vmatpush2.bf16.msra.mxu0 %v624
    %858 = vmatprep.mubr.bf16.mxu0 %v242
    %859 = vmatmul.mubr.bf16.gmra.mxu0 %v241
    %v860 = vpop.f32.mrf.mxu0
    %v861 = vadd.f32 %v820, %v860
    %v862 = vpop.f32.mrf.mxu0
    %v863 = vadd.f32 %v822, %v862
    %v864 = vpop.f32.mrf.mxu0
    %v865 = vpop.f32.mrf.mxu0
    %866 = vdwg.mxu0
    %867 = vmatprep.subr.bf16.mxu0 0
    %868 = vmatpush1.bf16.msra.mxu0 0
    %869 = vmatprep.subr.bf16.mxu0 0
    %870 = vmatpush1.bf16.msra.mxu0 0
    %871 = vmatprep.subr.bf16.mxu0 0
    %872 = vmatpush1.bf16.msra.mxu0 0
    %873 = vmatprep.subr.bf16.mxu0 0
    %874 = vmatpush1.bf16.msra.mxu0 0
    %875 = vmatprep.subr.bf16.mxu0 0
    %876 = vmatpush1.bf16.msra.mxu0 0
    %877 = vmatprep.subr.bf16.mxu0 0
    %878 = vmatpush1.bf16.msra.mxu0 0
    %879 = vmatprep.subr.bf16.mxu0 0
    %880 = vmatpush1.bf16.msra.mxu0 0
    %881 = vmatprep.subr.bf16.mxu0 %v641
    %882 = vmatpush1.bf16.msra.mxu0 %v640
    %883 = vmatprep.subr.bf16.mxu0 0
    %884 = vmatpush2.bf16.msra.mxu0 0
    %885 = vmatprep.subr.bf16.mxu0 0
    %886 = vmatpush2.bf16.msra.mxu0 0
    %887 = vmatprep.subr.bf16.mxu0 0
    %888 = vmatpush2.bf16.msra.mxu0 0
    %889 = vmatprep.subr.bf16.mxu0 0
    %890 = vmatpush2.bf16.msra.mxu0 0
    %891 = vmatprep.subr.bf16.mxu0 0
    %892 = vmatpush2.bf16.msra.mxu0 0
    %893 = vmatprep.subr.bf16.mxu0 0
    %894 = vmatpush2.bf16.msra.mxu0 0
    %895 = vmatprep.subr.bf16.mxu0 0
    %896 = vmatpush2.bf16.msra.mxu0 0
    %897 = vmatprep.subr.bf16.mxu0 0
    %898 = vmatpush2.bf16.msra.mxu0 0
    %899 = vmatprep.mubr.bf16.mxu0 0
    %900 = vmatmul.mubr.bf16.gmra.mxu0 %v742
    %v901 = vpop.f32.mrf.mxu0
    %v902 = vadd.f32 %v861, %v901
    %v903 = vpop.f32.mrf.mxu0
    %v904 = vadd.f32 %v863, %v903
    %v905 = vpop.f32.mrf.mxu0
    %v906 = vpop.f32.mrf.mxu0
    %907 = vdwg.mxu0
    %v908 = vld [vmem:[%s5] sm:$0x3]
    %v910 = vlaneseq
    %v911 = vshrl.u32 %v910, 7
    %v912 = vsub.s32 0, %v911
    %v913 = vrot.slane %v908, %v912
    %v914 = vlaneseq
    %v915 = vshrl.u32 %v914, 7
    %v916 = vsub.s32 1, %v915
    %v917 = vrot.slane %v908, %v916
    %v920 = vadd.f32 %v902, %v913
    %v921 = vadd.f32 %v904, %v917
    %v922 = vmax.f32 %v920, 0.0
    %v923 = vmax.f32 %v921, 0.0
    %v924 = vpack.c.bf16 %v922, %v922
    %v925 = vpack.c.bf16 %v923, %v923
    %v926 = vld [vmem:[%s6] sm:$0xf]
    %v927 = vld [vmem:[%s6 + $0x4] sm:$0xf]
    %v928 = vld [vmem:[%s6 + $0x8] sm:$0xf]
    %v929 = vld [vmem:[%s6 + $0xc] sm:$0xf]
    %v930 = vld [vmem:[%s6 + $0x10] sm:$0xf]
    %v931 = vld [vmem:[%s6 + $0x14] sm:$0xf]
    %v932 = vld [vmem:[%s6 + $0x18] sm:$0xf]
    %v933 = vld [vmem:[%s6 + $0x1c] sm:$0xf]
    %v934 = vld [vmem:[%s6 + $0x20] sm:$0xf]
    %v935 = vld [vmem:[%s6 + $0x24] sm:$0xf]
    %v936 = vld [vmem:[%s6 + $0x28] sm:$0xf]
    %v937 = vld [vmem:[%s6 + $0x2c] sm:$0xf]
    %v938 = vld [vmem:[%s6 + $0x30] sm:$0xf]
    %v939 = vld [vmem:[%s6 + $0x34] sm:$0xf]
    %v940 = vld [vmem:[%s6 + $0x38] sm:$0xf]
    %v941 = vld [vmem:[%s6 + $0x3c] sm:$0xf]
    %v942 = vld [vmem:[%s6 + $0x40] sm:$0xf]
    %v943 = vld [vmem:[%s6 + $0x44] sm:$0xf]
    %v944 = vld [vmem:[%s6 + $0x48] sm:$0xf]
    %v945 = vld [vmem:[%s6 + $0x4c] sm:$0xf]
    %v946 = vld [vmem:[%s6 + $0x50] sm:$0xf]
    %v947 = vld [vmem:[%s6 + $0x54] sm:$0xf]
    %v948 = vld [vmem:[%s6 + $0x58] sm:$0xf]
    %v949 = vld [vmem:[%s6 + $0x5c] sm:$0xf]
    %v950 = vld [vmem:[%s6 + $0x60] sm:$0xf]
    %v951 = vld [vmem:[%s6 + $0x64] sm:$0xf]
    %v952 = vld [vmem:[%s6 + $0x68] sm:$0xf]
    %v953 = vld [vmem:[%s6 + $0x6c] sm:$0xf]
    %v954 = vld [vmem:[%s6 + $0x70] sm:$0xf]
    %v955 = vld [vmem:[%s6 + $0x74] sm:$0xf]
    %v956 = vld [vmem:[%s6 + $0x78] sm:$0xf]
    %v957 = vld [vmem:[%s6 + $0x7c] sm:$0xf]
    %v958 = vld [vmem:[%s7] sm:$0x1]
    %v960 = vlaneseq
    %v961 = vshrl.u32 %v960, 7
    %v962 = vsub.s32 0, %v961
    %v963 = vrot.slane %v958, %v962
    %v997 = vunpack.c.l.b16 %v926
    %v998 = vunpack.c.l.b16 %v927
    %v999 = vunpack.c.l.b16 %v928
    %v1000 = vunpack.c.l.b16 %v929
    %v1001 = vunpack.c.l.b16 %v930
    %v1002 = vunpack.c.l.b16 %v931
    %v1003 = vunpack.c.l.b16 %v932
    %v1004 = vunpack.c.l.b16 %v933
    %v1005 = vunpack.c.l.b16 %v934
    %v1006 = vunpack.c.l.b16 %v935
    %v1007 = vunpack.c.l.b16 %v936
    %v1008 = vunpack.c.l.b16 %v937
    %v1009 = vunpack.c.l.b16 %v938
    %v1010 = vunpack.c.l.b16 %v939
    %v1011 = vunpack.c.l.b16 %v940
    %v1012 = vunpack.c.l.b16 %v941
    %v1013 = vunpack.c.l.b16 %v942
    %v1014 = vunpack.c.l.b16 %v943
    %v1015 = vunpack.c.l.b16 %v944
    %v1016 = vunpack.c.l.b16 %v945
    %v1017 = vunpack.c.l.b16 %v946
    %v1018 = vunpack.c.l.b16 %v947
    %v1019 = vunpack.c.l.b16 %v948
    %v1020 = vunpack.c.l.b16 %v949
    %v1021 = vunpack.c.l.b16 %v950
    %v1022 = vunpack.c.l.b16 %v951
    %v1023 = vunpack.c.l.b16 %v952
    %v1024 = vunpack.c.l.b16 %v953
    %v1025 = vunpack.c.l.b16 %v954
    %v1026 = vunpack.c.l.b16 %v955
    %v1027 = vunpack.c.l.b16 %v956
    %v1028 = vunpack.c.l.b16 %v957
    %v1029 = vpack.c.b16 %v998, %v997
    %v1030 = vpack.c.b16 %v1000, %v999
    %v1031 = vpack.c.b16 %v1002, %v1001
    %v1032 = vpack.c.b16 %v1004, %v1003
    %v1033 = vpack.c.b16 %v1006, %v1005
    %v1034 = vpack.c.b16 %v1008, %v1007
    %v1035 = vpack.c.b16 %v1010, %v1009
    %v1036 = vpack.c.b16 %v1012, %v1011
    %v1037 = vpack.c.b16 %v1014, %v1013
    %v1038 = vpack.c.b16 %v1016, %v1015
    %v1039 = vpack.c.b16 %v1018, %v1017
    %v1040 = vpack.c.b16 %v1020, %v1019
    %v1041 = vpack.c.b16 %v1022, %v1021
    %v1042 = vpack.c.b16 %v1024, %v1023
    %v1043 = vpack.c.b16 %v1026, %v1025
    %v1044 = vpack.c.b16 %v1028, %v1027
    %1061 = vmatprep.subr.bf16.mxu0 0
    %1062 = vmatpush1.bf16.msra.mxu0 %v1036
    %1063 = vmatprep.subr.bf16.mxu0 0
    %1064 = vmatpush1.bf16.msra.mxu0 %v1035
    %1065 = vmatprep.subr.bf16.mxu0 0
    %1066 = vmatpush1.bf16.msra.mxu0 %v1034
    %1067 = vmatprep.subr.bf16.mxu0 0
    %1068 = vmatpush1.bf16.msra.mxu0 %v1033
    %1069 = vmatprep.subr.bf16.mxu0 0
    %1070 = vmatpush1.bf16.msra.mxu0 %v1032
    %1071 = vmatprep.subr.bf16.mxu0 0
    %1072 = vmatpush1.bf16.msra.mxu0 %v1031
    %1073 = vmatprep.subr.bf16.mxu0 0
    %1074 = vmatpush1.bf16.msra.mxu0 %v1030
    %1075 = vmatprep.subr.bf16.mxu0 0
    %1076 = vmatpush1.bf16.msra.mxu0 %v1029
    %1077 = vmatprep.subr.bf16.mxu0 0
    %1078 = vmatpush2.bf16.msra.mxu0 %v1044
    %1079 = vmatprep.subr.bf16.mxu0 0
    %1080 = vmatpush2.bf16.msra.mxu0 %v1043
    %1081 = vmatprep.subr.bf16.mxu0 0
    %1082 = vmatpush2.bf16.msra.mxu0 %v1042
    %1083 = vmatprep.subr.bf16.mxu0 0
    %1084 = vmatpush2.bf16.msra.mxu0 %v1041
    %1085 = vmatprep.subr.bf16.mxu0 0
    %1086 = vmatpush2.bf16.msra.mxu0 %v1040
    %1087 = vmatprep.subr.bf16.mxu0 0
    %1088 = vmatpush2.bf16.msra.mxu0 %v1039
    %1089 = vmatprep.subr.bf16.mxu0 0
    %1090 = vmatpush2.bf16.msra.mxu0 %v1038
    %1091 = vmatprep.subr.bf16.mxu0 0
    %1092 = vmatpush2.bf16.msra.mxu0 %v1037
    %1093 = vmatprep.mubr.bf16.mxu0 %v925
    %1094 = vmatmul.mubr.bf16.gmra.mxu0 %v924
    %v1095 = vpop.f32.mrf.mxu0
    %v1096 = vadd.f32 %v963, %v1095
    %v1097 = vpop.f32.mrf.mxu0
    %v1098 = vpop.f32.mrf.mxu0
    %v1099 = vpop.f32.mrf.mxu0
    %1100 = vdwg.mxu0
    %v1101 = vmax.f32 %v1096, 0.0
    %v1102 = vpack.c.bf16 %v1101, %v1101
    %v1103 = vld [vmem:[%s8] sm:$0xf]
    %v1104 = vld [vmem:[%s8 + $0x4] sm:$0xf]
    %v1105 = vld [vmem:[%s8 + $0x8] sm:$0xf]
    %v1106 = vld [vmem:[%s8 + $0xc] sm:$0xf]
    %v1107 = vld [vmem:[%s8 + $0x10] sm:$0xf]
    %v1108 = vld [vmem:[%s8 + $0x14] sm:$0xf]
    %v1109 = vld [vmem:[%s8 + $0x18] sm:$0xf]
    %v1110 = vld [vmem:[%s8 + $0x1c] sm:$0xf]
    %v1111 = vld [vmem:[%s8 + $0x20] sm:$0xf]
    %v1112 = vld [vmem:[%s8 + $0x24] sm:$0xf]
    %v1113 = vld [vmem:[%s8 + $0x28] sm:$0xf]
    %v1114 = vld [vmem:[%s8 + $0x2c] sm:$0xf]
    %v1115 = vld [vmem:[%s8 + $0x30] sm:$0xf]
    %v1116 = vld [vmem:[%s8 + $0x34] sm:$0xf]
    %v1117 = vld [vmem:[%s8 + $0x38] sm:$0xf]
    %v1118 = vld [vmem:[%s8 + $0x3c] sm:$0xf]
    %v1119 = vld [vmem:[%s9] sm:$0x1]
    %v1121 = vlaneseq
    %v1122 = vshrl.u32 %v1121, 7
    %v1123 = vsub.s32 0, %v1122
    %v1124 = vrot.slane %v1119, %v1123
    %v1142 = vunpack.c.l.b16 %v1103
    %v1143 = vunpack.c.l.b16 %v1104
    %v1144 = vunpack.c.l.b16 %v1105
    %v1145 = vunpack.c.l.b16 %v1106
    %v1146 = vunpack.c.l.b16 %v1107
    %v1147 = vunpack.c.l.b16 %v1108
    %v1148 = vunpack.c.l.b16 %v1109
    %v1149 = vunpack.c.l.b16 %v1110
    %v1150 = vunpack.c.l.b16 %v1111
    %v1151 = vunpack.c.l.b16 %v1112
    %v1152 = vunpack.c.l.b16 %v1113
    %v1153 = vunpack.c.l.b16 %v1114
    %v1154 = vunpack.c.l.b16 %v1115
    %v1155 = vunpack.c.l.b16 %v1116
    %v1156 = vunpack.c.l.b16 %v1117
    %v1157 = vunpack.c.l.b16 %v1118
    %v1158 = vpack.c.b16 %v1143, %v1142
    %v1159 = vpack.c.b16 %v1145, %v1144
    %v1160 = vpack.c.b16 %v1147, %v1146
    %v1161 = vpack.c.b16 %v1149, %v1148
    %v1162 = vpack.c.b16 %v1151, %v1150
    %v1163 = vpack.c.b16 %v1153, %v1152
    %v1164 = vpack.c.b16 %v1155, %v1154
    %v1165 = vpack.c.b16 %v1157, %v1156
    %1174 = vmatprep.subr.bf16.mxu0 0
    %1175 = vmatpush1.bf16.msra.mxu0 %v1165
    %1176 = vmatprep.subr.bf16.mxu0 0
    %1177 = vmatpush1.bf16.msra.mxu0 %v1164
    %1178 = vmatprep.subr.bf16.mxu0 0
    %1179 = vmatpush1.bf16.msra.mxu0 %v1163
    %1180 = vmatprep.subr.bf16.mxu0 0
    %1181 = vmatpush1.bf16.msra.mxu0 %v1162
    %1182 = vmatprep.subr.bf16.mxu0 0
    %1183 = vmatpush1.bf16.msra.mxu0 %v1161
    %1184 = vmatprep.subr.bf16.mxu0 0
    %1185 = vmatpush1.bf16.msra.mxu0 %v1160
    %1186 = vmatprep.subr.bf16.mxu0 0
    %1187 = vmatpush1.bf16.msra.mxu0 %v1159
    %1188 = vmatprep.subr.bf16.mxu0 0
    %1189 = vmatpush1.bf16.msra.mxu0 %v1158
    %1190 = vmatprep.subr.bf16.mxu0 0
    %1191 = vmatpush2.bf16.msra.mxu0 0
    %1192 = vmatprep.subr.bf16.mxu0 0
    %1193 = vmatpush2.bf16.msra.mxu0 0
    %1194 = vmatprep.subr.bf16.mxu0 0
    %1195 = vmatpush2.bf16.msra.mxu0 0
    %1196 = vmatprep.subr.bf16.mxu0 0
    %1197 = vmatpush2.bf16.msra.mxu0 0
    %1198 = vmatprep.subr.bf16.mxu0 0
    %1199 = vmatpush2.bf16.msra.mxu0 0
    %1200 = vmatprep.subr.bf16.mxu0 0
    %1201 = vmatpush2.bf16.msra.mxu0 0
    %1202 = vmatprep.subr.bf16.mxu0 0
    %1203 = vmatpush2.bf16.msra.mxu0 0
    %1204 = vmatprep.subr.bf16.mxu0 0
    %1205 = vmatpush2.bf16.msra.mxu0 0
    %1206 = vmatprep.mubr.bf16.mxu0 0
    %1207 = vmatmul.mubr.bf16.gmra.mxu0 %v1102
    %v1208 = vpop.f32.mrf.mxu0
    %v1209 = vadd.f32 %v1124, %v1208
    %v1210 = vpop.f32.mrf.mxu0
    %v1211 = vpop.f32.mrf.mxu0
    %v1212 = vpop.f32.mrf.mxu0
    %1213 = vdwg.mxu0
    %1214 = vst [vmem:[#allocation4] sm:$0xff] %v1209
    %v1215 = vmul.f32 %v1209, 0.5
    %v1216 = vmul.f32 %v1215, 1.442695
    %v1217 = vpow.pop %v1216
    %v1218 = vld [vmem:[%s2] sm:$0xf]
    %v1219 = vunpack.c.l.bf16 %v1218
    %1221 = vrot.lane.b32.xlu0 %v1217, 96
    %v1222 = vpop.permute.xlu0 %1221
    %v1224 = vmul.f32 %v1219, %v1222
    %v1225 = vadd.f32 %v1224, %v1209
    %v1226 = vpack.c.bf16 %v1225, %v1225
    %v1227 = vld [vmem:[%s10] sm:$0xf]
    %v1228 = vld [vmem:[%s10 + $0x4] sm:$0xf]
    %v1229 = vld [vmem:[%s10 + $0x8] sm:$0xf]
    %v1230 = vld [vmem:[%s10 + $0xc] sm:$0xf]
    %v1231 = vld [vmem:[%s11] sm:$0xf]
    %v1232 = vld [vmem:[%s11 + $0x4] sm:$0x1]
    %v1235 = vunpack.c.l.b16 %v1231
    %v1236 = vunpack.c.l.b16 %v1232
    %v1237 = vpack.c.b16 %v1236, %v1235
    %v1239 = vsel %vm178, %v1237, 0
    %1241 = vmatprep.subr.bf16.mxu0 0
    %1242 = vmatpush1.bf16.msra.mxu0 0
    %1243 = vmatprep.subr.bf16.mxu0 0
    %1244 = vmatpush1.bf16.msra.mxu0 0
    %1245 = vmatprep.subr.bf16.mxu0 0
    %1246 = vmatpush1.bf16.msra.mxu0 0
    %1247 = vmatprep.subr.bf16.mxu0 0
    %1248 = vmatpush1.bf16.msra.mxu0 0
    %1249 = vmatprep.subr.bf16.mxu0 0
    %1250 = vmatpush1.bf16.msra.mxu0 0
    %1251 = vmatprep.subr.bf16.mxu0 0
    %1252 = vmatpush1.bf16.msra.mxu0 0
    %1253 = vmatprep.subr.bf16.mxu0 0
    %1254 = vmatpush1.bf16.msra.mxu0 0
    %1255 = vmatprep.subr.bf16.mxu0 0
    %1256 = vmatpush1.bf16.msra.mxu0 %v1239
    %1257 = vmatprep.subr.bf16.mxu0 0
    %1258 = vmatpush2.bf16.msra.mxu0 0
    %1259 = vmatprep.subr.bf16.mxu0 0
    %1260 = vmatpush2.bf16.msra.mxu0 0
    %1261 = vmatprep.subr.bf16.mxu0 0
    %1262 = vmatpush2.bf16.msra.mxu0 0
    %1263 = vmatprep.subr.bf16.mxu0 0
    %1264 = vmatpush2.bf16.msra.mxu0 0
    %1265 = vmatprep.subr.bf16.mxu0 0
    %1266 = vmatpush2.bf16.msra.mxu0 0
    %1267 = vmatprep.subr.bf16.mxu0 0
    %1268 = vmatpush2.bf16.msra.mxu0 0
    %1269 = vmatprep.subr.bf16.mxu0 0
    %1270 = vmatpush2.bf16.msra.mxu0 0
    %1271 = vmatprep.subr.bf16.mxu0 0
    %1272 = vmatpush2.bf16.msra.mxu0 0
    %1273 = vmatprep.mubr.bf16.mxu0 0
    %1274 = vmatmul.mubr.bf16.gmra.mxu0 %v176
    %v1275 = vpop.f32.mrf.mxu0
    %v1276 = vadd.f32 0.0, %v1275
    %v1277 = vpop.f32.mrf.mxu0
    %v1278 = vpop.f32.mrf.mxu0
    %v1279 = vpop.f32.mrf.mxu0
    %1280 = vdwg.mxu0
    %v1285 = vunpack.c.l.b16 %v1227
    %v1286 = vunpack.c.l.b16 %v1228
    %v1287 = vunpack.c.l.b16 %v1229
    %v1288 = vunpack.c.l.b16 %v1230
    %v1289 = vpack.c.b16 %v1286, %v1285
    %v1290 = vpack.c.b16 %v1288, %v1287
    %vm1293 = vcmask 261120
    %v1295 = vsel %vm1293, %v1226, 0
    %1297 = vmatprep.subr.bf16.mxu0 0
    %1298 = vmatpush1.bf16.msra.mxu0 0
    %1299 = vmatprep.subr.bf16.mxu0 0
    %1300 = vmatpush1.bf16.msra.mxu0 0
    %1301 = vmatprep.subr.bf16.mxu0 0
    %1302 = vmatpush1.bf16.msra.mxu0 0
    %1303 = vmatprep.subr.bf16.mxu0 0
    %1304 = vmatpush1.bf16.msra.mxu0 0
    %1305 = vmatprep.subr.bf16.mxu0 0
    %1306 = vmatpush1.bf16.msra.mxu0 0
    %1307 = vmatprep.subr.bf16.mxu0 0
    %1308 = vmatpush1.bf16.msra.mxu0 0
    %1309 = vmatprep.subr.bf16.mxu0 0
    %1310 = vmatpush1.bf16.msra.mxu0 %v1290
    %1311 = vmatprep.subr.bf16.mxu0 0
    %1312 = vmatpush1.bf16.msra.mxu0 %v1289
    %1313 = vmatprep.subr.bf16.mxu0 0
    %1314 = vmatpush2.bf16.msra.mxu0 0
    %1315 = vmatprep.subr.bf16.mxu0 0
    %1316 = vmatpush2.bf16.msra.mxu0 0
    %1317 = vmatprep.subr.bf16.mxu0 0
    %1318 = vmatpush2.bf16.msra.mxu0 0
    %1319 = vmatprep.subr.bf16.mxu0 0
    %1320 = vmatpush2.bf16.msra.mxu0 0
    %1321 = vmatprep.subr.bf16.mxu0 0
    %1322 = vmatpush2.bf16.msra.mxu0 0
    %1323 = vmatprep.subr.bf16.mxu0 0
    %1324 = vmatpush2.bf16.msra.mxu0 0
    %1325 = vmatprep.subr.bf16.mxu0 0
    %1326 = vmatpush2.bf16.msra.mxu0 0
    %1327 = vmatprep.subr.bf16.mxu0 0
    %1328 = vmatpush2.bf16.msra.mxu0 0
    %1329 = vmatprep.mubr.bf16.mxu0 0
    %1330 = vmatmul.mubr.bf16.gmra.mxu0 %v1295
    %v1331 = vpop.f32.mrf.mxu0
    %v1332 = vadd.f32 %v1276, %v1331
    %v1333 = vpop.f32.mrf.mxu0
    %v1334 = vpop.f32.mrf.mxu0
    %v1335 = vpop.f32.mrf.mxu0
    %1336 = vdwg.mxu0
    %v1337 = vld [vmem:[%s12] sm:$0x1]
    %v1339 = vlaneseq
    %v1340 = vshrl.u32 %v1339, 7
    %v1341 = vsub.s32 0, %v1340
    %v1342 = vrot.slane %v1337, %v1341
    %v1344 = vadd.f32 %v1332, %v1342
    %v1345 = vmax.f32 %v1344, 0.0
    %v1346 = vpack.c.bf16 %v1345, %v1345
    %v1347 = vld [vmem:[%s13] sm:$0xff]
    %v1348 = vld [vmem:[%s13 + $0x8] sm:$0xff]
    %v1349 = vld [vmem:[%s13 + $0x10] sm:$0xff]
    %v1350 = vld [vmem:[%s13 + $0x18] sm:$0xff]
    %v1351 = vld [vmem:[%s13 + $0x20] sm:$0xff]
    %v1352 = vld [vmem:[%s13 + $0x28] sm:$0xff]
    %v1353 = vld [vmem:[%s13 + $0x30] sm:$0xff]
    %v1354 = vld [vmem:[%s13 + $0x38] sm:$0xff]
    %v1355 = vld [vmem:[%s13 + $0x40] sm:$0xff]
    %v1356 = vld [vmem:[%s13 + $0x48] sm:$0xff]
    %v1357 = vld [vmem:[%s13 + $0x50] sm:$0xff]
    %v1358 = vld [vmem:[%s13 + $0x58] sm:$0xff]
    %v1359 = vld [vmem:[%s13 + $0x60] sm:$0xff]
    %v1360 = vld [vmem:[%s13 + $0x68] sm:$0xff]
    %v1361 = vld [vmem:[%s13 + $0x70] sm:$0xff]
    %v1362 = vld [vmem:[%s13 + $0x78] sm:$0xff]
    %v1363 = vld [vmem:[%s14] sm:$0x3]
    %v1365 = vlaneseq
    %v1366 = vshrl.u32 %v1365, 7
    %v1367 = vsub.s32 0, %v1366
    %v1368 = vrot.slane %v1363, %v1367
    %v1369 = vlaneseq
    %v1370 = vshrl.u32 %v1369, 7
    %v1371 = vsub.s32 1, %v1370
    %v1372 = vrot.slane %v1363, %v1371
    %v1391 = vunpack.c.l.b16 %v1347
    %v1392 = vunpack.c.h.b16 %v1347
    %v1393 = vunpack.c.l.b16 %v1348
    %v1394 = vunpack.c.h.b16 %v1348
    %v1395 = vunpack.c.l.b16 %v1349
    %v1396 = vunpack.c.h.b16 %v1349
    %v1397 = vunpack.c.l.b16 %v1350
    %v1398 = vunpack.c.h.b16 %v1350
    %v1399 = vunpack.c.l.b16 %v1351
    %v1400 = vunpack.c.h.b16 %v1351
    %v1401 = vunpack.c.l.b16 %v1352
    %v1402 = vunpack.c.h.b16 %v1352
    %v1403 = vunpack.c.l.b16 %v1353
    %v1404 = vunpack.c.h.b16 %v1353
    %v1405 = vunpack.c.l.b16 %v1354
    %v1406 = vunpack.c.h.b16 %v1354
    %v1407 = vunpack.c.l.b16 %v1355
    %v1408 = vunpack.c.h.b16 %v1355
    %v1409 = vunpack.c.l.b16 %v1356
    %v1410 = vunpack.c.h.b16 %v1356
    %v1411 = vunpack.c.l.b16 %v1357
    %v1412 = vunpack.c.h.b16 %v1357
    %v1413 = vunpack.c.l.b16 %v1358
    %v1414 = vunpack.c.h.b16 %v1358
    %v1415 = vunpack.c.l.b16 %v1359
    %v1416 = vunpack.c.h.b16 %v1359
    %v1417 = vunpack.c.l.b16 %v1360
    %v1418 = vunpack.c.h.b16 %v1360
    %v1419 = vunpack.c.l.b16 %v1361
    %v1420 = vunpack.c.h.b16 %v1361
    %v1421 = vunpack.c.l.b16 %v1362
    %v1422 = vunpack.c.h.b16 %v1362
    %v1423 = vpack.c.b16 %v1393, %v1391
    %v1424 = vpack.c.b16 %v1394, %v1392
    %v1425 = vpack.c.b16 %v1397, %v1395
    %v1426 = vpack.c.b16 %v1398, %v1396
    %v1427 = vpack.c.b16 %v1401, %v1399
    %v1428 = vpack.c.b16 %v1402, %v1400
    %v1429 = vpack.c.b16 %v1405, %v1403
    %v1430 = vpack.c.b16 %v1406, %v1404
    %v1431 = vpack.c.b16 %v1409, %v1407
    %v1432 = vpack.c.b16 %v1410, %v1408
    %v1433 = vpack.c.b16 %v1413, %v1411
    %v1434 = vpack.c.b16 %v1414, %v1412
    %v1435 = vpack.c.b16 %v1417, %v1415
    %v1436 = vpack.c.b16 %v1418, %v1416
    %v1437 = vpack.c.b16 %v1421, %v1419
    %v1438 = vpack.c.b16 %v1422, %v1420
    %1455 = vmatprep.subr.bf16.mxu0 %v1438
    %1456 = vmatpush1.bf16.msra.mxu0 %v1437
    %1457 = vmatprep.subr.bf16.mxu0 %v1436
    %1458 = vmatpush1.bf16.msra.mxu0 %v1435
    %1459 = vmatprep.subr.bf16.mxu0 %v1434
    %1460 = vmatpush1.bf16.msra.mxu0 %v1433
    %1461 = vmatprep.subr.bf16.mxu0 %v1432
    %1462 = vmatpush1.bf16.msra.mxu0 %v1431
    %1463 = vmatprep.subr.bf16.mxu0 %v1430
    %1464 = vmatpush1.bf16.msra.mxu0 %v1429
    %1465 = vmatprep.subr.bf16.mxu0 %v1428
    %1466 = vmatpush1.bf16.msra.mxu0 %v1427
    %1467 = vmatprep.subr.bf16.mxu0 %v1426
    %1468 = vmatpush1.bf16.msra.mxu0 %v1425
    %1469 = vmatprep.subr.bf16.mxu0 %v1424
    %1470 = vmatpush1.bf16.msra.mxu0 %v1423
    %1471 = vmatprep.subr.bf16.mxu0 0
    %1472 = vmatpush2.bf16.msra.mxu0 0
    %1473 = vmatprep.subr.bf16.mxu0 0
    %1474 = vmatpush2.bf16.msra.mxu0 0
    %1475 = vmatprep.subr.bf16.mxu0 0
    %1476 = vmatpush2.bf16.msra.mxu0 0
    %1477 = vmatprep.subr.bf16.mxu0 0
    %1478 = vmatpush2.bf16.msra.mxu0 0
    %1479 = vmatprep.subr.bf16.mxu0 0
    %1480 = vmatpush2.bf16.msra.mxu0 0
    %1481 = vmatprep.subr.bf16.mxu0 0
    %1482 = vmatpush2.bf16.msra.mxu0 0
    %1483 = vmatprep.subr.bf16.mxu0 0
    %1484 = vmatpush2.bf16.msra.mxu0 0
    %1485 = vmatprep.subr.bf16.mxu0 0
    %1486 = vmatpush2.bf16.msra.mxu0 0
    %1487 = vmatprep.mubr.bf16.mxu0 0
    %1488 = vmatmul.mubr.bf16.gmra.mxu0 %v1346
    %v1489 = vpop.f32.mrf.mxu0
    %v1490 = vadd.f32 %v1368, %v1489
    %v1491 = vpop.f32.mrf.mxu0
    %v1492 = vadd.f32 %v1372, %v1491
    %v1493 = vpop.f32.mrf.mxu0
    %v1494 = vpop.f32.mrf.mxu0
    %1495 = vdwg.mxu0
    %v1496 = vmax.f32 %v1490, 0.0
    %v1497 = vmax.f32 %v1492, 0.0
    %v1498 = vpack.c.bf16 %v1496, %v1496
    %v1499 = vpack.c.bf16 %v1497, %v1497
    %v1500 = vld [vmem:[%s15] sm:$0xff]
    %v1501 = vld [vmem:[%s15 + $0x8] sm:$0xff]
    %v1502 = vld [vmem:[%s15 + $0x10] sm:$0xff]
    %v1503 = vld [vmem:[%s15 + $0x18] sm:$0xf]
    %v1504 = vld [vmem:[%s15 + $0x1c] sm:$0xff]
    %v1505 = vld [vmem:[%s15 + $0x24] sm:$0xff]
    %v1506 = vld [vmem:[%s15 + $0x2c] sm:$0xff]
    %v1507 = vld [vmem:[%s15 + $0x34] sm:$0xf]
    %v1508 = vld [vmem:[%s15 + $0x38] sm:$0xff]
    %v1509 = vld [vmem:[%s15 + $0x40] sm:$0xff]
    %v1510 = vld [vmem:[%s15 + $0x48] sm:$0xff]
    %v1511 = vld [vmem:[%s15 + $0x50] sm:$0xf]
    %v1512 = vld [vmem:[%s15 + $0x54] sm:$0xff]
    %v1513 = vld [vmem:[%s15 + $0x5c] sm:$0xff]
    %v1514 = vld [vmem:[%s15 + $0x64] sm:$0xff]
    %v1515 = vld [vmem:[%s15 + $0x6c] sm:$0xf]
    %v1516 = vld [vmem:[%s15 + $0x70] sm:$0xff]
    %v1517 = vld [vmem:[%s15 + $0x78] sm:$0xff]
    %v1518 = vld [vmem:[%s15 + $0x80] sm:$0xff]
    %v1519 = vld [vmem:[%s15 + $0x88] sm:$0xf]
    %v1520 = vld [vmem:[%s15 + $0x8c] sm:$0xff]
    %v1521 = vld [vmem:[%s15 + $0x94] sm:$0xff]
    %v1522 = vld [vmem:[%s15 + $0x9c] sm:$0xff]
    %v1523 = vld [vmem:[%s15 + $0xa4] sm:$0xf]
    %v1524 = vld [vmem:[%s15 + $0xa8] sm:$0xff]
    %v1525 = vld [vmem:[%s15 + $0xb0] sm:$0xff]
    %v1526 = vld [vmem:[%s15 + $0xb8] sm:$0xff]
    %v1527 = vld [vmem:[%s15 + $0xc0] sm:$0xf]
    %v1528 = vld [vmem:[%s15 + $0xc4] sm:$0xff]
    %v1529 = vld [vmem:[%s15 + $0xcc] sm:$0xff]
    %v1530 = vld [vmem:[%s15 + $0xd4] sm:$0xff]
    %v1531 = vld [vmem:[%s15 + $0xdc] sm:$0xf]
    %v1532 = vld [vmem:[%s15 + $0xe0] sm:$0xff]
    %v1533 = vld [vmem:[%s15 + $0xe8] sm:$0xff]
    %v1534 = vld [vmem:[%s15 + $0xf0] sm:$0xff]
    %v1535 = vld [vmem:[%s15 + $0xf8] sm:$0xf]
    %v1536 = vld [vmem:[%s15 + $0xfc] sm:$0xff]
    %v1537 = vld [vmem:[%s15 + $0x104] sm:$0xff]
    %v1538 = vld [vmem:[%s15 + $0x10c] sm:$0xff]
    %v1539 = vld [vmem:[%s15 + $0x114] sm:$0xf]
    %v1540 = vld [vmem:[%s15 + $0x118] sm:$0xff]
    %v1541 = vld [vmem:[%s15 + $0x120] sm:$0xff]
    %v1542 = vld [vmem:[%s15 + $0x128] sm:$0xff]
    %v1543 = vld [vmem:[%s15 + $0x130] sm:$0xf]
    %v1544 = vld [vmem:[%s15 + $0x134] sm:$0xff]
    %v1545 = vld [vmem:[%s15 + $0x13c] sm:$0xff]
    %v1546 = vld [vmem:[%s15 + $0x144] sm:$0xff]
    %v1547 = vld [vmem:[%s15 + $0x14c] sm:$0xf]
    %v1548 = vld [vmem:[%s15 + $0x150] sm:$0xff]
    %v1549 = vld [vmem:[%s15 + $0x158] sm:$0xff]
    %v1550 = vld [vmem:[%s15 + $0x160] sm:$0xff]
    %v1551 = vld [vmem:[%s15 + $0x168] sm:$0xf]
    %v1552 = vld [vmem:[%s15 + $0x16c] sm:$0xff]
    %v1553 = vld [vmem:[%s15 + $0x174] sm:$0xff]
    %v1554 = vld [vmem:[%s15 + $0x17c] sm:$0xff]
    %v1555 = vld [vmem:[%s15 + $0x184] sm:$0xf]
    %v1556 = vld [vmem:[%s15 + $0x188] sm:$0xff]
    %v1557 = vld [vmem:[%s15 + $0x190] sm:$0xff]
    %v1558 = vld [vmem:[%s15 + $0x198] sm:$0xff]
    %v1559 = vld [vmem:[%s15 + $0x1a0] sm:$0xf]
    %v1560 = vld [vmem:[%s15 + $0x1a4] sm:$0xff]
    %v1561 = vld [vmem:[%s15 + $0x1ac] sm:$0xff]
    %v1562 = vld [vmem:[%s15 + $0x1b4] sm:$0xff]
    %v1563 = vld [vmem:[%s15 + $0x1bc] sm:$0xf]
    %v1564 = vld [vmem:[%s15 + $0x1c0] sm:$0xff]
    %v1565 = vld [vmem:[%s15 + $0x1c8] sm:$0xff]
    %v1566 = vld [vmem:[%s15 + $0x1d0] sm:$0xff]
    %v1567 = vld [vmem:[%s15 + $0x1d8] sm:$0xf]
    %v1568 = vld [vmem:[%s15 + $0x1dc] sm:$0xff]
    %v1569 = vld [vmem:[%s15 + $0x1e4] sm:$0xff]
    %v1570 = vld [vmem:[%s15 + $0x1ec] sm:$0xff]
    %v1571 = vld [vmem:[%s15 + $0x1f4] sm:$0xf]
    %v1572 = vld [vmem:[%s15 + $0x1f8] sm:$0xff]
    %v1573 = vld [vmem:[%s15 + $0x200] sm:$0xff]
    %v1574 = vld [vmem:[%s15 + $0x208] sm:$0xff]
    %v1575 = vld [vmem:[%s15 + $0x210] sm:$0xf]
    %v1576 = vld [vmem:[%s15 + $0x214] sm:$0xff]
    %v1577 = vld [vmem:[%s15 + $0x21c] sm:$0xff]
    %v1578 = vld [vmem:[%s15 + $0x224] sm:$0xff]
    %v1579 = vld [vmem:[%s15 + $0x22c] sm:$0xf]
    %v1580 = vld [vmem:[%s15 + $0x230] sm:$0xff]
    %v1581 = vld [vmem:[%s15 + $0x238] sm:$0xff]
    %v1582 = vld [vmem:[%s15 + $0x240] sm:$0xff]
    %v1583 = vld [vmem:[%s15 + $0x248] sm:$0xf]
    %v1584 = vld [vmem:[%s15 + $0x24c] sm:$0xff]
    %v1585 = vld [vmem:[%s15 + $0x254] sm:$0xff]
    %v1586 = vld [vmem:[%s15 + $0x25c] sm:$0xff]
    %v1587 = vld [vmem:[%s15 + $0x264] sm:$0xf]
    %v1588 = vld [vmem:[%s15 + $0x268] sm:$0xff]
    %v1589 = vld [vmem:[%s15 + $0x270] sm:$0xff]
    %v1590 = vld [vmem:[%s15 + $0x278] sm:$0xff]
    %v1591 = vld [vmem:[%s15 + $0x280] sm:$0xf]
    %v1592 = vld [vmem:[%s15 + $0x284] sm:$0xff]
    %v1593 = vld [vmem:[%s15 + $0x28c] sm:$0xff]
    %v1594 = vld [vmem:[%s15 + $0x294] sm:$0xff]
    %v1595 = vld [vmem:[%s15 + $0x29c] sm:$0xf]
    %v1596 = vld [vmem:[%s15 + $0x2a0] sm:$0xff]
    %v1597 = vld [vmem:[%s15 + $0x2a8] sm:$0xff]
    %v1598 = vld [vmem:[%s15 + $0x2b0] sm:$0xff]
    %v1599 = vld [vmem:[%s15 + $0x2b8] sm:$0xf]
    %v1600 = vld [vmem:[%s15 + $0x2bc] sm:$0xff]
    %v1601 = vld [vmem:[%s15 + $0x2c4] sm:$0xff]
    %v1602 = vld [vmem:[%s15 + $0x2cc] sm:$0xff]
    %v1603 = vld [vmem:[%s15 + $0x2d4] sm:$0xf]
    %v1604 = vld [vmem:[%s15 + $0x2d8] sm:$0xff]
    %v1605 = vld [vmem:[%s15 + $0x2e0] sm:$0xff]
    %v1606 = vld [vmem:[%s15 + $0x2e8] sm:$0xff]
    %v1607 = vld [vmem:[%s15 + $0x2f0] sm:$0xf]
    %v1608 = vld [vmem:[%s15 + $0x2f4] sm:$0xff]
    %v1609 = vld [vmem:[%s15 + $0x2fc] sm:$0xff]
    %v1610 = vld [vmem:[%s15 + $0x304] sm:$0xff]
    %v1611 = vld [vmem:[%s15 + $0x30c] sm:$0xf]
    %v1612 = vld [vmem:[%s15 + $0x310] sm:$0xff]
    %v1613 = vld [vmem:[%s15 + $0x318] sm:$0xff]
    %v1614 = vld [vmem:[%s15 + $0x320] sm:$0xff]
    %v1615 = vld [vmem:[%s15 + $0x328] sm:$0xf]
    %v1616 = vld [vmem:[%s15 + $0x32c] sm:$0xff]
    %v1617 = vld [vmem:[%s15 + $0x334] sm:$0xff]
    %v1618 = vld [vmem:[%s15 + $0x33c] sm:$0xff]
    %v1619 = vld [vmem:[%s15 + $0x344] sm:$0xf]
    %v1620 = vld [vmem:[%s15 + $0x348] sm:$0xff]
    %v1621 = vld [vmem:[%s15 + $0x350] sm:$0xff]
    %v1622 = vld [vmem:[%s15 + $0x358] sm:$0xff]
    %v1623 = vld [vmem:[%s15 + $0x360] sm:$0xf]
    %v1624 = vld [vmem:[%s15 + $0x364] sm:$0xff]
    %v1625 = vld [vmem:[%s15 + $0x36c] sm:$0xff]
    %v1626 = vld [vmem:[%s15 + $0x374] sm:$0xff]
    %v1627 = vld [vmem:[%s15 + $0x37c] sm:$0xf]
    %v1628 = vld [vmem:[%s16] sm:$0x7f]
    %v1630 = vlaneseq
    %v1631 = vshrl.u32 %v1630, 7
    %v1632 = vsub.s32 0, %v1631
    %v1633 = vrot.slane %v1628, %v1632
    %v1634 = vlaneseq
    %v1635 = vshrl.u32 %v1634, 7
    %v1636 = vsub.s32 1, %v1635
    %v1637 = vrot.slane %v1628, %v1636
    %v1638 = vlaneseq
    %v1639 = vshrl.u32 %v1638, 7
    %v1640 = vsub.s32 2, %v1639
    %v1641 = vrot.slane %v1628, %v1640
    %v1642 = vlaneseq
    %v1643 = vshrl.u32 %v1642, 7
    %v1644 = vsub.s32 3, %v1643
    %v1645 = vrot.slane %v1628, %v1644
    %v1646 = vlaneseq
    %v1647 = vshrl.u32 %v1646, 7
    %v1648 = vsub.s32 4, %v1647
    %v1649 = vrot.slane %v1628, %v1648
    %v1650 = vlaneseq
    %v1651 = vshrl.u32 %v1650, 7
    %v1652 = vsub.s32 5, %v1651
    %v1653 = vrot.slane %v1628, %v1652
    %v1654 = vlaneseq
    %v1655 = vshrl.u32 %v1654, 7
    %v1656 = vsub.s32 6, %v1655
    %v1657 = vrot.slane %v1628, %v1656
    %v1793 = vunpack.c.l.b16 %v1500
    %v1794 = vunpack.c.h.b16 %v1500
    %v1795 = vunpack.c.l.b16 %v1501
    %v1796 = vunpack.c.h.b16 %v1501
    %v1797 = vunpack.c.l.b16 %v1502
    %v1798 = vunpack.c.h.b16 %v1502
    %v1799 = vunpack.c.l.b16 %v1503
    %v1800 = vunpack.c.l.b16 %v1504
    %v1801 = vunpack.c.h.b16 %v1504
    %v1802 = vunpack.c.l.b16 %v1505
    %v1803 = vunpack.c.h.b16 %v1505
    %v1804 = vunpack.c.l.b16 %v1506
    %v1805 = vunpack.c.h.b16 %v1506
    %v1806 = vunpack.c.l.b16 %v1507
    %v1807 = vunpack.c.l.b16 %v1508
    %v1808 = vunpack.c.h.b16 %v1508
    %v1809 = vunpack.c.l.b16 %v1509
    %v1810 = vunpack.c.h.b16 %v1509
    %v1811 = vunpack.c.l.b16 %v1510
    %v1812 = vunpack.c.h.b16 %v1510
    %v1813 = vunpack.c.l.b16 %v1511
    %v1814 = vunpack.c.l.b16 %v1512
    %v1815 = vunpack.c.h.b16 %v1512
    %v1816 = vunpack.c.l.b16 %v1513
    %v1817 = vunpack.c.h.b16 %v1513
    %v1818 = vunpack.c.l.b16 %v1514
    %v1819 = vunpack.c.h.b16 %v1514
    %v1820 = vunpack.c.l.b16 %v1515
    %v1821 = vunpack.c.l.b16 %v1516
    %v1822 = vunpack.c.h.b16 %v1516
    %v1823 = vunpack.c.l.b16 %v1517
    %v1824 = vunpack.c.h.b16 %v1517
    %v1825 = vunpack.c.l.b16 %v1518
    %v1826 = vunpack.c.h.b16 %v1518
    %v1827 = vunpack.c.l.b16 %v1519
    %v1828 = vunpack.c.l.b16 %v1520
    %v1829 = vunpack.c.h.b16 %v1520
    %v1830 = vunpack.c.l.b16 %v1521
    %v1831 = vunpack.c.h.b16 %v1521
    %v1832 = vunpack.c.l.b16 %v1522
    %v1833 = vunpack.c.h.b16 %v1522
    %v1834 = vunpack.c.l.b16 %v1523
    %v1835 = vunpack.c.l.b16 %v1524
    %v1836 = vunpack.c.h.b16 %v1524
    %v1837 = vunpack.c.l.b16 %v1525
    %v1838 = vunpack.c.h.b16 %v1525
    %v1839 = vunpack.c.l.b16 %v1526
    %v1840 = vunpack.c.h.b16 %v1526
    %v1841 = vunpack.c.l.b16 %v1527
    %v1842 = vunpack.c.l.b16 %v1528
    %v1843 = vunpack.c.h.b16 %v1528
    %v1844 = vunpack.c.l.b16 %v1529
    %v1845 = vunpack.c.h.b16 %v1529
    %v1846 = vunpack.c.l.b16 %v1530
    %v1847 = vunpack.c.h.b16 %v1530
    %v1848 = vunpack.c.l.b16 %v1531
    %v1849 = vunpack.c.l.b16 %v1532
    %v1850 = vunpack.c.h.b16 %v1532
    %v1851 = vunpack.c.l.b16 %v1533
    %v1852 = vunpack.c.h.b16 %v1533
    %v1853 = vunpack.c.l.b16 %v1534
    %v1854 = vunpack.c.h.b16 %v1534
    %v1855 = vunpack.c.l.b16 %v1535
    %v1856 = vunpack.c.l.b16 %v1536
    %v1857 = vunpack.c.h.b16 %v1536
    %v1858 = vunpack.c.l.b16 %v1537
    %v1859 = vunpack.c.h.b16 %v1537
    %v1860 = vunpack.c.l.b16 %v1538
    %v1861 = vunpack.c.h.b16 %v1538
    %v1862 = vunpack.c.l.b16 %v1539
    %v1863 = vunpack.c.l.b16 %v1540
    %v1864 = vunpack.c.h.b16 %v1540
    %v1865 = vunpack.c.l.b16 %v1541
    %v1866 = vunpack.c.h.b16 %v1541
    %v1867 = vunpack.c.l.b16 %v1542
    %v1868 = vunpack.c.h.b16 %v1542
    %v1869 = vunpack.c.l.b16 %v1543
    %v1870 = vunpack.c.l.b16 %v1544
    %v1871 = vunpack.c.h.b16 %v1544
    %v1872 = vunpack.c.l.b16 %v1545
    %v1873 = vunpack.c.h.b16 %v1545
    %v1874 = vunpack.c.l.b16 %v1546
    %v1875 = vunpack.c.h.b16 %v1546
    %v1876 = vunpack.c.l.b16 %v1547
    %v1877 = vunpack.c.l.b16 %v1548
    %v1878 = vunpack.c.h.b16 %v1548
    %v1879 = vunpack.c.l.b16 %v1549
    %v1880 = vunpack.c.h.b16 %v1549
    %v1881 = vunpack.c.l.b16 %v1550
    %v1882 = vunpack.c.h.b16 %v1550
    %v1883 = vunpack.c.l.b16 %v1551
    %v1884 = vunpack.c.l.b16 %v1552
    %v1885 = vunpack.c.h.b16 %v1552
    %v1886 = vunpack.c.l.b16 %v1553
    %v1887 = vunpack.c.h.b16 %v1553
    %v1888 = vunpack.c.l.b16 %v1554
    %v1889 = vunpack.c.h.b16 %v1554
    %v1890 = vunpack.c.l.b16 %v1555
    %v1891 = vunpack.c.l.b16 %v1556
    %v1892 = vunpack.c.h.b16 %v1556
    %v1893 = vunpack.c.l.b16 %v1557
    %v1894 = vunpack.c.h.b16 %v1557
    %v1895 = vunpack.c.l.b16 %v1558
    %v1896 = vunpack.c.h.b16 %v1558
    %v1897 = vunpack.c.l.b16 %v1559
    %v1898 = vunpack.c.l.b16 %v1560
    %v1899 = vunpack.c.h.b16 %v1560
    %v1900 = vunpack.c.l.b16 %v1561
    %v1901 = vunpack.c.h.b16 %v1561
    %v1902 = vunpack.c.l.b16 %v1562
    %v1903 = vunpack.c.h.b16 %v1562
    %v1904 = vunpack.c.l.b16 %v1563
    %v1905 = vunpack.c.l.b16 %v1564
    %v1906 = vunpack.c.h.b16 %v1564
    %v1907 = vunpack.c.l.b16 %v1565
    %v1908 = vunpack.c.h.b16 %v1565
    %v1909 = vunpack.c.l.b16 %v1566
    %v1910 = vunpack.c.h.b16 %v1566
    %v1911 = vunpack.c.l.b16 %v1567
    %v1912 = vunpack.c.l.b16 %v1568
    %v1913 = vunpack.c.h.b16 %v1568
    %v1914 = vunpack.c.l.b16 %v1569
    %v1915 = vunpack.c.h.b16 %v1569
    %v1916 = vunpack.c.l.b16 %v1570
    %v1917 = vunpack.c.h.b16 %v1570
    %v1918 = vunpack.c.l.b16 %v1571
    %v1919 = vunpack.c.l.b16 %v1572
    %v1920 = vunpack.c.h.b16 %v1572
    %v1921 = vunpack.c.l.b16 %v1573
    %v1922 = vunpack.c.h.b16 %v1573
    %v1923 = vunpack.c.l.b16 %v1574
    %v1924 = vunpack.c.h.b16 %v1574
    %v1925 = vunpack.c.l.b16 %v1575
    %v1926 = vunpack.c.l.b16 %v1576
    %v1927 = vunpack.c.h.b16 %v1576
    %v1928 = vunpack.c.l.b16 %v1577
    %v1929 = vunpack.c.h.b16 %v1577
    %v1930 = vunpack.c.l.b16 %v1578
    %v1931 = vunpack.c.h.b16 %v1578
    %v1932 = vunpack.c.l.b16 %v1579
    %v1933 = vunpack.c.l.b16 %v1580
    %v1934 = vunpack.c.h.b16 %v1580
    %v1935 = vunpack.c.l.b16 %v1581
    %v1936 = vunpack.c.h.b16 %v1581
    %v1937 = vunpack.c.l.b16 %v1582
    %v1938 = vunpack.c.h.b16 %v1582
    %v1939 = vunpack.c.l.b16 %v1583
    %v1940 = vunpack.c.l.b16 %v1584
    %v1941 = vunpack.c.h.b16 %v1584
    %v1942 = vunpack.c.l.b16 %v1585
    %v1943 = vunpack.c.h.b16 %v1585
    %v1944 = vunpack.c.l.b16 %v1586
    %v1945 = vunpack.c.h.b16 %v1586
    %v1946 = vunpack.c.l.b16 %v1587
    %v1947 = vunpack.c.l.b16 %v1588
    %v1948 = vunpack.c.h.b16 %v1588
    %v1949 = vunpack.c.l.b16 %v1589
    %v1950 = vunpack.c.h.b16 %v1589
    %v1951 = vunpack.c.l.b16 %v1590
    %v1952 = vunpack.c.h.b16 %v1590
    %v1953 = vunpack.c.l.b16 %v1591
    %v1954 = vunpack.c.l.b16 %v1592
    %v1955 = vunpack.c.h.b16 %v1592
    %v1956 = vunpack.c.l.b16 %v1593
    %v1957 = vunpack.c.h.b16 %v1593
    %v1958 = vunpack.c.l.b16 %v1594
    %v1959 = vunpack.c.h.b16 %v1594
    %v1960 = vunpack.c.l.b16 %v1595
    %v1961 = vunpack.c.l.b16 %v1596
    %v1962 = vunpack.c.h.b16 %v1596
    %v1963 = vunpack.c.l.b16 %v1597
    %v1964 = vunpack.c.h.b16 %v1597
    %v1965 = vunpack.c.l.b16 %v1598
    %v1966 = vunpack.c.h.b16 %v1598
    %v1967 = vunpack.c.l.b16 %v1599
    %v1968 = vunpack.c.l.b16 %v1600
    %v1969 = vunpack.c.h.b16 %v1600
    %v1970 = vunpack.c.l.b16 %v1601
    %v1971 = vunpack.c.h.b16 %v1601
    %v1972 = vunpack.c.l.b16 %v1602
    %v1973 = vunpack.c.h.b16 %v1602
    %v1974 = vunpack.c.l.b16 %v1603
    %v1975 = vunpack.c.l.b16 %v1604
    %v1976 = vunpack.c.h.b16 %v1604
    %v1977 = vunpack.c.l.b16 %v1605
    %v1978 = vunpack.c.h.b16 %v1605
    %v1979 = vunpack.c.l.b16 %v1606
    %v1980 = vunpack.c.h.b16 %v1606
    %v1981 = vunpack.c.l.b16 %v1607
    %v1982 = vunpack.c.l.b16 %v1608
    %v1983 = vunpack.c.h.b16 %v1608
    %v1984 = vunpack.c.l.b16 %v1609
    %v1985 = vunpack.c.h.b16 %v1609
    %v1986 = vunpack.c.l.b16 %v1610
    %v1987 = vunpack.c.h.b16 %v1610
    %v1988 = vunpack.c.l.b16 %v1611
    %v1989 = vunpack.c.l.b16 %v1612
    %v1990 = vunpack.c.h.b16 %v1612
    %v1991 = vunpack.c.l.b16 %v1613
    %v1992 = vunpack.c.h.b16 %v1613
    %v1993 = vunpack.c.l.b16 %v1614
    %v1994 = vunpack.c.h.b16 %v1614
    %v1995 = vunpack.c.l.b16 %v1615
    %v1996 = vunpack.c.l.b16 %v1616
    %v1997 = vunpack.c.h.b16 %v1616
    %v1998 = vunpack.c.l.b16 %v1617
    %v1999 = vunpack.c.h.b16 %v1617
    %v2000 = vunpack.c.l.b16 %v1618
    %v2001 = vunpack.c.h.b16 %v1618
    %v2002 = vunpack.c.l.b16 %v1619
    %v2003 = vunpack.c.l.b16 %v1620
    %v2004 = vunpack.c.h.b16 %v1620
    %v2005 = vunpack.c.l.b16 %v1621
    %v2006 = vunpack.c.h.b16 %v1621
    %v2007 = vunpack.c.l.b16 %v1622
    %v2008 = vunpack.c.h.b16 %v1622
    %v2009 = vunpack.c.l.b16 %v1623
    %v2010 = vunpack.c.l.b16 %v1624
    %v2011 = vunpack.c.h.b16 %v1624
    %v2012 = vunpack.c.l.b16 %v1625
    %v2013 = vunpack.c.h.b16 %v1625
    %v2014 = vunpack.c.l.b16 %v1626
    %v2015 = vunpack.c.h.b16 %v1626
    %v2016 = vunpack.c.l.b16 %v1627
    %v2017 = vpack.c.b16 %v1800, %v1793
    %v2018 = vpack.c.b16 %v1801, %v1794
    %v2019 = vpack.c.b16 %v1802, %v1795
    %v2020 = vpack.c.b16 %v1803, %v1796
    %v2021 = vpack.c.b16 %v1804, %v1797
    %v2022 = vpack.c.b16 %v1805, %v1798
    %v2023 = vpack.c.b16 %v1806, %v1799
    %v2024 = vpack.c.b16 %v1814, %v1807
    %v2025 = vpack.c.b16 %v1815, %v1808
    %v2026 = vpack.c.b16 %v1816, %v1809
    %v2027 = vpack.c.b16 %v1817, %v1810
    %v2028 = vpack.c.b16 %v1818, %v1811
    %v2029 = vpack.c.b16 %v1819, %v1812
    %v2030 = vpack.c.b16 %v1820, %v1813
    %v2031 = vpack.c.b16 %v1828, %v1821
    %v2032 = vpack.c.b16 %v1829, %v1822
    %v2033 = vpack.c.b16 %v1830, %v1823
    %v2034 = vpack.c.b16 %v1831, %v1824
    %v2035 = vpack.c.b16 %v1832, %v1825
    %v2036 = vpack.c.b16 %v1833, %v1826
    %v2037 = vpack.c.b16 %v1834, %v1827
    %v2038 = vpack.c.b16 %v1842, %v1835
    %v2039 = vpack.c.b16 %v1843, %v1836
    %v2040 = vpack.c.b16 %v1844, %v1837
    %v2041 = vpack.c.b16 %v1845, %v1838
    %v2042 = vpack.c.b16 %v1846, %v1839
    %v2043 = vpack.c.b16 %v1847, %v1840
    %v2044 = vpack.c.b16 %v1848, %v1841
    %v2045 = vpack.c.b16 %v1856, %v1849
    %v2046 = vpack.c.b16 %v1857, %v1850
    %v2047 = vpack.c.b16 %v1858, %v1851
    %v2048 = vpack.c.b16 %v1859, %v1852
    %v2049 = vpack.c.b16 %v1860, %v1853
    %v2050 = vpack.c.b16 %v1861, %v1854
    %v2051 = vpack.c.b16 %v1862, %v1855
    %v2052 = vpack.c.b16 %v1870, %v1863
    %v2053 = vpack.c.b16 %v1871, %v1864
    %v2054 = vpack.c.b16 %v1872, %v1865
    %v2055 = vpack.c.b16 %v1873, %v1866
    %v2056 = vpack.c.b16 %v1874, %v1867
    %v2057 = vpack.c.b16 %v1875, %v1868
    %v2058 = vpack.c.b16 %v1876, %v1869
    %v2059 = vpack.c.b16 %v1884, %v1877
    %v2060 = vpack.c.b16 %v1885, %v1878
    %v2061 = vpack.c.b16 %v1886, %v1879
    %v2062 = vpack.c.b16 %v1887, %v1880
    %v2063 = vpack.c.b16 %v1888, %v1881
    %v2064 = vpack.c.b16 %v1889, %v1882
    %v2065 = vpack.c.b16 %v1890, %v1883
    %v2066 = vpack.c.b16 %v1898, %v1891
    %v2067 = vpack.c.b16 %v1899, %v1892
    %v2068 = vpack.c.b16 %v1900, %v1893
    %v2069 = vpack.c.b16 %v1901, %v1894
    %v2070 = vpack.c.b16 %v1902, %v1895
    %v2071 = vpack.c.b16 %v1903, %v1896
    %v2072 = vpack.c.b16 %v1904, %v1897
    %v2073 = vpack.c.b16 %v1912, %v1905
    %v2074 = vpack.c.b16 %v1913, %v1906
    %v2075 = vpack.c.b16 %v1914, %v1907
    %v2076 = vpack.c.b16 %v1915, %v1908
    %v2077 = vpack.c.b16 %v1916, %v1909
    %v2078 = vpack.c.b16 %v1917, %v1910
    %v2079 = vpack.c.b16 %v1918, %v1911
    %v2080 = vpack.c.b16 %v1926, %v1919
    %v2081 = vpack.c.b16 %v1927, %v1920
    %v2082 = vpack.c.b16 %v1928, %v1921
    %v2083 = vpack.c.b16 %v1929, %v1922
    %v2084 = vpack.c.b16 %v1930, %v1923
    %v2085 = vpack.c.b16 %v1931, %v1924
    %v2086 = vpack.c.b16 %v1932, %v1925
    %v2087 = vpack.c.b16 %v1940, %v1933
    %v2088 = vpack.c.b16 %v1941, %v1934
    %v2089 = vpack.c.b16 %v1942, %v1935
    %v2090 = vpack.c.b16 %v1943, %v1936
    %v2091 = vpack.c.b16 %v1944, %v1937
    %v2092 = vpack.c.b16 %v1945, %v1938
    %v2093 = vpack.c.b16 %v1946, %v1939
    %v2094 = vpack.c.b16 %v1954, %v1947
    %v2095 = vpack.c.b16 %v1955, %v1948
    %v2096 = vpack.c.b16 %v1956, %v1949
    %v2097 = vpack.c.b16 %v1957, %v1950
    %v2098 = vpack.c.b16 %v1958, %v1951
    %v2099 = vpack.c.b16 %v1959, %v1952
    %v2100 = vpack.c.b16 %v1960, %v1953
    %v2101 = vpack.c.b16 %v1968, %v1961
    %v2102 = vpack.c.b16 %v1969, %v1962
    %v2103 = vpack.c.b16 %v1970, %v1963
    %v2104 = vpack.c.b16 %v1971, %v1964
    %v2105 = vpack.c.b16 %v1972, %v1965
    %v2106 = vpack.c.b16 %v1973, %v1966
    %v2107 = vpack.c.b16 %v1974, %v1967
    %v2108 = vpack.c.b16 %v1982, %v1975
    %v2109 = vpack.c.b16 %v1983, %v1976
    %v2110 = vpack.c.b16 %v1984, %v1977
    %v2111 = vpack.c.b16 %v1985, %v1978
    %v2112 = vpack.c.b16 %v1986, %v1979
    %v2113 = vpack.c.b16 %v1987, %v1980
    %v2114 = vpack.c.b16 %v1988, %v1981
    %v2115 = vpack.c.b16 %v1996, %v1989
    %v2116 = vpack.c.b16 %v1997, %v1990
    %v2117 = vpack.c.b16 %v1998, %v1991
    %v2118 = vpack.c.b16 %v1999, %v1992
    %v2119 = vpack.c.b16 %v2000, %v1993
    %v2120 = vpack.c.b16 %v2001, %v1994
    %v2121 = vpack.c.b16 %v2002, %v1995
    %v2122 = vpack.c.b16 %v2010, %v2003
    %v2123 = vpack.c.b16 %v2011, %v2004
    %v2124 = vpack.c.b16 %v2012, %v2005
    %v2125 = vpack.c.b16 %v2013, %v2006
    %v2126 = vpack.c.b16 %v2014, %v2007
    %v2127 = vpack.c.b16 %v2015, %v2008
    %v2128 = vpack.c.b16 %v2016, %v2009
    %2241 = vmatprep.subr.bf16.mxu0 %v2067
    %2242 = vmatpush1.bf16.msra.mxu0 %v2066
    %2243 = vmatprep.subr.bf16.mxu0 %v2060
    %2244 = vmatpush1.bf16.msra.mxu0 %v2059
    %2245 = vmatprep.subr.bf16.mxu0 %v2053
    %2246 = vmatpush1.bf16.msra.mxu0 %v2052
    %2247 = vmatprep.subr.bf16.mxu0 %v2046
    %2248 = vmatpush1.bf16.msra.mxu0 %v2045
    %2249 = vmatprep.subr.bf16.mxu0 %v2039
    %2250 = vmatpush1.bf16.msra.mxu0 %v2038
    %2251 = vmatprep.subr.bf16.mxu0 %v2032
    %2252 = vmatpush1.bf16.msra.mxu0 %v2031
    %2253 = vmatprep.subr.bf16.mxu0 %v2025
    %2254 = vmatpush1.bf16.msra.mxu0 %v2024
    %2255 = vmatprep.subr.bf16.mxu0 %v2018
    %2256 = vmatpush1.bf16.msra.mxu0 %v2017
    %2257 = vmatprep.subr.bf16.mxu0 %v2123
    %2258 = vmatpush2.bf16.msra.mxu0 %v2122
    %2259 = vmatprep.subr.bf16.mxu0 %v2116
    %2260 = vmatpush2.bf16.msra.mxu0 %v2115
    %2261 = vmatprep.subr.bf16.mxu0 %v2109
    %2262 = vmatpush2.bf16.msra.mxu0 %v2108
    %2263 = vmatprep.subr.bf16.mxu0 %v2102
    %2264 = vmatpush2.bf16.msra.mxu0 %v2101
    %2265 = vmatprep.subr.bf16.mxu0 %v2095
    %2266 = vmatpush2.bf16.msra.mxu0 %v2094
    %2267 = vmatprep.subr.bf16.mxu0 %v2088
    %2268 = vmatpush2.bf16.msra.mxu0 %v2087
    %2269 = vmatprep.subr.bf16.mxu0 %v2081
    %2270 = vmatpush2.bf16.msra.mxu0 %v2080
    %2271 = vmatprep.subr.bf16.mxu0 %v2074
    %2272 = vmatpush2.bf16.msra.mxu0 %v2073
    %2273 = vmatprep.mubr.bf16.mxu0 %v1499
    %2274 = vmatmul.mubr.bf16.gmra.mxu0 %v1498
    %v2275 = vpop.f32.mrf.mxu0
    %v2276 = vadd.f32 %v1633, %v2275
    %v2277 = vpop.f32.mrf.mxu0
    %v2278 = vadd.f32 %v1637, %v2277
    %v2279 = vpop.f32.mrf.mxu0
    %v2280 = vpop.f32.mrf.mxu0
    %2281 = vdwg.mxu0
    %2282 = vmatprep.subr.bf16.mxu0 %v2069
    %2283 = vmatpush1.bf16.msra.mxu0 %v2068
    %2284 = vmatprep.subr.bf16.mxu0 %v2062
    %2285 = vmatpush1.bf16.msra.mxu0 %v2061
    %2286 = vmatprep.subr.bf16.mxu0 %v2055
    %2287 = vmatpush1.bf16.msra.mxu0 %v2054
    %2288 = vmatprep.subr.bf16.mxu0 %v2048
    %2289 = vmatpush1.bf16.msra.mxu0 %v2047
    %2290 = vmatprep.subr.bf16.mxu0 %v2041
    %2291 = vmatpush1.bf16.msra.mxu0 %v2040
    %2292 = vmatprep.subr.bf16.mxu0 %v2034
    %2293 = vmatpush1.bf16.msra.mxu0 %v2033
    %2294 = vmatprep.subr.bf16.mxu0 %v2027
    %2295 = vmatpush1.bf16.msra.mxu0 %v2026
    %2296 = vmatprep.subr.bf16.mxu0 %v2020
    %2297 = vmatpush1.bf16.msra.mxu0 %v2019
    %2298 = vmatprep.subr.bf16.mxu0 %v2125
    %2299 = vmatpush2.bf16.msra.mxu0 %v2124
    %2300 = vmatprep.subr.bf16.mxu0 %v2118
    %2301 = vmatpush2.bf16.msra.mxu0 %v2117
    %2302 = vmatprep.subr.bf16.mxu0 %v2111
    %2303 = vmatpush2.bf16.msra.mxu0 %v2110
    %2304 = vmatprep.subr.bf16.mxu0 %v2104
    %2305 = vmatpush2.bf16.msra.mxu0 %v2103
    %2306 = vmatprep.subr.bf16.mxu0 %v2097
    %2307 = vmatpush2.bf16.msra.mxu0 %v2096
    %2308 = vmatprep.subr.bf16.mxu0 %v2090
    %2309 = vmatpush2.bf16.msra.mxu0 %v2089
    %2310 = vmatprep.subr.bf16.mxu0 %v2083
    %2311 = vmatpush2.bf16.msra.mxu0 %v2082
    %2312 = vmatprep.subr.bf16.mxu0 %v2076
    %2313 = vmatpush2.bf16.msra.mxu0 %v2075
    %2314 = vmatprep.mubr.bf16.mxu0 %v1499
    %2315 = vmatmul.mubr.bf16.gmra.mxu0 %v1498
    %v2316 = vpop.f32.mrf.mxu0
    %v2317 = vadd.f32 %v1641, %v2316
    %v2318 = vpop.f32.mrf.mxu0
    %v2319 = vadd.f32 %v1645, %v2318
    %v2320 = vpop.f32.mrf.mxu0
    %v2321 = vpop.f32.mrf.mxu0
    %2322 = vdwg.mxu0
    %2323 = vmatprep.subr.bf16.mxu0 %v2071
    %2324 = vmatpush1.bf16.msra.mxu0 %v2070
    %2325 = vmatprep.subr.bf16.mxu0 %v2064
    %2326 = vmatpush1.bf16.msra.mxu0 %v2063
    %2327 = vmatprep.subr.bf16.mxu0 %v2057
    %2328 = vmatpush1.bf16.msra.mxu0 %v2056
    %2329 = vmatprep.subr.bf16.mxu0 %v2050
    %2330 = vmatpush1.bf16.msra.mxu0 %v2049
    %2331 = vmatprep.subr.bf16.mxu0 %v2043
    %2332 = vmatpush1.bf16.msra.mxu0 %v2042
    %2333 = vmatprep.subr.bf16.mxu0 %v2036
    %2334 = vmatpush1.bf16.msra.mxu0 %v2035
    %2335 = vmatprep.subr.bf16.mxu0 %v2029
    %2336 = vmatpush1.bf16.msra.mxu0 %v2028
    %2337 = vmatprep.subr.bf16.mxu0 %v2022
    %2338 = vmatpush1.bf16.msra.mxu0 %v2021
    %2339 = vmatprep.subr.bf16.mxu0 %v2127
    %2340 = vmatpush2.bf16.msra.mxu0 %v2126
    %2341 = vmatprep.subr.bf16.mxu0 %v2120
    %2342 = vmatpush2.bf16.msra.mxu0 %v2119
    %2343 = vmatprep.subr.bf16.mxu0 %v2113
    %2344 = vmatpush2.bf16.msra.mxu0 %v2112
    %2345 = vmatprep.subr.bf16.mxu0 %v2106
    %2346 = vmatpush2.bf16.msra.mxu0 %v2105
    %2347 = vmatprep.subr.bf16.mxu0 %v2099
    %2348 = vmatpush2.bf16.msra.mxu0 %v2098
    %2349 = vmatprep.subr.bf16.mxu0 %v2092
    %2350 = vmatpush2.bf16.msra.mxu0 %v2091
    %2351 = vmatprep.subr.bf16.mxu0 %v2085
    %2352 = vmatpush2.bf16.msra.mxu0 %v2084
    %2353 = vmatprep.subr.bf16.mxu0 %v2078
    %2354 = vmatpush2.bf16.msra.mxu0 %v2077
    %2355 = vmatprep.mubr.bf16.mxu0 %v1499
    %2356 = vmatmul.mubr.bf16.gmra.mxu0 %v1498
    %v2357 = vpop.f32.mrf.mxu0
    %v2358 = vadd.f32 %v1649, %v2357
    %v2359 = vpop.f32.mrf.mxu0
    %v2360 = vadd.f32 %v1653, %v2359
    %v2361 = vpop.f32.mrf.mxu0
    %v2362 = vpop.f32.mrf.mxu0
    %2363 = vdwg.mxu0
    %2364 = vmatprep.subr.bf16.mxu0 0
    %2365 = vmatpush1.bf16.msra.mxu0 %v2072
    %2366 = vmatprep.subr.bf16.mxu0 0
    %2367 = vmatpush1.bf16.msra.mxu0 %v2065
    %2368 = vmatprep.subr.bf16.mxu0 0
    %2369 = vmatpush1.bf16.msra.mxu0 %v2058
    %2370 = vmatprep.subr.bf16.mxu0 0
    %2371 = vmatpush1.bf16.msra.mxu0 %v2051
    %2372 = vmatprep.subr.bf16.mxu0 0
    %2373 = vmatpush1.bf16.msra.mxu0 %v2044
    %2374 = vmatprep.subr.bf16.mxu0 0
    %2375 = vmatpush1.bf16.msra.mxu0 %v2037
    %2376 = vmatprep.subr.bf16.mxu0 0
    %2377 = vmatpush1.bf16.msra.mxu0 %v2030
    %2378 = vmatprep.subr.bf16.mxu0 0
    %2379 = vmatpush1.bf16.msra.mxu0 %v2023
    %2380 = vmatprep.subr.bf16.mxu0 0
    %2381 = vmatpush2.bf16.msra.mxu0 %v2128
    %2382 = vmatprep.subr.bf16.mxu0 0
    %2383 = vmatpush2.bf16.msra.mxu0 %v2121
    %2384 = vmatprep.subr.bf16.mxu0 0
    %2385 = vmatpush2.bf16.msra.mxu0 %v2114
    %2386 = vmatprep.subr.bf16.mxu0 0
    %2387 = vmatpush2.bf16.msra.mxu0 %v2107
    %2388 = vmatprep.subr.bf16.mxu0 0
    %2389 = vmatpush2.bf16.msra.mxu0 %v2100
    %2390 = vmatprep.subr.bf16.mxu0 0
    %2391 = vmatpush2.bf16.msra.mxu0 %v2093
    %2392 = vmatprep.subr.bf16.mxu0 0
    %2393 = vmatpush2.bf16.msra.mxu0 %v2086
    %2394 = vmatprep.subr.bf16.mxu0 0
    %2395 = vmatpush2.bf16.msra.mxu0 %v2079
    %2396 = vmatprep.mubr.bf16.mxu0 %v1499
    %2397 = vmatmul.mubr.bf16.gmra.mxu0 %v1498
    %v2398 = vpop.f32.mrf.mxu0
    %v2399 = vadd.f32 %v1657, %v2398
    %v2400 = vpop.f32.mrf.mxu0
    %v2401 = vpop.f32.mrf.mxu0
    %v2402 = vpop.f32.mrf.mxu0
    %2403 = vdwg.mxu0
    %v2404 = vxor.u32 %v2276, 2147483648
    %v2405 = vxor.u32 %v2278, 2147483648
    %v2406 = vxor.u32 %v2317, 2147483648
    %v2407 = vxor.u32 %v2319, 2147483648
    %v2408 = vxor.u32 %v2358, 2147483648
    %v2409 = vxor.u32 %v2360, 2147483648
    %v2410 = vxor.u32 %v2399, 2147483648
    %v2411 = vmul.f32 %v2404, 1.442695
    %v2412 = vpow.pop %v2411
    %v2413 = vmul.f32 %v2405, 1.442695
    %v2414 = vpow.pop %v2413
    %v2415 = vmul.f32 %v2406, 1.442695
    %v2416 = vpow.pop %v2415
    %v2417 = vmul.f32 %v2407, 1.442695
    %v2418 = vpow.pop %v2417
    %v2419 = vmul.f32 %v2408, 1.442695
    %v2420 = vpow.pop %v2419
    %v2421 = vmul.f32 %v2409, 1.442695
    %v2422 = vpow.pop %v2421
    %v2423 = vmul.f32 %v2410, 1.442695
    %v2424 = vpow.pop %v2423
    %v2425 = vadd.f32 %v2412, 1.0
    %v2426 = vadd.f32 %v2414, 1.0
    %v2427 = vadd.f32 %v2416, 1.0
    %v2428 = vadd.f32 %v2418, 1.0
    %v2429 = vadd.f32 %v2420, 1.0
    %v2430 = vadd.f32 %v2422, 1.0
    %v2431 = vadd.f32 %v2424, 1.0
    %v2432 = vrcp.pop %v2425
    %v2433 = vmul.f32 1.0, %v2432
    %v2434 = vrcp.pop %v2426
    %v2435 = vmul.f32 1.0, %v2434
    %v2436 = vrcp.pop %v2427
    %v2437 = vmul.f32 1.0, %v2436
    %v2438 = vrcp.pop %v2428
    %v2439 = vmul.f32 1.0, %v2438
    %v2440 = vrcp.pop %v2429
    %v2441 = vmul.f32 1.0, %v2440
    %v2442 = vrcp.pop %v2430
    %v2443 = vmul.f32 1.0, %v2442
    %v2444 = vrcp.pop %v2431
    %v2445 = vmul.f32 1.0, %v2444
    %v2446 = vpack.c.bf16 %v2433, %v2433
    %v2447 = vpack.c.bf16 %v2435, %v2435
    %v2448 = vpack.c.bf16 %v2437, %v2437
    %v2449 = vpack.c.bf16 %v2439, %v2439
    %v2450 = vpack.c.bf16 %v2441, %v2441
    %v2451 = vpack.c.bf16 %v2443, %v2443
    %v2452 = vpack.c.bf16 %v2445, %v2445
    %v2460 = vunpack.c.l.b16 %v2446
    %v2461 = vunpack.c.l.b16 %v2447
    %v2462 = vunpack.c.l.b16 %v2448
    %v2463 = vunpack.c.l.b16 %v2449
    %v2464 = vunpack.c.l.b16 %v2450
    %v2465 = vunpack.c.l.b16 %v2451
    %v2466 = vunpack.c.l.b16 %v2452
    %v2467 = vpack.c.b16 %v2461, %v2460
    %v2468 = vpack.c.b16 %v2463, %v2462
    %v2469 = vpack.c.b16 %v2465, %v2464
    %v2470 = vpack.c.b16 %v2466, %v2466
    %2475 = vst [vmem:[#allocation2] sm:$0xff] %v2467
    %2476 = vst [vmem:[#allocation2 + $0x8] sm:$0xff] %v2468
    %2477 = vst [vmem:[#allocation2 + $0x10] sm:$0xff] %v2469
    %vm2478 = vcmask 125952
    %2479 = vst.msk [vmem:[#allocation2 + $0x18] sm:$0xf] %vm2478, %v2470
    // Predicated region
    $region70: #{tpu_custom_call.1} parent=1 // pred_check
      _
    $region71: #{tpu_custom_call.1} parent=1 // pred_check_branch
      %2481 = sbr.rel (0) target = $region73
    $region72: #{tpu_custom_call.1} parent=1 // pred_region
      %s2483 = ssub.s32 448, 448
      %2484 = vsyncadd [#allocation3], %s2483
      %s2486 = sshll.u32 [#allocation2], 4
      %s2487 = int_to_ptr.vmem [resolvable:$true] %s2486
      %2489 = dma.vmem_to_hbm [thread:$0]  %s2487, 448, %s17, [#allocation3]
    $region73: #{tpu_custom_call.1} parent=1 // pred_fallthru
      _
    // Predicated region
    $region74: #{tpu_custom_call.1} parent=1 // pred_check
      _
    $region75: #{tpu_custom_call.1} parent=1 // pred_check_branch
      %2491 = sbr.rel (0) target = $region77
    $region76: #{tpu_custom_call.1} parent=1 // pred_region
      %s2493 = ssub.s32 128, 128
      %2494 = vsyncadd [#allocation5], %s2493
      %s2496 = sshll.u32 [#allocation4], 4
      %s2497 = int_to_ptr.vmem [resolvable:$true] %s2496
      %2499 = dma.vmem_to_hbm [thread:$0]  %s2497, 128, %s18, [#allocation5]
    $region77: #{tpu_custom_call.1} parent=1 // pred_fallthru
      _
    // Predicated region
    $region78: #{tpu_custom_call.1} parent=1 // pred_check
      _
    $region79: #{tpu_custom_call.1} parent=1 // pred_check_branch
      %2501 = sbr.rel (0) target = $region81
    $region80: #{tpu_custom_call.1} parent=1 // pred_region
      %2502 = dma.done [#allocation3], 448
    $region81: #{tpu_custom_call.1} parent=1 // pred_fallthru
      _
    // Predicated region
    $region82: #{tpu_custom_call.1} parent=1 // pred_check
      _
    $region83: #{tpu_custom_call.1} parent=1 // pred_check_branch
      %2504 = sbr.rel (0) target = $region85
    $region84: #{tpu_custom_call.1} parent=1 // pred_region
      %2505 = dma.done [#allocation5], 128
    $region85: #{tpu_custom_call.1} parent=1 // pred_fallthru
      _
    %2506 = vsyncpa [#allocation3], 1
    %2507 = vsyncpa [#allocation5], 1

</llo_original>
